<compile_context>
chip_gen: v7x
topology: tpu7x:2x2x1
jax: 0.10.0
libtpu: 0.0.40
codegen_flags: <defaults>
</compile_context>

<pallas_src>
import functools

import jax
import jax.numpy as jnp
from jax.experimental import pallas as pl
from jax.experimental.pallas import tpu as pltpu

_SLOPE = 0.01  # torch F.leaky_relu(negative_slope=0.01)


def _leaky_relu(x):
    # max-form leaky ReLU (valid for slope in (0, 1)): mul + max.
    return jnp.maximum(x, _SLOPE * x)


def decoder_kernel(x_ref,
                   w1_ref, b1_ref,
                   w2_ref, b2_ref,
                   w3_ref, b3_ref,
                   w4_ref, b4_ref,
                   out_ref, *, epi_dtype):
    """Fused 4-layer MLP over one batch tile.

    Matmuls run on the MXU in bf16 with f32 accumulation; the bias +
    leaky-ReLU epilogue runs in `epi_dtype` (bf16 on v6e/v7x where the VALU
    is bf16-capable, f32 on v5e).
    """
    h = x_ref[...].astype(jnp.bfloat16)
    for w_ref, b_ref in ((w1_ref, b1_ref), (w2_ref, b2_ref), (w3_ref, b3_ref)):
        z = jnp.dot(h, w_ref[...], preferred_element_type=jnp.float32)
        z = z.astype(epi_dtype) + b_ref[...].astype(epi_dtype)
        h = _leaky_relu(z).astype(jnp.bfloat16)
    z = jnp.dot(h, w4_ref[...], preferred_element_type=jnp.float32)
    out_ref[...] = (z + b4_ref[...]).astype(out_ref.dtype)


def _round_up(n, m):
    return ((n + m - 1) // m) * m


def _choose_tile_b(B_pad, requested):
    """Batch tile: a multiple of 128 that divides B_pad and is <= requested.

    Prefers the largest such tile (amortizes per-step pipeline overhead);
    when the batch is large enough it prefers an even grid of >= 4 steps
    (>= 2 per v7x TensorCore), but never shrinks the tile below 256 for that.
    """
    k = B_pad // 128
    req = max(1, min(requested, B_pad) // 128)
    divisors = [d for d in range(1, req + 1) if k % d == 0]
    units = max(divisors)
    steps = k // units
    if steps < 4:
        better = [d for d in divisors
                  if d >= 2 and (k // d) >= 4 and (k // d) % 2 == 0]
        if better:
            units = max(better)
        elif steps < 2:
            better2 = [d for d in divisors if d >= 2 and (k // d) >= 2]
            if better2:
                units = max(better2)
    return 128 * units


def _device_kind():
    devs = jax.devices()
    return devs[0].device_kind.lower() if devs else ""


def _default_epilogue_dtype():
    kind = _device_kind()
    # v5e and older have no bf16 VALU -> keep the epilogue in f32 there.
    if any(tag in kind for tag in ("v2", "v3", "v4", "v5")):
        return jnp.float32
    return jnp.bfloat16


def _vmem_budget_bytes():
    kind = _device_kind()
    capacity = (64 << 20) if ("v7" in kind or "tpu7" in kind) else (128 << 20)
    return capacity - (8 << 20)  # headroom for compiler scratch


def _vmem_needed_bytes(tile, dims, single_buffer):
    d_in, d1, d2, d3, d_out = dims
    wbuf = 1 if single_buffer else 2
    weight_bytes = 2 * (d_in * d1 + d1 * d2 + d2 * d3 + d3 * d_out) * wbuf
    bias_bytes = 4 * (d1 + d2 + d3 + d_out) * wbuf
    io_bytes = 2 * tile * (d_in + d_out) * 4          # double-buffered in/out
    act_bytes = tile * (d1 + d2 + d3) * 6             # f32 acc + bf16 copies
    return weight_bytes + bias_bytes + io_bytes + act_bytes + (4 << 20)


def _const_spec(shape, single_buffer):
    """BlockSpec for a grid-invariant (weight/bias) operand."""
    index_map = lambda i: (0, 0)
    if single_buffer and hasattr(pl, "Buffered"):
        # Constant block: one VMEM buffer instead of two (matters for large
        # ef_dim on v7x's 64 MiB VMEM).
        return pl.BlockSpec(shape, index_map, pipeline_mode=pl.Buffered(1))
    return pl.BlockSpec(shape, index_map)


def _build_call(B_pad, tile_b, dims, single_buffer, epi_dtype, vmem_limit):
    d_in, d1, d2, d3, d_out = dims
    grid = (B_pad // tile_b,)
    row_map = lambda i: (i, 0)

    w_shapes = ((d_in, d1), (d1, d2), (d2, d3), (d3, d_out))
    b_shapes = ((1, d1), (1, d2), (1, d3), (1, d_out))

    in_specs = [pl.BlockSpec((tile_b, d_in), row_map)]
    for ws, bs in zip(w_shapes, b_shapes):
        in_specs.append(_const_spec(ws, single_buffer))
        in_specs.append(_const_spec(bs, single_buffer))

    flops = 2 * B_pad * (d_in * d1 + d1 * d2 + d2 * d3 + d3 * d_out)
    bytes_accessed = (B_pad * (d_in + d_out) * 4
                      + 2 * sum(a * b for a, b in w_shapes)
                      + 4 * sum(b for _, b in b_shapes))

    return pl.pallas_call(
        functools.partial(decoder_kernel, epi_dtype=epi_dtype),
        out_shape=jax.ShapeDtypeStruct((B_pad, d_out), jnp.float32),
        grid_spec=pltpu.PrefetchScalarGridSpec(
            num_scalar_prefetch=0,
            grid=grid,
            in_specs=in_specs,
            out_specs=pl.BlockSpec((tile_b, d_out), row_map),
        ),
        compiler_params=pltpu.CompilerParams(
            dimension_semantics=("parallel",),
            vmem_limit_bytes=vmem_limit,
        ),
        cost_estimate=pl.CostEstimate(
            flops=flops, transcendentals=0, bytes_accessed=bytes_accessed),
    )


def decoder_forward(x, params, *, tile_b=None, epilogue_dtype=None):
    """x: (B, ef_dim*8) float32. Returns (B, 4, p_dim) float32."""
    (w1, b1), (w2, b2), (w3, b3), (w4, b4) = params
    B, d_in = x.shape
    d1, d2, d3, d_out = w1.shape[1], w2.shape[1], w3.shape[1], w4.shape[1]
    dims = (d_in, d1, d2, d3, d_out)
    p_dim = d_out // 4

    if epilogue_dtype is None:
        epilogue_dtype = _default_epilogue_dtype()

    # Pad the batch only to the next multiple of 128 and pick a tile that
    # divides it (no full-tile garbage rows of 4-layer MXU work).
    B_pad = _round_up(B, 128)
    if tile_b is None:
        tile_b = 1024 if B_pad >= 4096 else 512
    tile = _choose_tile_b(B_pad, tile_b)

    x32 = x.astype(jnp.float32)
    if B_pad != B:
        x32 = jnp.pad(x32, ((0, B_pad - B), (0, 0)))

    # Weights in bf16 (halves weight VMEM / DMA, bf16 MXU path); biases stay
    # f32 and 2D (1, N) for a TPU-friendly layout (cast to the epilogue dtype
    # inside the kernel).
    ws = [w.astype(jnp.bfloat16) for w in (w1, w2, w3, w4)]
    bs = [b.reshape(1, -1).astype(jnp.float32) for b in (b1, b2, b3, b4)]

    weight_bytes = 2 * sum(int(w.size) for w in ws)
    single_buffer = weight_bytes > (8 << 20) and hasattr(pl, "Buffered")

    vmem_needed = _vmem_needed_bytes(tile, dims, single_buffer)
    vmem_budget = _vmem_budget_bytes()
    if vmem_needed > vmem_budget:
        # TODO(synk): add an N/K-tiled path for the ef_dim*32 -> ef_dim*64
        # layer so resident weights fit v7x's 64 MiB VMEM at large ef_dim.
        raise ValueError(
            f"decoder kernel needs ~{vmem_needed >> 20} MiB VMEM but only "
            f"~{vmem_budget >> 20} MiB is available on this chip")
    vmem_limit = min(max(vmem_needed, 32 << 20), vmem_budget)

    args = [x32]
    for w, b in zip(ws, bs):
        args.extend((w, b))

    out_flat = _build_call(B_pad, tile, dims, single_buffer,
                           epilogue_dtype, vmem_limit)(*args)

    # l4.view(-1, 4, p_dim) equivalent (drop batch padding first).
    return out_flat[:B].reshape(-1, 4, p_dim)


def init_decoder_params(key, ef_dim, p_dim):
    """Xavier-uniform weights (stored as (in, out)), zero biases."""
    dims = [ef_dim * 8, ef_dim * 16, ef_dim * 32, ef_dim * 64, p_dim * 4]
    params = []
    for i in range(4):
        fan_in, fan_out = dims[i], dims[i + 1]
        key, sub = jax.random.split(key)
        bound = (6.0 / (fan_in + fan_out)) ** 0.5
        w = jax.random.uniform(sub, (fan_in, fan_out), jnp.float32,
                               minval=-bound, maxval=bound)
        b = jnp.zeros((fan_out,), jnp.float32)
        params.append((w, b))
    return params


def decoder_reference(x, params, *, match_kernel=False,
                      epilogue_dtype=jnp.bfloat16):
    """Pure-JAX reference.

    match_kernel=False: the straight f32 torch-equivalent forward.
    match_kernel=True : mirrors the kernel's numerics (bf16 matmul operands,
    f32 MXU accumulation, bias + leaky-ReLU epilogue in `epilogue_dtype`).
    """
    (w1, b1), (w2, b2), (w3, b3), (w4, b4) = params
    p_dim = w4.shape[1] // 4

    if not match_kernel:
        h = x.astype(jnp.float32)
        for idx, (w, b) in enumerate(params):
            h = jnp.dot(h, w) + b
            if idx < 3:
                h = _leaky_relu(h)
        return h.reshape(-1, 4, p_dim)

    h = x.astype(jnp.bfloat16)
    for w, b in ((w1, b1), (w2, b2), (w3, b3)):
        z = jnp.dot(h, w.astype(jnp.bfloat16),
                    preferred_element_type=jnp.float32)
        z = z.astype(epilogue_dtype) + b.astype(epilogue_dtype)
        h = _leaky_relu(z).astype(jnp.bfloat16)
    z = jnp.dot(h, w4.astype(jnp.bfloat16),
                preferred_element_type=jnp.float32)
    out = z + b4.astype(jnp.float32)
    return out.reshape(-1, 4, p_dim)


if __name__ == "__main__":
    ef_dim = 16   # input feature dim = ef_dim*8 = 128
    p_dim = 32    # output = (B, 4, 32)
    batch = 8     # small test batch; kernel pads to a single 128-row tile

    key = jax.random.PRNGKey(0)
    key, xk = jax.random.split(key)
    x = jax.random.normal(xk, (batch, ef_dim * 8), jnp.float32)

    params = init_decoder_params(key, ef_dim, p_dim)
    # The torch module initializes biases to zero; use small non-zero biases
    # in the self-test so the bias path is actually exercised.
    bkeys = jax.random.split(jax.random.PRNGKey(1), 4)
    params = [(w, 0.1 * jax.random.normal(k, b.shape, jnp.float32))
              for (w, b), k in zip(params, bkeys)]

    epi = _default_epilogue_dtype()
    out = decoder_forward(x, params, epilogue_dtype=epi)
    out = jax.block_until_ready(out)
    assert out.shape == (batch, 4, p_dim), out.shape

    # Check vs. a reference that uses the same numerics as the kernel.
    ref_match = decoder_reference(x, params, match_kernel=True,
                                  epilogue_dtype=epi)
    assert jnp.allclose(out, ref_match, atol=5e-3, rtol=5e-3), \
        "mismatch vs kernel-numerics reference"

    # Sanity check vs. the full-f32 torch-equivalent reference (looser tol:
    # weights/activations are rounded to bf16 on the MXU path).
    ref_f32 = decoder_reference(x, params, match_kernel=False)
    assert jnp.allclose(out, ref_f32, atol=5e-2, rtol=5e-2), \
        "mismatch vs f32 reference"

    print("KERNEL_OK")
</pallas_src>

<mosaic_0001>
module attributes {stable_mosaic.version = 11 : i64} {
  func.func @decoder_kernel(%arg0: i32, %arg1: memref<128x128xf32, #tpu.memory_space<vmem>>, %arg2: memref<128x256xbf16, #tpu.memory_space<vmem>>, %arg3: memref<1x256xf32, #tpu.memory_space<vmem>>, %arg4: memref<256x512xbf16, #tpu.memory_space<vmem>>, %arg5: memref<1x512xf32, #tpu.memory_space<vmem>>, %arg6: memref<512x1024xbf16, #tpu.memory_space<vmem>>, %arg7: memref<1x1024xf32, #tpu.memory_space<vmem>>, %arg8: memref<1024x128xbf16, #tpu.memory_space<vmem>>, %arg9: memref<1x128xf32, #tpu.memory_space<vmem>>, %arg10: memref<128x128xf32, #tpu.memory_space<vmem>>) attributes {dimension_semantics = [#tpu.dimension_semantics<parallel>], iteration_bounds = array<i64: 1>, scalar_prefetch = 0 : i64, scratch_operands = 0 : i64, tpu.core_type = #tpu.core_type<tc>, window_params = [{transform_indices = @transform_0, window_bounds = array<i64: 128, 128>}, {pipeline_mode = #tpu.pipeline_mode<synchronous>, transform_indices = @transform_1, window_bounds = array<i64: 128, 256>}, {pipeline_mode = #tpu.pipeline_mode<synchronous>, transform_indices = @transform_2, window_bounds = array<i64: 1, 256>}, {pipeline_mode = #tpu.pipeline_mode<synchronous>, transform_indices = @transform_3, window_bounds = array<i64: 256, 512>}, {pipeline_mode = #tpu.pipeline_mode<synchronous>, transform_indices = @transform_4, window_bounds = array<i64: 1, 512>}, {pipeline_mode = #tpu.pipeline_mode<synchronous>, transform_indices = @transform_5, window_bounds = array<i64: 512, 1024>}, {pipeline_mode = #tpu.pipeline_mode<synchronous>, transform_indices = @transform_6, window_bounds = array<i64: 1, 1024>}, {pipeline_mode = #tpu.pipeline_mode<synchronous>, transform_indices = @transform_7, window_bounds = array<i64: 1024, 128>}, {pipeline_mode = #tpu.pipeline_mode<synchronous>, transform_indices = @transform_8, window_bounds = array<i64: 1, 128>}, {transform_indices = @transform_9, window_bounds = array<i64: 128, 128>}]} {
    %c0 = arith.constant 0 : index
    %c0_0 = arith.constant 0 : index
    %0 = vector.load %arg1[%c0, %c0_0] : memref<128x128xf32, #tpu.memory_space<vmem>>, vector<128x128xf32>
    %1 = arith.truncf %0 : vector<128x128xf32> to vector<128x128xbf16>
    %c0_1 = arith.constant 0 : index
    %c0_2 = arith.constant 0 : index
    %2 = vector.load %arg2[%c0_1, %c0_2] : memref<128x256xbf16, #tpu.memory_space<vmem>>, vector<128x256xbf16>
    %cst = arith.constant dense<0.000000e+00> : vector<128x256xf32>
    %3 = tpu.matmul %1, %2, %cst {dimension_numbers = #tpu.dot_dimension_numbers<[1], [0], [0], [1], [0, 0, 1, 1], [], []>} : vector<128x128xbf16>, vector<128x256xbf16>, vector<128x256xf32> -> vector<128x256xf32>
    %4 = arith.truncf %3 : vector<128x256xf32> to vector<128x256xbf16>
    %c0_3 = arith.constant 0 : index
    %c0_4 = arith.constant 0 : index
    %5 = vector.load %arg3[%c0_3, %c0_4] : memref<1x256xf32, #tpu.memory_space<vmem>>, vector<1x256xf32>
    %6 = arith.truncf %5 : vector<1x256xf32> to vector<1x256xbf16>
    %7 = vector.broadcast %6 : vector<1x256xbf16> to vector<128x256xbf16>
    %8 = arith.addf %4, %7 : vector<128x256xbf16>
    %cst_5 = arith.constant 1.000980e-02 : bf16
    %9 = vector.broadcast %cst_5 : bf16 to vector<128x256xbf16>
    %10 = arith.mulf %9, %8 : vector<128x256xbf16>
    %11 = arith.maximumf %8, %10 : vector<128x256xbf16>
    %c0_6 = arith.constant 0 : index
    %c0_7 = arith.constant 0 : index
    %12 = vector.load %arg4[%c0_6, %c0_7] : memref<256x512xbf16, #tpu.memory_space<vmem>>, vector<256x512xbf16>
    %cst_8 = arith.constant dense<0.000000e+00> : vector<128x512xf32>
    %13 = tpu.matmul %11, %12, %cst_8 {dimension_numbers = #tpu.dot_dimension_numbers<[1], [0], [0], [1], [0, 0, 1, 1], [], []>} : vector<128x256xbf16>, vector<256x512xbf16>, vector<128x512xf32> -> vector<128x512xf32>
    %14 = arith.truncf %13 : vector<128x512xf32> to vector<128x512xbf16>
    %c0_9 = arith.constant 0 : index
    %c0_10 = arith.constant 0 : index
    %15 = vector.load %arg5[%c0_9, %c0_10] : memref<1x512xf32, #tpu.memory_space<vmem>>, vector<1x512xf32>
    %16 = arith.truncf %15 : vector<1x512xf32> to vector<1x512xbf16>
    %17 = vector.broadcast %16 : vector<1x512xbf16> to vector<128x512xbf16>
    %18 = arith.addf %14, %17 : vector<128x512xbf16>
    %cst_11 = arith.constant 1.000980e-02 : bf16
    %19 = vector.broadcast %cst_11 : bf16 to vector<128x512xbf16>
    %20 = arith.mulf %19, %18 : vector<128x512xbf16>
    %21 = arith.maximumf %18, %20 : vector<128x512xbf16>
    %c0_12 = arith.constant 0 : index
    %c0_13 = arith.constant 0 : index
    %22 = vector.load %arg6[%c0_12, %c0_13] : memref<512x1024xbf16, #tpu.memory_space<vmem>>, vector<512x1024xbf16>
    %cst_14 = arith.constant dense<0.000000e+00> : vector<128x1024xf32>
    %23 = tpu.matmul %21, %22, %cst_14 {dimension_numbers = #tpu.dot_dimension_numbers<[1], [0], [0], [1], [0, 0, 1, 1], [], []>} : vector<128x512xbf16>, vector<512x1024xbf16>, vector<128x1024xf32> -> vector<128x1024xf32>
    %24 = arith.truncf %23 : vector<128x1024xf32> to vector<128x1024xbf16>
    %c0_15 = arith.constant 0 : index
    %c0_16 = arith.constant 0 : index
    %25 = vector.load %arg7[%c0_15, %c0_16] : memref<1x1024xf32, #tpu.memory_space<vmem>>, vector<1x1024xf32>
    %26 = arith.truncf %25 : vector<1x1024xf32> to vector<1x1024xbf16>
    %27 = vector.broadcast %26 : vector<1x1024xbf16> to vector<128x1024xbf16>
    %28 = arith.addf %24, %27 : vector<128x1024xbf16>
    %cst_17 = arith.constant 1.000980e-02 : bf16
    %29 = vector.broadcast %cst_17 : bf16 to vector<128x1024xbf16>
    %30 = arith.mulf %29, %28 : vector<128x1024xbf16>
    %31 = arith.maximumf %28, %30 : vector<128x1024xbf16>
    %c0_18 = arith.constant 0 : index
    %c0_19 = arith.constant 0 : index
    %32 = vector.load %arg8[%c0_18, %c0_19] : memref<1024x128xbf16, #tpu.memory_space<vmem>>, vector<1024x128xbf16>
    %cst_20 = arith.constant dense<0.000000e+00> : vector<128x128xf32>
    %33 = tpu.matmul %31, %32, %cst_20 {dimension_numbers = #tpu.dot_dimension_numbers<[1], [0], [0], [1], [0, 0, 1, 1], [], []>} : vector<128x1024xbf16>, vector<1024x128xbf16>, vector<128x128xf32> -> vector<128x128xf32>
    %c0_21 = arith.constant 0 : index
    %c0_22 = arith.constant 0 : index
    %34 = vector.load %arg9[%c0_21, %c0_22] : memref<1x128xf32, #tpu.memory_space<vmem>>, vector<1x128xf32>
    %35 = vector.broadcast %34 : vector<1x128xf32> to vector<128x128xf32>
    %36 = arith.addf %33, %35 : vector<128x128xf32>
    %c0_23 = arith.constant 0 : index
    %c0_24 = arith.constant 0 : index
    %37 = vector.load %arg10[%c0_23, %c0_24] : memref<128x128xf32, #tpu.memory_space<vmem>>, vector<128x128xf32>
    tpu.vector_store %arg10[%c0_23, %c0_24], %36 {strides = array<i32>} : memref<128x128xf32, #tpu.memory_space<vmem>>, vector<128x128xf32>,
    return
  }
  func.func @transform_0(%arg0: i32) -> (i32, i32) {
    %c0_i32 = arith.constant 0 : i32
    %c0_i32_0 = arith.constant 0 : i32
    return %arg0, %c0_i32 : i32, i32
  }
  func.func @transform_1(%arg0: i32) -> (i32, i32) {
    %c0_i32 = arith.constant 0 : i32
    %c0_i32_0 = arith.constant 0 : i32
    %c0_i32_1 = arith.constant 0 : i32
    return %c0_i32, %c0_i32_0 : i32, i32
  }
  func.func @transform_2(%arg0: i32) -> (i32, i32) {
    %c0_i32 = arith.constant 0 : i32
    %c0_i32_0 = arith.constant 0 : i32
    %c0_i32_1 = arith.constant 0 : i32
    return %c0_i32, %c0_i32_0 : i32, i32
  }
  func.func @transform_3(%arg0: i32) -> (i32, i32) {
    %c0_i32 = arith.constant 0 : i32
    %c0_i32_0 = arith.constant 0 : i32
    %c0_i32_1 = arith.constant 0 : i32
    return %c0_i32, %c0_i32_0 : i32, i32
  }
  func.func @transform_4(%arg0: i32) -> (i32, i32) {
    %c0_i32 = arith.constant 0 : i32
    %c0_i32_0 = arith.constant 0 : i32
    %c0_i32_1 = arith.constant 0 : i32
    return %c0_i32, %c0_i32_0 : i32, i32
  }
  func.func @transform_5(%arg0: i32) -> (i32, i32) {
    %c0_i32 = arith.constant 0 : i32
    %c0_i32_0 = arith.constant 0 : i32
    %c0_i32_1 = arith.constant 0 : i32
    return %c0_i32, %c0_i32_0 : i32, i32
  }
  func.func @transform_6(%arg0: i32) -> (i32, i32) {
    %c0_i32 = arith.constant 0 : i32
    %c0_i32_0 = arith.constant 0 : i32
    %c0_i32_1 = arith.constant 0 : i32
    return %c0_i32, %c0_i32_0 : i32, i32
  }
  func.func @transform_7(%arg0: i32) -> (i32, i32) {
    %c0_i32 = arith.constant 0 : i32
    %c0_i32_0 = arith.constant 0 : i32
    %c0_i32_1 = arith.constant 0 : i32
    return %c0_i32, %c0_i32_0 : i32, i32
  }
  func.func @transform_8(%arg0: i32) -> (i32, i32) {
    %c0_i32 = arith.constant 0 : i32
    %c0_i32_0 = arith.constant 0 : i32
    %c0_i32_1 = arith.constant 0 : i32
    return %c0_i32, %c0_i32_0 : i32, i32
  }
  func.func @transform_9(%arg0: i32) -> (i32, i32) {
    %c0_i32 = arith.constant 0 : i32
    %c0_i32_0 = arith.constant 0 : i32
    return %arg0, %c0_i32 : i32, i32
  }
}

</mosaic_0001>

<llo_original>
// kernel: tpu_custom_call.1
$region0: #{tpu_custom_call.1}
  #allocation0 [shape = 'u32[]', space=smem, size = 0x4, offset = 0x4, fixed_abs, tag = 'smem constant byte address 0x4 - core index']
  #allocation1 [shape = 'u32[144,128]{1,0:T(1,128)}', space=vmem, size = 0x12000, scoped, tag = 'internal scratch']
  %s0 = inlined_call_operand.hbm [shape: f32[128,128], index: 0, kind: input, shape index: {}]
  %s1 = inlined_call_operand.hbm [shape: bf16[128,256], index: 1, kind: input, shape index: {}]
  %s2 = inlined_call_operand.vmem [shape: f32[1,256], index: 2, kind: input, shape index: {}]
  %s3 = inlined_call_operand.hbm [shape: bf16[256,512], index: 3, kind: input, shape index: {}]
  %s4 = inlined_call_operand.vmem [shape: f32[1,512], index: 4, kind: input, shape index: {}]
  %s5 = inlined_call_operand.hbm [shape: bf16[512,1024], index: 5, kind: input, shape index: {}]
  %s6 = inlined_call_operand.vmem [shape: f32[1,1024], index: 6, kind: input, shape index: {}]
  %s7 = inlined_call_operand.hbm [shape: bf16[1024,128], index: 7, kind: input, shape index: {}]
  %s8 = inlined_call_operand.vmem [shape: f32[1,128], index: 8, kind: input, shape index: {}]
  %s9 = inlined_call_operand.hbm [shape: f32[128,128], index: 9, kind: output, shape index: {}]
  %s10 = sld [smem:[#allocation0]]
  $region66: #{tpu_custom_call.1} parent=0
    _
  %s12 = ssub.s32 1, %s10
  %s13 = scalar_select 0, %s12, %s10
  $region1: #{tpu_custom_call.1} parent=0
    #allocation2 [shape = 'u8[65536]{0}', space=vmem, size = 0x10000, scoped, tag = 'input window, operand 0, single buffered']
    #allocation3 [shape = 's32[1]{0}', space=sflag, size = 0x4, scoped, tag = 'scoped memory for tpu_custom_call.1']
    #allocation4 [shape = 's32[1]{0}', space=sflag, size = 0x4, scoped, tag = 'scoped memory for tpu_custom_call.1']
    #allocation5 [shape = 'u8[65536]{0}', space=vmem, size = 0x10000, scoped, tag = 'input window, operand 1, single buffered']
    #allocation6 [shape = 's32[1]{0}', space=sflag, size = 0x4, scoped, tag = 'scoped memory for tpu_custom_call.1']
    #allocation7 [shape = 'u8[262144]{0}', space=vmem, size = 0x40000, scoped, tag = 'input window, operand 3, single buffered']
    #allocation8 [shape = 'u8[1048576]{0}', space=vmem, size = 0x100000, scoped, tag = 'input window, operand 5, single buffered']
    #allocation9 [shape = 's32[1]{0}', space=sflag, size = 0x4, scoped, tag = 'scoped memory for tpu_custom_call.1']
    #allocation10 [shape = 'u8[262144]{0}', space=vmem, size = 0x40000, scoped, tag = 'input window, operand 7, single buffered']
    #allocation11 [shape = 'u8[65536]{0}', space=vmem, size = 0x10000, scoped, tag = 'output window, operand 0, single buffered']
    %14 = vsyncpa [#allocation3], 0
    %15 = vsyncpa [#allocation6], 0
    %16 = vsyncpa [#allocation9], 0
    %17 = vsyncpa [#allocation4], 0
    // Predicated region
    $region2: #{tpu_custom_call.1} parent=1 // pred_check
      _
    $region3: #{tpu_custom_call.1} parent=1 // pred_check_branch
      %19 = sbr.rel (0) target = $region5
    $region4: #{tpu_custom_call.1} parent=1 // pred_region
      %s21 = ssub.s32 2048, 2048
      %22 = vsyncadd [#allocation3], %s21
      %s23 = sshll.u32 [#allocation2], 4
      %s24 = int_to_ptr.vmem [resolvable:$true] %s23
      %29 = dma.hbm_to_vmem [thread:$0]  %s0, 2048, %s24, [#allocation3], 128, 128, 8
    $region5: #{tpu_custom_call.1} parent=1 // pred_fallthru
      _
    // Predicated region
    $region6: #{tpu_custom_call.1} parent=1 // pred_check
      _
    $region7: #{tpu_custom_call.1} parent=1 // pred_check_branch
      %31 = sbr.rel (0) target = $region9
    $region8: #{tpu_custom_call.1} parent=1 // pred_region
      %s33 = ssub.s32 2048, 2048
      %34 = vsyncadd [#allocation6], %s33
      %s35 = sshll.u32 [#allocation5], 4
      %s36 = int_to_ptr.vmem [resolvable:$true] %s35
      %41 = dma.hbm_to_vmem [thread:$0]  %s1, 2048, %s36, [#allocation6], 128, 128, 8
    $region9: #{tpu_custom_call.1} parent=1 // pred_fallthru
      _
    // Predicated region
    $region10: #{tpu_custom_call.1} parent=1 // pred_check
      _
    $region11: #{tpu_custom_call.1} parent=1 // pred_check_branch
      %43 = sbr.rel (0) target = $region13
    $region12: #{tpu_custom_call.1} parent=1 // pred_region
      _
    $region13: #{tpu_custom_call.1} parent=1 // pred_fallthru
      _
    // Predicated region
    $region14: #{tpu_custom_call.1} parent=1 // pred_check
      _
    $region15: #{tpu_custom_call.1} parent=1 // pred_check_branch
      %45 = sbr.rel (0) target = $region17
    $region16: #{tpu_custom_call.1} parent=1 // pred_region
      %s47 = ssub.s32 8192, 8192
      %48 = vsyncadd [#allocation6], %s47
      %s49 = sshll.u32 [#allocation7], 4
      %s50 = int_to_ptr.vmem [resolvable:$true] %s49
      %55 = dma.hbm_to_vmem [thread:$0]  %s3, 8192, %s50, [#allocation6], 256, 256, 16
    $region17: #{tpu_custom_call.1} parent=1 // pred_fallthru
      _
    // Predicated region
    $region18: #{tpu_custom_call.1} parent=1 // pred_check
      _
    $region19: #{tpu_custom_call.1} parent=1 // pred_check_branch
      %57 = sbr.rel (0) target = $region21
    $region20: #{tpu_custom_call.1} parent=1 // pred_region
      _
    $region21: #{tpu_custom_call.1} parent=1 // pred_fallthru
      _
    // Predicated region
    $region22: #{tpu_custom_call.1} parent=1 // pred_check
      _
    $region23: #{tpu_custom_call.1} parent=1 // pred_check_branch
      %59 = sbr.rel (0) target = $region25
    $region24: #{tpu_custom_call.1} parent=1 // pred_region
      %s61 = ssub.s32 32768, 32768
      %62 = vsyncadd [#allocation9], %s61
      %s63 = sshll.u32 [#allocation8], 4
      %s64 = int_to_ptr.vmem [resolvable:$true] %s63
      %69 = dma.hbm_to_vmem [thread:$0]  %s5, 32768, %s64, [#allocation9], 512, 512, 32
    $region25: #{tpu_custom_call.1} parent=1 // pred_fallthru
      _
    // Predicated region
    $region26: #{tpu_custom_call.1} parent=1 // pred_check
      _
    $region27: #{tpu_custom_call.1} parent=1 // pred_check_branch
      %71 = sbr.rel (0) target = $region29
    $region28: #{tpu_custom_call.1} parent=1 // pred_region
      _
    $region29: #{tpu_custom_call.1} parent=1 // pred_fallthru
      _
    // Predicated region
    $region30: #{tpu_custom_call.1} parent=1 // pred_check
      _
    $region31: #{tpu_custom_call.1} parent=1 // pred_check_branch
      %73 = sbr.rel (0) target = $region33
    $region32: #{tpu_custom_call.1} parent=1 // pred_region
      %s75 = ssub.s32 8192, 8192
      %76 = vsyncadd [#allocation9], %s75
      %s77 = sshll.u32 [#allocation10], 4
      %s78 = int_to_ptr.vmem [resolvable:$true] %s77
      %83 = dma.hbm_to_vmem [thread:$0]  %s7, 8192, %s78, [#allocation9], 64, 64, 4
    $region33: #{tpu_custom_call.1} parent=1 // pred_fallthru
      _
    // Predicated region
    $region34: #{tpu_custom_call.1} parent=1 // pred_check
      _
    $region35: #{tpu_custom_call.1} parent=1 // pred_check_branch
      %85 = sbr.rel (0) target = $region37
    $region36: #{tpu_custom_call.1} parent=1 // pred_region
      _
    $region37: #{tpu_custom_call.1} parent=1 // pred_fallthru
      _
    // Predicated region
    $region38: #{tpu_custom_call.1} parent=1 // pred_check
      _
    $region39: #{tpu_custom_call.1} parent=1 // pred_check_branch
      %87 = sbr.rel (0) target = $region41
    $region40: #{tpu_custom_call.1} parent=1 // pred_region
      %88 = dma.done [#allocation3], 2048
    $region41: #{tpu_custom_call.1} parent=1 // pred_fallthru
      _
    // Predicated region
    $region42: #{tpu_custom_call.1} parent=1 // pred_check
      _
    $region43: #{tpu_custom_call.1} parent=1 // pred_check_branch
      %90 = sbr.rel (0) target = $region45
    $region44: #{tpu_custom_call.1} parent=1 // pred_region
      %91 = dma.done [#allocation6], 2048
    $region45: #{tpu_custom_call.1} parent=1 // pred_fallthru
      _
    // Predicated region
    $region46: #{tpu_custom_call.1} parent=1 // pred_check
      _
    $region47: #{tpu_custom_call.1} parent=1 // pred_check_branch
      %93 = sbr.rel (0) target = $region49
    $region48: #{tpu_custom_call.1} parent=1 // pred_region
      %94 = dma.done [#allocation6], 8192
    $region49: #{tpu_custom_call.1} parent=1 // pred_fallthru
      _
    // Predicated region
    $region50: #{tpu_custom_call.1} parent=1 // pred_check
      _
    $region51: #{tpu_custom_call.1} parent=1 // pred_check_branch
      %96 = sbr.rel (0) target = $region53
    $region52: #{tpu_custom_call.1} parent=1 // pred_region
      %97 = dma.done [#allocation9], 32768
    $region53: #{tpu_custom_call.1} parent=1 // pred_fallthru
      _
    // Predicated region
    $region54: #{tpu_custom_call.1} parent=1 // pred_check
      _
    $region55: #{tpu_custom_call.1} parent=1 // pred_check_branch
      %99 = sbr.rel (0) target = $region57
    $region56: #{tpu_custom_call.1} parent=1 // pred_region
      %100 = dma.done [#allocation9], 8192
    $region57: #{tpu_custom_call.1} parent=1 // pred_fallthru
      _
    %v103 = vld [vmem:[#allocation2] sm:$0xff]
    %v104 = vld [vmem:[#allocation2 + $0x8] sm:$0xff]
    %v105 = vld [vmem:[#allocation2 + $0x10] sm:$0xff]
    %v106 = vld [vmem:[#allocation2 + $0x18] sm:$0xff]
    %v107 = vld [vmem:[#allocation2 + $0x20] sm:$0xff]
    %v108 = vld [vmem:[#allocation2 + $0x28] sm:$0xff]
    %v109 = vld [vmem:[#allocation2 + $0x30] sm:$0xff]
    %v110 = vld [vmem:[#allocation2 + $0x38] sm:$0xff]
    %v111 = vld [vmem:[#allocation2 + $0x40] sm:$0xff]
    %v112 = vld [vmem:[#allocation2 + $0x48] sm:$0xff]
    %v113 = vld [vmem:[#allocation2 + $0x50] sm:$0xff]
    %v114 = vld [vmem:[#allocation2 + $0x58] sm:$0xff]
    %v115 = vld [vmem:[#allocation2 + $0x60] sm:$0xff]
    %v116 = vld [vmem:[#allocation2 + $0x68] sm:$0xff]
    %v117 = vld [vmem:[#allocation2 + $0x70] sm:$0xff]
    %v118 = vld [vmem:[#allocation2 + $0x78] sm:$0xff]
    %v119 = vpack.c.bf16 %v104, %v103
    %v120 = vpack.c.bf16 %v106, %v105
    %v121 = vpack.c.bf16 %v108, %v107
    %v122 = vpack.c.bf16 %v110, %v109
    %v123 = vpack.c.bf16 %v112, %v111
    %v124 = vpack.c.bf16 %v114, %v113
    %v125 = vpack.c.bf16 %v116, %v115
    %v126 = vpack.c.bf16 %v118, %v117
    %v127 = vld [vmem:[#allocation5] sm:$0xff]
    %v128 = vld [vmem:[#allocation5 + $0x8] sm:$0xff]
    %v129 = vld [vmem:[#allocation5 + $0x10] sm:$0xff]
    %v130 = vld [vmem:[#allocation5 + $0x18] sm:$0xff]
    %v131 = vld [vmem:[#allocation5 + $0x20] sm:$0xff]
    %v132 = vld [vmem:[#allocation5 + $0x28] sm:$0xff]
    %v133 = vld [vmem:[#allocation5 + $0x30] sm:$0xff]
    %v134 = vld [vmem:[#allocation5 + $0x38] sm:$0xff]
    %v135 = vld [vmem:[#allocation5 + $0x40] sm:$0xff]
    %v136 = vld [vmem:[#allocation5 + $0x48] sm:$0xff]
    %v137 = vld [vmem:[#allocation5 + $0x50] sm:$0xff]
    %v138 = vld [vmem:[#allocation5 + $0x58] sm:$0xff]
    %v139 = vld [vmem:[#allocation5 + $0x60] sm:$0xff]
    %v140 = vld [vmem:[#allocation5 + $0x68] sm:$0xff]
    %v141 = vld [vmem:[#allocation5 + $0x70] sm:$0xff]
    %v142 = vld [vmem:[#allocation5 + $0x78] sm:$0xff]
    %v159 = vunpack.c.l.b16 %v127
    %v160 = vunpack.c.h.b16 %v127
    %v161 = vunpack.c.l.b16 %v128
    %v162 = vunpack.c.h.b16 %v128
    %v163 = vunpack.c.l.b16 %v129
    %v164 = vunpack.c.h.b16 %v129
    %v165 = vunpack.c.l.b16 %v130
    %v166 = vunpack.c.h.b16 %v130
    %v167 = vunpack.c.l.b16 %v131
    %v168 = vunpack.c.h.b16 %v131
    %v169 = vunpack.c.l.b16 %v132
    %v170 = vunpack.c.h.b16 %v132
    %v171 = vunpack.c.l.b16 %v133
    %v172 = vunpack.c.h.b16 %v133
    %v173 = vunpack.c.l.b16 %v134
    %v174 = vunpack.c.h.b16 %v134
    %v175 = vunpack.c.l.b16 %v135
    %v176 = vunpack.c.h.b16 %v135
    %v177 = vunpack.c.l.b16 %v136
    %v178 = vunpack.c.h.b16 %v136
    %v179 = vunpack.c.l.b16 %v137
    %v180 = vunpack.c.h.b16 %v137
    %v181 = vunpack.c.l.b16 %v138
    %v182 = vunpack.c.h.b16 %v138
    %v183 = vunpack.c.l.b16 %v139
    %v184 = vunpack.c.h.b16 %v139
    %v185 = vunpack.c.l.b16 %v140
    %v186 = vunpack.c.h.b16 %v140
    %v187 = vunpack.c.l.b16 %v141
    %v188 = vunpack.c.h.b16 %v141
    %v189 = vunpack.c.l.b16 %v142
    %v190 = vunpack.c.h.b16 %v142
    %v191 = vpack.c.b16 %v161, %v159
    %v192 = vpack.c.b16 %v162, %v160
    %v193 = vpack.c.b16 %v165, %v163
    %v194 = vpack.c.b16 %v166, %v164
    %v195 = vpack.c.b16 %v169, %v167
    %v196 = vpack.c.b16 %v170, %v168
    %v197 = vpack.c.b16 %v173, %v171
    %v198 = vpack.c.b16 %v174, %v172
    %v199 = vpack.c.b16 %v177, %v175
    %v200 = vpack.c.b16 %v178, %v176
    %v201 = vpack.c.b16 %v181, %v179
    %v202 = vpack.c.b16 %v182, %v180
    %v203 = vpack.c.b16 %v185, %v183
    %v204 = vpack.c.b16 %v186, %v184
    %v205 = vpack.c.b16 %v189, %v187
    %v206 = vpack.c.b16 %v190, %v188
    %223 = vmatprep.subr.bf16.mxu0 %v192
    %224 = vmatpush1.bf16.msra.mxu0 %v191
    %225 = vmatprep.subr.bf16.mxu0 %v194
    %226 = vmatpush1.bf16.msra.mxu0 %v193
    %227 = vmatprep.subr.bf16.mxu0 %v196
    %228 = vmatpush1.bf16.msra.mxu0 %v195
    %229 = vmatprep.subr.bf16.mxu0 %v198
    %230 = vmatpush1.bf16.msra.mxu0 %v197
    %231 = vmatprep.subr.bf16.mxu0 %v200
    %232 = vmatpush1.bf16.msra.mxu0 %v199
    %233 = vmatprep.subr.bf16.mxu0 %v202
    %234 = vmatpush1.bf16.msra.mxu0 %v201
    %235 = vmatprep.subr.bf16.mxu0 %v204
    %236 = vmatpush1.bf16.msra.mxu0 %v203
    %237 = vmatprep.subr.bf16.mxu0 %v206
    %238 = vmatpush1.bf16.msra.mxu0 %v205
    %239 = vmatprep.subr.bf16.mxu0 0
    %240 = vmatpush1.bf16.msra.mxu0 0
    %241 = vmatprep.subr.bf16.mxu0 0
    %242 = vmatpush1.bf16.msra.mxu0 0
    %243 = vmatprep.subr.bf16.mxu0 0
    %244 = vmatpush1.bf16.msra.mxu0 0
    %245 = vmatprep.subr.bf16.mxu0 0
    %246 = vmatpush1.bf16.msra.mxu0 0
    %247 = vmatprep.subr.bf16.mxu0 0
    %248 = vmatpush1.bf16.msra.mxu0 0
    %249 = vmatprep.subr.bf16.mxu0 0
    %250 = vmatpush1.bf16.msra.mxu0 0
    %251 = vmatprep.subr.bf16.mxu0 0
    %252 = vmatpush1.bf16.msra.mxu0 0
    %253 = vmatprep.subr.bf16.mxu0 0
    %254 = vmatpush1.bf16.msra.mxu0 0
    %255 = vmatprep.mubr.bf16.mxu0 0
    %256 = vmatmul.mubr.bf16.gmra.mrb[0].mxu0 %v119
    %v257 = vpop.f32.mrb[0].mxu0
    %v258 = vadd.f32 0.0, %v257
    %v259 = vpop.f32.mrb[0].mxu0
    %v260 = vadd.f32 0.0, %v259
    %v261 = vpop.f32.mrb[0].mxu0
    %v262 = vadd.f32 0.0, %v261
    %v263 = vpop.f32.mrb[0].mxu0
    %v264 = vadd.f32 0.0, %v263
    %265 = vmatprep.mubr.bf16.mxu0 0
    %266 = vmatmul.mubr.bf16.gmra.mrb[0].mxu0 %v120
    %v267 = vpop.f32.mrb[0].mxu0
    %v268 = vadd.f32 0.0, %v267
    %v269 = vpop.f32.mrb[0].mxu0
    %v270 = vadd.f32 0.0, %v269
    %v271 = vpop.f32.mrb[0].mxu0
    %v272 = vadd.f32 0.0, %v271
    %v273 = vpop.f32.mrb[0].mxu0
    %v274 = vadd.f32 0.0, %v273
    %275 = vmatprep.mubr.bf16.mxu0 0
    %276 = vmatmul.mubr.bf16.gmra.mrb[0].mxu0 %v121
    %v277 = vpop.f32.mrb[0].mxu0
    %v278 = vadd.f32 0.0, %v277
    %v279 = vpop.f32.mrb[0].mxu0
    %v280 = vadd.f32 0.0, %v279
    %v281 = vpop.f32.mrb[0].mxu0
    %v282 = vadd.f32 0.0, %v281
    %v283 = vpop.f32.mrb[0].mxu0
    %v284 = vadd.f32 0.0, %v283
    %285 = vmatprep.mubr.bf16.mxu0 0
    %286 = vmatmul.mubr.bf16.gmra.mrb[0].mxu0 %v122
    %v287 = vpop.f32.mrb[0].mxu0
    %v288 = vadd.f32 0.0, %v287
    %v289 = vpop.f32.mrb[0].mxu0
    %v290 = vadd.f32 0.0, %v289
    %v291 = vpop.f32.mrb[0].mxu0
    %v292 = vadd.f32 0.0, %v291
    %v293 = vpop.f32.mrb[0].mxu0
    %v294 = vadd.f32 0.0, %v293
    %295 = vmatprep.mubr.bf16.mxu0 0
    %296 = vmatmul.mubr.bf16.gmra.mrb[0].mxu0 %v123
    %v297 = vpop.f32.mrb[0].mxu0
    %v298 = vadd.f32 0.0, %v297
    %v299 = vpop.f32.mrb[0].mxu0
    %v300 = vadd.f32 0.0, %v299
    %v301 = vpop.f32.mrb[0].mxu0
    %v302 = vadd.f32 0.0, %v301
    %v303 = vpop.f32.mrb[0].mxu0
    %v304 = vadd.f32 0.0, %v303
    %305 = vmatprep.mubr.bf16.mxu0 0
    %306 = vmatmul.mubr.bf16.gmra.mrb[0].mxu0 %v124
    %v307 = vpop.f32.mrb[0].mxu0
    %v308 = vadd.f32 0.0, %v307
    %v309 = vpop.f32.mrb[0].mxu0
    %v310 = vadd.f32 0.0, %v309
    %v311 = vpop.f32.mrb[0].mxu0
    %v312 = vadd.f32 0.0, %v311
    %v313 = vpop.f32.mrb[0].mxu0
    %v314 = vadd.f32 0.0, %v313
    %315 = vmatprep.mubr.bf16.mxu0 0
    %316 = vmatmul.mubr.bf16.gmra.mrb[0].mxu0 %v125
    %v317 = vpop.f32.mrb[0].mxu0
    %v318 = vadd.f32 0.0, %v317
    %v319 = vpop.f32.mrb[0].mxu0
    %v320 = vadd.f32 0.0, %v319
    %v321 = vpop.f32.mrb[0].mxu0
    %v322 = vadd.f32 0.0, %v321
    %v323 = vpop.f32.mrb[0].mxu0
    %v324 = vadd.f32 0.0, %v323
    %325 = vmatprep.mubr.bf16.mxu0 0
    %326 = vmatmul.mubr.bf16.gmra.mrb[0].mxu0 %v126
    %v327 = vpop.f32.mrb[0].mxu0
    %v328 = vadd.f32 0.0, %v327
    %v329 = vpop.f32.mrb[0].mxu0
    %v330 = vadd.f32 0.0, %v329
    %v331 = vpop.f32.mrb[0].mxu0
    %v332 = vadd.f32 0.0, %v331
    %v333 = vpop.f32.mrb[0].mxu0
    %v334 = vadd.f32 0.0, %v333
    %335 = vdwg.mxu0
    %v336 = vpack.c.bf16 %v262, %v258
    %v337 = vpack.c.bf16 %v264, %v260
    %v338 = vpack.c.bf16 %v272, %v268
    %v339 = vpack.c.bf16 %v274, %v270
    %v340 = vpack.c.bf16 %v282, %v278
    %v341 = vpack.c.bf16 %v284, %v280
    %v342 = vpack.c.bf16 %v292, %v288
    %v343 = vpack.c.bf16 %v294, %v290
    %v344 = vpack.c.bf16 %v302, %v298
    %v345 = vpack.c.bf16 %v304, %v300
    %v346 = vpack.c.bf16 %v312, %v308
    %v347 = vpack.c.bf16 %v314, %v310
    %v348 = vpack.c.bf16 %v322, %v318
    %v349 = vpack.c.bf16 %v324, %v320
    %v350 = vpack.c.bf16 %v332, %v328
    %v351 = vpack.c.bf16 %v334, %v330
    %v352 = vld [vmem:[%s2] sm:$0x3]
    %v354 = vlaneseq
    %v355 = vshrl.u32 %v354, 7
    %v356 = vsub.s32 0, %v355
    %v357 = vrot.slane %v352, %v356
    %v358 = vlaneseq
    %v359 = vshrl.u32 %v358, 7
    %v360 = vsub.s32 1, %v359
    %v361 = vrot.slane %v352, %v360
    %v364 = vpack.c.bf16 %v357, %v357
    %v365 = vpack.c.bf16 %v361, %v361
    %v367 = vpack.i.b16 %v364, %v364
    %v369 = vlaneseq
    %v370 = vshrl.u32 %v369, 7
    %v371 = vsub.s32 0, %v370
    %v372 = vrot.slane %v367, %v371
    %v374 = vpack.i.b16 %v365, %v365
    %v376 = vlaneseq
    %v377 = vshrl.u32 %v376, 7
    %v378 = vsub.s32 0, %v377
    %v379 = vrot.slane %v374, %v378
    %v380 = vadd.bf16 %v336, %v372
    %v381 = vadd.bf16 %v337, %v379
    %v382 = vadd.bf16 %v338, %v372
    %v383 = vadd.bf16 %v339, %v379
    %v384 = vadd.bf16 %v340, %v372
    %v385 = vadd.bf16 %v341, %v379
    %v386 = vadd.bf16 %v342, %v372
    %v387 = vadd.bf16 %v343, %v379
    %v388 = vadd.bf16 %v344, %v372
    %v389 = vadd.bf16 %v345, %v379
    %v390 = vadd.bf16 %v346, %v372
    %v391 = vadd.bf16 %v347, %v379
    %v392 = vadd.bf16 %v348, %v372
    %v393 = vadd.bf16 %v349, %v379
    %v394 = vadd.bf16 %v350, %v372
    %v395 = vadd.bf16 %v351, %v379
    %v396 = vmul.bf16 %v380, 1009007652
    %v397 = vmul.bf16 %v381, 1009007652
    %v398 = vmul.bf16 %v382, 1009007652
    %v399 = vmul.bf16 %v383, 1009007652
    %v400 = vmul.bf16 %v384, 1009007652
    %v401 = vmul.bf16 %v385, 1009007652
    %v402 = vmul.bf16 %v386, 1009007652
    %v403 = vmul.bf16 %v387, 1009007652
    %v404 = vmul.bf16 %v388, 1009007652
    %v405 = vmul.bf16 %v389, 1009007652
    %v406 = vmul.bf16 %v390, 1009007652
    %v407 = vmul.bf16 %v391, 1009007652
    %v408 = vmul.bf16 %v392, 1009007652
    %v409 = vmul.bf16 %v393, 1009007652
    %v410 = vmul.bf16 %v394, 1009007652
    %v411 = vmul.bf16 %v395, 1009007652
    %v412 = vmax.bf16 %v380, %v396
    %v413 = vmax.bf16 %v381, %v397
    %v414 = vmax.bf16 %v382, %v398
    %v415 = vmax.bf16 %v383, %v399
    %v416 = vmax.bf16 %v384, %v400
    %v417 = vmax.bf16 %v385, %v401
    %v418 = vmax.bf16 %v386, %v402
    %v419 = vmax.bf16 %v387, %v403
    %v420 = vmax.bf16 %v388, %v404
    %v421 = vmax.bf16 %v389, %v405
    %v422 = vmax.bf16 %v390, %v406
    %v423 = vmax.bf16 %v391, %v407
    %v424 = vmax.bf16 %v392, %v408
    %v425 = vmax.bf16 %v393, %v409
    %v426 = vmax.bf16 %v394, %v410
    %v427 = vmax.bf16 %v395, %v411
    %v428 = vld [vmem:[#allocation7] sm:$0xff]
    %v429 = vld [vmem:[#allocation7 + $0x8] sm:$0xff]
    %v430 = vld [vmem:[#allocation7 + $0x10] sm:$0xff]
    %v431 = vld [vmem:[#allocation7 + $0x18] sm:$0xff]
    %v432 = vld [vmem:[#allocation7 + $0x20] sm:$0xff]
    %v433 = vld [vmem:[#allocation7 + $0x28] sm:$0xff]
    %v434 = vld [vmem:[#allocation7 + $0x30] sm:$0xff]
    %v435 = vld [vmem:[#allocation7 + $0x38] sm:$0xff]
    %v436 = vld [vmem:[#allocation7 + $0x40] sm:$0xff]
    %v437 = vld [vmem:[#allocation7 + $0x48] sm:$0xff]
    %v438 = vld [vmem:[#allocation7 + $0x50] sm:$0xff]
    %v439 = vld [vmem:[#allocation7 + $0x58] sm:$0xff]
    %v440 = vld [vmem:[#allocation7 + $0x60] sm:$0xff]
    %v441 = vld [vmem:[#allocation7 + $0x68] sm:$0xff]
    %v442 = vld [vmem:[#allocation7 + $0x70] sm:$0xff]
    %v443 = vld [vmem:[#allocation7 + $0x78] sm:$0xff]
    %v444 = vld [vmem:[#allocation7 + $0x80] sm:$0xff]
    %v445 = vld [vmem:[#allocation7 + $0x88] sm:$0xff]
    %v446 = vld [vmem:[#allocation7 + $0x90] sm:$0xff]
    %v447 = vld [vmem:[#allocation7 + $0x98] sm:$0xff]
    %v448 = vld [vmem:[#allocation7 + $0xa0] sm:$0xff]
    %v449 = vld [vmem:[#allocation7 + $0xa8] sm:$0xff]
    %v450 = vld [vmem:[#allocation7 + $0xb0] sm:$0xff]
    %v451 = vld [vmem:[#allocation7 + $0xb8] sm:$0xff]
    %v452 = vld [vmem:[#allocation7 + $0xc0] sm:$0xff]
    %v453 = vld [vmem:[#allocation7 + $0xc8] sm:$0xff]
    %v454 = vld [vmem:[#allocation7 + $0xd0] sm:$0xff]
    %v455 = vld [vmem:[#allocation7 + $0xd8] sm:$0xff]
    %v456 = vld [vmem:[#allocation7 + $0xe0] sm:$0xff]
    %v457 = vld [vmem:[#allocation7 + $0xe8] sm:$0xff]
    %v458 = vld [vmem:[#allocation7 + $0xf0] sm:$0xff]
    %v459 = vld [vmem:[#allocation7 + $0xf8] sm:$0xff]
    %v460 = vld [vmem:[#allocation7 + $0x100] sm:$0xff]
    %v461 = vld [vmem:[#allocation7 + $0x108] sm:$0xff]
    %v462 = vld [vmem:[#allocation7 + $0x110] sm:$0xff]
    %v463 = vld [vmem:[#allocation7 + $0x118] sm:$0xff]
    %v464 = vld [vmem:[#allocation7 + $0x120] sm:$0xff]
    %v465 = vld [vmem:[#allocation7 + $0x128] sm:$0xff]
    %v466 = vld [vmem:[#allocation7 + $0x130] sm:$0xff]
    %v467 = vld [vmem:[#allocation7 + $0x138] sm:$0xff]
    %v468 = vld [vmem:[#allocation7 + $0x140] sm:$0xff]
    %v469 = vld [vmem:[#allocation7 + $0x148] sm:$0xff]
    %v470 = vld [vmem:[#allocation7 + $0x150] sm:$0xff]
    %v471 = vld [vmem:[#allocation7 + $0x158] sm:$0xff]
    %v472 = vld [vmem:[#allocation7 + $0x160] sm:$0xff]
    %v473 = vld [vmem:[#allocation7 + $0x168] sm:$0xff]
    %v474 = vld [vmem:[#allocation7 + $0x170] sm:$0xff]
    %v475 = vld [vmem:[#allocation7 + $0x178] sm:$0xff]
    %v476 = vld [vmem:[#allocation7 + $0x180] sm:$0xff]
    %v477 = vld [vmem:[#allocation7 + $0x188] sm:$0xff]
    %v478 = vld [vmem:[#allocation7 + $0x190] sm:$0xff]
    %v479 = vld [vmem:[#allocation7 + $0x198] sm:$0xff]
    %v480 = vld [vmem:[#allocation7 + $0x1a0] sm:$0xff]
    %v481 = vld [vmem:[#allocation7 + $0x1a8] sm:$0xff]
    %v482 = vld [vmem:[#allocation7 + $0x1b0] sm:$0xff]
    %v483 = vld [vmem:[#allocation7 + $0x1b8] sm:$0xff]
    %v484 = vld [vmem:[#allocation7 + $0x1c0] sm:$0xff]
    %v485 = vld [vmem:[#allocation7 + $0x1c8] sm:$0xff]
    %v486 = vld [vmem:[#allocation7 + $0x1d0] sm:$0xff]
    %v487 = vld [vmem:[#allocation7 + $0x1d8] sm:$0xff]
    %v488 = vld [vmem:[#allocation7 + $0x1e0] sm:$0xff]
    %v489 = vld [vmem:[#allocation7 + $0x1e8] sm:$0xff]
    %v490 = vld [vmem:[#allocation7 + $0x1f0] sm:$0xff]
    %v491 = vld [vmem:[#allocation7 + $0x1f8] sm:$0xff]
    %v556 = vunpack.c.l.b16 %v428
    %v557 = vunpack.c.h.b16 %v428
    %v558 = vunpack.c.l.b16 %v429
    %v559 = vunpack.c.h.b16 %v429
    %v560 = vunpack.c.l.b16 %v430
    %v561 = vunpack.c.h.b16 %v430
    %v562 = vunpack.c.l.b16 %v431
    %v563 = vunpack.c.h.b16 %v431
    %v564 = vunpack.c.l.b16 %v432
    %v565 = vunpack.c.h.b16 %v432
    %v566 = vunpack.c.l.b16 %v433
    %v567 = vunpack.c.h.b16 %v433
    %v568 = vunpack.c.l.b16 %v434
    %v569 = vunpack.c.h.b16 %v434
    %v570 = vunpack.c.l.b16 %v435
    %v571 = vunpack.c.h.b16 %v435
    %v572 = vunpack.c.l.b16 %v436
    %v573 = vunpack.c.h.b16 %v436
    %v574 = vunpack.c.l.b16 %v437
    %v575 = vunpack.c.h.b16 %v437
    %v576 = vunpack.c.l.b16 %v438
    %v577 = vunpack.c.h.b16 %v438
    %v578 = vunpack.c.l.b16 %v439
    %v579 = vunpack.c.h.b16 %v439
    %v580 = vunpack.c.l.b16 %v440
    %v581 = vunpack.c.h.b16 %v440
    %v582 = vunpack.c.l.b16 %v441
    %v583 = vunpack.c.h.b16 %v441
    %v584 = vunpack.c.l.b16 %v442
    %v585 = vunpack.c.h.b16 %v442
    %v586 = vunpack.c.l.b16 %v443
    %v587 = vunpack.c.h.b16 %v443
    %v588 = vunpack.c.l.b16 %v444
    %v589 = vunpack.c.h.b16 %v444
    %v590 = vunpack.c.l.b16 %v445
    %v591 = vunpack.c.h.b16 %v445
    %v592 = vunpack.c.l.b16 %v446
    %v593 = vunpack.c.h.b16 %v446
    %v594 = vunpack.c.l.b16 %v447
    %v595 = vunpack.c.h.b16 %v447
    %v596 = vunpack.c.l.b16 %v448
    %v597 = vunpack.c.h.b16 %v448
    %v598 = vunpack.c.l.b16 %v449
    %v599 = vunpack.c.h.b16 %v449
    %v600 = vunpack.c.l.b16 %v450
    %v601 = vunpack.c.h.b16 %v450
    %v602 = vunpack.c.l.b16 %v451
    %v603 = vunpack.c.h.b16 %v451
    %v604 = vunpack.c.l.b16 %v452
    %v605 = vunpack.c.h.b16 %v452
    %v606 = vunpack.c.l.b16 %v453
    %v607 = vunpack.c.h.b16 %v453
    %v608 = vunpack.c.l.b16 %v454
    %v609 = vunpack.c.h.b16 %v454
    %v610 = vunpack.c.l.b16 %v455
    %v611 = vunpack.c.h.b16 %v455
    %v612 = vunpack.c.l.b16 %v456
    %v613 = vunpack.c.h.b16 %v456
    %v614 = vunpack.c.l.b16 %v457
    %v615 = vunpack.c.h.b16 %v457
    %v616 = vunpack.c.l.b16 %v458
    %v617 = vunpack.c.h.b16 %v458
    %v618 = vunpack.c.l.b16 %v459
    %v619 = vunpack.c.h.b16 %v459
    %v620 = vunpack.c.l.b16 %v460
    %v621 = vunpack.c.h.b16 %v460
    %v622 = vunpack.c.l.b16 %v461
    %v623 = vunpack.c.h.b16 %v461
    %v624 = vunpack.c.l.b16 %v462
    %v625 = vunpack.c.h.b16 %v462
    %v626 = vunpack.c.l.b16 %v463
    %v627 = vunpack.c.h.b16 %v463
    %v628 = vunpack.c.l.b16 %v464
    %v629 = vunpack.c.h.b16 %v464
    %v630 = vunpack.c.l.b16 %v465
    %v631 = vunpack.c.h.b16 %v465
    %v632 = vunpack.c.l.b16 %v466
    %v633 = vunpack.c.h.b16 %v466
    %v634 = vunpack.c.l.b16 %v467
    %v635 = vunpack.c.h.b16 %v467
    %v636 = vunpack.c.l.b16 %v468
    %v637 = vunpack.c.h.b16 %v468
    %v638 = vunpack.c.l.b16 %v469
    %v639 = vunpack.c.h.b16 %v469
    %v640 = vunpack.c.l.b16 %v470
    %v641 = vunpack.c.h.b16 %v470
    %v642 = vunpack.c.l.b16 %v471
    %v643 = vunpack.c.h.b16 %v471
    %v644 = vunpack.c.l.b16 %v472
    %v645 = vunpack.c.h.b16 %v472
    %v646 = vunpack.c.l.b16 %v473
    %v647 = vunpack.c.h.b16 %v473
    %v648 = vunpack.c.l.b16 %v474
    %v649 = vunpack.c.h.b16 %v474
    %v650 = vunpack.c.l.b16 %v475
    %v651 = vunpack.c.h.b16 %v475
    %v652 = vunpack.c.l.b16 %v476
    %v653 = vunpack.c.h.b16 %v476
    %v654 = vunpack.c.l.b16 %v477
    %v655 = vunpack.c.h.b16 %v477
    %v656 = vunpack.c.l.b16 %v478
    %v657 = vunpack.c.h.b16 %v478
    %v658 = vunpack.c.l.b16 %v479
    %v659 = vunpack.c.h.b16 %v479
    %v660 = vunpack.c.l.b16 %v480
    %v661 = vunpack.c.h.b16 %v480
    %v662 = vunpack.c.l.b16 %v481
    %v663 = vunpack.c.h.b16 %v481
    %v664 = vunpack.c.l.b16 %v482
    %v665 = vunpack.c.h.b16 %v482
    %v666 = vunpack.c.l.b16 %v483
    %v667 = vunpack.c.h.b16 %v483
    %v668 = vunpack.c.l.b16 %v484
    %v669 = vunpack.c.h.b16 %v484
    %v670 = vunpack.c.l.b16 %v485
    %v671 = vunpack.c.h.b16 %v485
    %v672 = vunpack.c.l.b16 %v486
    %v673 = vunpack.c.h.b16 %v486
    %v674 = vunpack.c.l.b16 %v487
    %v675 = vunpack.c.h.b16 %v487
    %v676 = vunpack.c.l.b16 %v488
    %v677 = vunpack.c.h.b16 %v488
    %v678 = vunpack.c.l.b16 %v489
    %v679 = vunpack.c.h.b16 %v489
    %v680 = vunpack.c.l.b16 %v490
    %v681 = vunpack.c.h.b16 %v490
    %v682 = vunpack.c.l.b16 %v491
    %v683 = vunpack.c.h.b16 %v491
    %v684 = vpack.c.b16 %v560, %v556
    %v685 = vpack.c.b16 %v561, %v557
    %v686 = vpack.c.b16 %v562, %v558
    %v687 = vpack.c.b16 %v563, %v559
    %v688 = vpack.c.b16 %v568, %v564
    %v689 = vpack.c.b16 %v569, %v565
    %v690 = vpack.c.b16 %v570, %v566
    %v691 = vpack.c.b16 %v571, %v567
    %v692 = vpack.c.b16 %v576, %v572
    %v693 = vpack.c.b16 %v577, %v573
    %v694 = vpack.c.b16 %v578, %v574
    %v695 = vpack.c.b16 %v579, %v575
    %v696 = vpack.c.b16 %v584, %v580
    %v697 = vpack.c.b16 %v585, %v581
    %v698 = vpack.c.b16 %v586, %v582
    %v699 = vpack.c.b16 %v587, %v583
    %v700 = vpack.c.b16 %v592, %v588
    %v701 = vpack.c.b16 %v593, %v589
    %v702 = vpack.c.b16 %v594, %v590
    %v703 = vpack.c.b16 %v595, %v591
    %v704 = vpack.c.b16 %v600, %v596
    %v705 = vpack.c.b16 %v601, %v597
    %v706 = vpack.c.b16 %v602, %v598
    %v707 = vpack.c.b16 %v603, %v599
    %v708 = vpack.c.b16 %v608, %v604
    %v709 = vpack.c.b16 %v609, %v605
    %v710 = vpack.c.b16 %v610, %v606
    %v711 = vpack.c.b16 %v611, %v607
    %v712 = vpack.c.b16 %v616, %v612
    %v713 = vpack.c.b16 %v617, %v613
    %v714 = vpack.c.b16 %v618, %v614
    %v715 = vpack.c.b16 %v619, %v615
    %v716 = vpack.c.b16 %v624, %v620
    %v717 = vpack.c.b16 %v625, %v621
    %v718 = vpack.c.b16 %v626, %v622
    %v719 = vpack.c.b16 %v627, %v623
    %v720 = vpack.c.b16 %v632, %v628
    %v721 = vpack.c.b16 %v633, %v629
    %v722 = vpack.c.b16 %v634, %v630
    %v723 = vpack.c.b16 %v635, %v631
    %v724 = vpack.c.b16 %v640, %v636
    %v725 = vpack.c.b16 %v641, %v637
    %v726 = vpack.c.b16 %v642, %v638
    %v727 = vpack.c.b16 %v643, %v639
    %v728 = vpack.c.b16 %v648, %v644
    %v729 = vpack.c.b16 %v649, %v645
    %v730 = vpack.c.b16 %v650, %v646
    %v731 = vpack.c.b16 %v651, %v647
    %v732 = vpack.c.b16 %v656, %v652
    %v733 = vpack.c.b16 %v657, %v653
    %v734 = vpack.c.b16 %v658, %v654
    %v735 = vpack.c.b16 %v659, %v655
    %v736 = vpack.c.b16 %v664, %v660
    %v737 = vpack.c.b16 %v665, %v661
    %v738 = vpack.c.b16 %v666, %v662
    %v739 = vpack.c.b16 %v667, %v663
    %v740 = vpack.c.b16 %v672, %v668
    %v741 = vpack.c.b16 %v673, %v669
    %v742 = vpack.c.b16 %v674, %v670
    %v743 = vpack.c.b16 %v675, %v671
    %v744 = vpack.c.b16 %v680, %v676
    %v745 = vpack.c.b16 %v681, %v677
    %v746 = vpack.c.b16 %v682, %v678
    %v747 = vpack.c.b16 %v683, %v679
    %812 = vmatprep.subr.bf16.mxu0 %v685
    %813 = vmatpush1.bf16.msra.mxu0 %v684
    %814 = vmatprep.subr.bf16.mxu0 %v689
    %815 = vmatpush1.bf16.msra.mxu0 %v688
    %816 = vmatprep.subr.bf16.mxu0 %v693
    %817 = vmatpush1.bf16.msra.mxu0 %v692
    %818 = vmatprep.subr.bf16.mxu0 %v697
    %819 = vmatpush1.bf16.msra.mxu0 %v696
    %820 = vmatprep.subr.bf16.mxu0 %v701
    %821 = vmatpush1.bf16.msra.mxu0 %v700
    %822 = vmatprep.subr.bf16.mxu0 %v705
    %823 = vmatpush1.bf16.msra.mxu0 %v704
    %824 = vmatprep.subr.bf16.mxu0 %v709
    %825 = vmatpush1.bf16.msra.mxu0 %v708
    %826 = vmatprep.subr.bf16.mxu0 %v713
    %827 = vmatpush1.bf16.msra.mxu0 %v712
    %828 = vmatprep.subr.bf16.mxu0 %v717
    %829 = vmatpush1.bf16.msra.mxu0 %v716
    %830 = vmatprep.subr.bf16.mxu0 %v721
    %831 = vmatpush1.bf16.msra.mxu0 %v720
    %832 = vmatprep.subr.bf16.mxu0 %v725
    %833 = vmatpush1.bf16.msra.mxu0 %v724
    %834 = vmatprep.subr.bf16.mxu0 %v729
    %835 = vmatpush1.bf16.msra.mxu0 %v728
    %836 = vmatprep.subr.bf16.mxu0 %v733
    %837 = vmatpush1.bf16.msra.mxu0 %v732
    %838 = vmatprep.subr.bf16.mxu0 %v737
    %839 = vmatpush1.bf16.msra.mxu0 %v736
    %840 = vmatprep.subr.bf16.mxu0 %v741
    %841 = vmatpush1.bf16.msra.mxu0 %v740
    %842 = vmatprep.subr.bf16.mxu0 %v745
    %843 = vmatpush1.bf16.msra.mxu0 %v744
    %844 = vmatprep.mubr.bf16.mxu0 %v413
    %845 = vmatmul.mubr.bf16.gmra.mrb[0].mxu0 %v412
    %v846 = vpop.f32.mrb[0].mxu0
    %v847 = vadd.f32 0.0, %v846
    %v848 = vpop.f32.mrb[0].mxu0
    %v849 = vadd.f32 0.0, %v848
    %v850 = vpop.f32.mrb[0].mxu0
    %v851 = vadd.f32 0.0, %v850
    %v852 = vpop.f32.mrb[0].mxu0
    %v853 = vadd.f32 0.0, %v852
    %854 = vmatprep.mubr.bf16.mxu0 %v415
    %855 = vmatmul.mubr.bf16.gmra.mrb[0].mxu0 %v414
    %v856 = vpop.f32.mrb[0].mxu0
    %v857 = vadd.f32 0.0, %v856
    %v858 = vpop.f32.mrb[0].mxu0
    %v859 = vadd.f32 0.0, %v858
    %v860 = vpop.f32.mrb[0].mxu0
    %v861 = vadd.f32 0.0, %v860
    %v862 = vpop.f32.mrb[0].mxu0
    %v863 = vadd.f32 0.0, %v862
    %864 = vmatprep.mubr.bf16.mxu0 %v417
    %865 = vmatmul.mubr.bf16.gmra.mrb[0].mxu0 %v416
    %v866 = vpop.f32.mrb[0].mxu0
    %v867 = vadd.f32 0.0, %v866
    %v868 = vpop.f32.mrb[0].mxu0
    %v869 = vadd.f32 0.0, %v868
    %v870 = vpop.f32.mrb[0].mxu0
    %v871 = vadd.f32 0.0, %v870
    %v872 = vpop.f32.mrb[0].mxu0
    %v873 = vadd.f32 0.0, %v872
    %874 = vmatprep.mubr.bf16.mxu0 %v419
    %875 = vmatmul.mubr.bf16.gmra.mrb[0].mxu0 %v418
    %v876 = vpop.f32.mrb[0].mxu0
    %v877 = vadd.f32 0.0, %v876
    %v878 = vpop.f32.mrb[0].mxu0
    %v879 = vadd.f32 0.0, %v878
    %v880 = vpop.f32.mrb[0].mxu0
    %v881 = vadd.f32 0.0, %v880
    %v882 = vpop.f32.mrb[0].mxu0
    %v883 = vadd.f32 0.0, %v882
    %884 = vmatprep.mubr.bf16.mxu0 %v421
    %885 = vmatmul.mubr.bf16.gmra.mrb[0].mxu0 %v420
    %v886 = vpop.f32.mrb[0].mxu0
    %v887 = vadd.f32 0.0, %v886
    %v888 = vpop.f32.mrb[0].mxu0
    %v889 = vadd.f32 0.0, %v888
    %v890 = vpop.f32.mrb[0].mxu0
    %v891 = vadd.f32 0.0, %v890
    %v892 = vpop.f32.mrb[0].mxu0
    %v893 = vadd.f32 0.0, %v892
    %894 = vmatprep.mubr.bf16.mxu0 %v423
    %895 = vmatmul.mubr.bf16.gmra.mrb[0].mxu0 %v422
    %v896 = vpop.f32.mrb[0].mxu0
    %v897 = vadd.f32 0.0, %v896
    %v898 = vpop.f32.mrb[0].mxu0
    %v899 = vadd.f32 0.0, %v898
    %v900 = vpop.f32.mrb[0].mxu0
    %v901 = vadd.f32 0.0, %v900
    %v902 = vpop.f32.mrb[0].mxu0
    %v903 = vadd.f32 0.0, %v902
    %904 = vmatprep.mubr.bf16.mxu0 %v425
    %905 = vmatmul.mubr.bf16.gmra.mrb[0].mxu0 %v424
    %v906 = vpop.f32.mrb[0].mxu0
    %v907 = vadd.f32 0.0, %v906
    %v908 = vpop.f32.mrb[0].mxu0
    %v909 = vadd.f32 0.0, %v908
    %v910 = vpop.f32.mrb[0].mxu0
    %v911 = vadd.f32 0.0, %v910
    %v912 = vpop.f32.mrb[0].mxu0
    %v913 = vadd.f32 0.0, %v912
    %914 = vmatprep.mubr.bf16.mxu0 %v427
    %915 = vmatmul.mubr.bf16.gmra.mrb[0].mxu0 %v426
    %v916 = vpop.f32.mrb[0].mxu0
    %v917 = vadd.f32 0.0, %v916
    %v918 = vpop.f32.mrb[0].mxu0
    %v919 = vadd.f32 0.0, %v918
    %v920 = vpop.f32.mrb[0].mxu0
    %v921 = vadd.f32 0.0, %v920
    %v922 = vpop.f32.mrb[0].mxu0
    %v923 = vadd.f32 0.0, %v922
    %924 = vdwg.mxu0
    %925 = vmatprep.subr.bf16.mxu0 %v687
    %926 = vmatpush1.bf16.msra.mxu0 %v686
    %927 = vmatprep.subr.bf16.mxu0 %v691
    %928 = vmatpush1.bf16.msra.mxu0 %v690
    %929 = vmatprep.subr.bf16.mxu0 %v695
    %930 = vmatpush1.bf16.msra.mxu0 %v694
    %931 = vmatprep.subr.bf16.mxu0 %v699
    %932 = vmatpush1.bf16.msra.mxu0 %v698
    %933 = vmatprep.subr.bf16.mxu0 %v703
    %934 = vmatpush1.bf16.msra.mxu0 %v702
    %935 = vmatprep.subr.bf16.mxu0 %v707
    %936 = vmatpush1.bf16.msra.mxu0 %v706
    %937 = vmatprep.subr.bf16.mxu0 %v711
    %938 = vmatpush1.bf16.msra.mxu0 %v710
    %939 = vmatprep.subr.bf16.mxu0 %v715
    %940 = vmatpush1.bf16.msra.mxu0 %v714
    %941 = vmatprep.subr.bf16.mxu0 %v719
    %942 = vmatpush1.bf16.msra.mxu0 %v718
    %943 = vmatprep.subr.bf16.mxu0 %v723
    %944 = vmatpush1.bf16.msra.mxu0 %v722
    %945 = vmatprep.subr.bf16.mxu0 %v727
    %946 = vmatpush1.bf16.msra.mxu0 %v726
    %947 = vmatprep.subr.bf16.mxu0 %v731
    %948 = vmatpush1.bf16.msra.mxu0 %v730
    %949 = vmatprep.subr.bf16.mxu0 %v735
    %950 = vmatpush1.bf16.msra.mxu0 %v734
    %951 = vmatprep.subr.bf16.mxu0 %v739
    %952 = vmatpush1.bf16.msra.mxu0 %v738
    %953 = vmatprep.subr.bf16.mxu0 %v743
    %954 = vmatpush1.bf16.msra.mxu0 %v742
    %955 = vmatprep.subr.bf16.mxu0 %v747
    %956 = vmatpush1.bf16.msra.mxu0 %v746
    %957 = vmatprep.mubr.bf16.mxu0 %v413
    %958 = vmatmul.mubr.bf16.gmra.mrb[0].mxu0 %v412
    %v959 = vpop.f32.mrb[0].mxu0
    %v960 = vadd.f32 0.0, %v959
    %v961 = vpop.f32.mrb[0].mxu0
    %v962 = vadd.f32 0.0, %v961
    %v963 = vpop.f32.mrb[0].mxu0
    %v964 = vadd.f32 0.0, %v963
    %v965 = vpop.f32.mrb[0].mxu0
    %v966 = vadd.f32 0.0, %v965
    %967 = vmatprep.mubr.bf16.mxu0 %v415
    %968 = vmatmul.mubr.bf16.gmra.mrb[0].mxu0 %v414
    %v969 = vpop.f32.mrb[0].mxu0
    %v970 = vadd.f32 0.0, %v969
    %v971 = vpop.f32.mrb[0].mxu0
    %v972 = vadd.f32 0.0, %v971
    %v973 = vpop.f32.mrb[0].mxu0
    %v974 = vadd.f32 0.0, %v973
    %v975 = vpop.f32.mrb[0].mxu0
    %v976 = vadd.f32 0.0, %v975
    %977 = vmatprep.mubr.bf16.mxu0 %v417
    %978 = vmatmul.mubr.bf16.gmra.mrb[0].mxu0 %v416
    %v979 = vpop.f32.mrb[0].mxu0
    %v980 = vadd.f32 0.0, %v979
    %v981 = vpop.f32.mrb[0].mxu0
    %v982 = vadd.f32 0.0, %v981
    %v983 = vpop.f32.mrb[0].mxu0
    %v984 = vadd.f32 0.0, %v983
    %v985 = vpop.f32.mrb[0].mxu0
    %v986 = vadd.f32 0.0, %v985
    %987 = vmatprep.mubr.bf16.mxu0 %v419
    %988 = vmatmul.mubr.bf16.gmra.mrb[0].mxu0 %v418
    %v989 = vpop.f32.mrb[0].mxu0
    %v990 = vadd.f32 0.0, %v989
    %v991 = vpop.f32.mrb[0].mxu0
    %v992 = vadd.f32 0.0, %v991
    %v993 = vpop.f32.mrb[0].mxu0
    %v994 = vadd.f32 0.0, %v993
    %v995 = vpop.f32.mrb[0].mxu0
    %v996 = vadd.f32 0.0, %v995
    %997 = vmatprep.mubr.bf16.mxu0 %v421
    %998 = vmatmul.mubr.bf16.gmra.mrb[0].mxu0 %v420
    %v999 = vpop.f32.mrb[0].mxu0
    %v1000 = vadd.f32 0.0, %v999
    %v1001 = vpop.f32.mrb[0].mxu0
    %v1002 = vadd.f32 0.0, %v1001
    %v1003 = vpop.f32.mrb[0].mxu0
    %v1004 = vadd.f32 0.0, %v1003
    %v1005 = vpop.f32.mrb[0].mxu0
    %v1006 = vadd.f32 0.0, %v1005
    %1007 = vmatprep.mubr.bf16.mxu0 %v423
    %1008 = vmatmul.mubr.bf16.gmra.mrb[0].mxu0 %v422
    %v1009 = vpop.f32.mrb[0].mxu0
    %v1010 = vadd.f32 0.0, %v1009
    %v1011 = vpop.f32.mrb[0].mxu0
    %v1012 = vadd.f32 0.0, %v1011
    %v1013 = vpop.f32.mrb[0].mxu0
    %v1014 = vadd.f32 0.0, %v1013
    %v1015 = vpop.f32.mrb[0].mxu0
    %v1016 = vadd.f32 0.0, %v1015
    %1017 = vmatprep.mubr.bf16.mxu0 %v425
    %1018 = vmatmul.mubr.bf16.gmra.mrb[0].mxu0 %v424
    %v1019 = vpop.f32.mrb[0].mxu0
    %v1020 = vadd.f32 0.0, %v1019
    %v1021 = vpop.f32.mrb[0].mxu0
    %v1022 = vadd.f32 0.0, %v1021
    %v1023 = vpop.f32.mrb[0].mxu0
    %v1024 = vadd.f32 0.0, %v1023
    %v1025 = vpop.f32.mrb[0].mxu0
    %v1026 = vadd.f32 0.0, %v1025
    %1027 = vmatprep.mubr.bf16.mxu0 %v427
    %1028 = vmatmul.mubr.bf16.gmra.mrb[0].mxu0 %v426
    %v1029 = vpop.f32.mrb[0].mxu0
    %v1030 = vadd.f32 0.0, %v1029
    %v1031 = vpop.f32.mrb[0].mxu0
    %v1032 = vadd.f32 0.0, %v1031
    %v1033 = vpop.f32.mrb[0].mxu0
    %v1034 = vadd.f32 0.0, %v1033
    %v1035 = vpop.f32.mrb[0].mxu0
    %v1036 = vadd.f32 0.0, %v1035
    %1037 = vdwg.mxu0
    %v1038 = vpack.c.bf16 %v851, %v847
    %v1039 = vpack.c.bf16 %v853, %v849
    %v1040 = vpack.c.bf16 %v964, %v960
    %v1041 = vpack.c.bf16 %v966, %v962
    %v1042 = vpack.c.bf16 %v861, %v857
    %v1043 = vpack.c.bf16 %v863, %v859
    %v1044 = vpack.c.bf16 %v974, %v970
    %v1045 = vpack.c.bf16 %v976, %v972
    %v1046 = vpack.c.bf16 %v871, %v867
    %v1047 = vpack.c.bf16 %v873, %v869
    %v1048 = vpack.c.bf16 %v984, %v980
    %v1049 = vpack.c.bf16 %v986, %v982
    %v1050 = vpack.c.bf16 %v881, %v877
    %v1051 = vpack.c.bf16 %v883, %v879
    %v1052 = vpack.c.bf16 %v994, %v990
    %v1053 = vpack.c.bf16 %v996, %v992
    %v1054 = vpack.c.bf16 %v891, %v887
    %v1055 = vpack.c.bf16 %v893, %v889
    %v1056 = vpack.c.bf16 %v1004, %v1000
    %v1057 = vpack.c.bf16 %v1006, %v1002
    %v1058 = vpack.c.bf16 %v901, %v897
    %v1059 = vpack.c.bf16 %v903, %v899
    %v1060 = vpack.c.bf16 %v1014, %v1010
    %v1061 = vpack.c.bf16 %v1016, %v1012
    %v1062 = vpack.c.bf16 %v911, %v907
    %v1063 = vpack.c.bf16 %v913, %v909
    %v1064 = vpack.c.bf16 %v1024, %v1020
    %v1065 = vpack.c.bf16 %v1026, %v1022
    %v1066 = vpack.c.bf16 %v921, %v917
    %v1067 = vpack.c.bf16 %v923, %v919
    %v1068 = vpack.c.bf16 %v1034, %v1030
    %v1069 = vpack.c.bf16 %v1036, %v1032
    %v1070 = vld [vmem:[%s4] sm:$0xf]
    %v1072 = vlaneseq
    %v1073 = vshrl.u32 %v1072, 7
    %v1074 = vsub.s32 0, %v1073
    %v1075 = vrot.slane %v1070, %v1074
    %v1076 = vlaneseq
    %v1077 = vshrl.u32 %v1076, 7
    %v1078 = vsub.s32 1, %v1077
    %v1079 = vrot.slane %v1070, %v1078
    %v1080 = vlaneseq
    %v1081 = vshrl.u32 %v1080, 7
    %v1082 = vsub.s32 2, %v1081
    %v1083 = vrot.slane %v1070, %v1082
    %v1084 = vlaneseq
    %v1085 = vshrl.u32 %v1084, 7
    %v1086 = vsub.s32 3, %v1085
    %v1087 = vrot.slane %v1070, %v1086
    %v1092 = vpack.c.bf16 %v1075, %v1075
    %v1093 = vpack.c.bf16 %v1079, %v1079
    %v1094 = vpack.c.bf16 %v1083, %v1083
    %v1095 = vpack.c.bf16 %v1087, %v1087
    %v1097 = vpack.i.b16 %v1092, %v1092
    %v1099 = vlaneseq
    %v1100 = vshrl.u32 %v1099, 7
    %v1101 = vsub.s32 0, %v1100
    %v1102 = vrot.slane %v1097, %v1101
    %v1104 = vpack.i.b16 %v1093, %v1093
    %v1106 = vlaneseq
    %v1107 = vshrl.u32 %v1106, 7
    %v1108 = vsub.s32 0, %v1107
    %v1109 = vrot.slane %v1104, %v1108
    %v1111 = vpack.i.b16 %v1094, %v1094
    %v1113 = vlaneseq
    %v1114 = vshrl.u32 %v1113, 7
    %v1115 = vsub.s32 0, %v1114
    %v1116 = vrot.slane %v1111, %v1115
    %v1118 = vpack.i.b16 %v1095, %v1095
    %v1120 = vlaneseq
    %v1121 = vshrl.u32 %v1120, 7
    %v1122 = vsub.s32 0, %v1121
    %v1123 = vrot.slane %v1118, %v1122
    %v1124 = vadd.bf16 %v1038, %v1102
    %v1125 = vadd.bf16 %v1039, %v1109
    %v1126 = vadd.bf16 %v1040, %v1116
    %v1127 = vadd.bf16 %v1041, %v1123
    %v1128 = vadd.bf16 %v1042, %v1102
    %v1129 = vadd.bf16 %v1043, %v1109
    %v1130 = vadd.bf16 %v1044, %v1116
    %v1131 = vadd.bf16 %v1045, %v1123
    %v1132 = vadd.bf16 %v1046, %v1102
    %v1133 = vadd.bf16 %v1047, %v1109
    %v1134 = vadd.bf16 %v1048, %v1116
    %v1135 = vadd.bf16 %v1049, %v1123
    %v1136 = vadd.bf16 %v1050, %v1102
    %v1137 = vadd.bf16 %v1051, %v1109
    %v1138 = vadd.bf16 %v1052, %v1116
    %v1139 = vadd.bf16 %v1053, %v1123
    %v1140 = vadd.bf16 %v1054, %v1102
    %v1141 = vadd.bf16 %v1055, %v1109
    %v1142 = vadd.bf16 %v1056, %v1116
    %v1143 = vadd.bf16 %v1057, %v1123
    %v1144 = vadd.bf16 %v1058, %v1102
    %v1145 = vadd.bf16 %v1059, %v1109
    %v1146 = vadd.bf16 %v1060, %v1116
    %v1147 = vadd.bf16 %v1061, %v1123
    %v1148 = vadd.bf16 %v1062, %v1102
    %v1149 = vadd.bf16 %v1063, %v1109
    %v1150 = vadd.bf16 %v1064, %v1116
    %v1151 = vadd.bf16 %v1065, %v1123
    %v1152 = vadd.bf16 %v1066, %v1102
    %v1153 = vadd.bf16 %v1067, %v1109
    %v1154 = vadd.bf16 %v1068, %v1116
    %v1155 = vadd.bf16 %v1069, %v1123
    %v1156 = vmul.bf16 %v1124, 1009007652
    %v1157 = vmul.bf16 %v1125, 1009007652
    %v1158 = vmul.bf16 %v1126, 1009007652
    %v1159 = vmul.bf16 %v1127, 1009007652
    %v1160 = vmul.bf16 %v1128, 1009007652
    %v1161 = vmul.bf16 %v1129, 1009007652
    %v1162 = vmul.bf16 %v1130, 1009007652
    %v1163 = vmul.bf16 %v1131, 1009007652
    %v1164 = vmul.bf16 %v1132, 1009007652
    %v1165 = vmul.bf16 %v1133, 1009007652
    %v1166 = vmul.bf16 %v1134, 1009007652
    %v1167 = vmul.bf16 %v1135, 1009007652
    %v1168 = vmul.bf16 %v1136, 1009007652
    %v1169 = vmul.bf16 %v1137, 1009007652
    %v1170 = vmul.bf16 %v1138, 1009007652
    %v1171 = vmul.bf16 %v1139, 1009007652
    %v1172 = vmul.bf16 %v1140, 1009007652
    %v1173 = vmul.bf16 %v1141, 1009007652
    %v1174 = vmul.bf16 %v1142, 1009007652
    %v1175 = vmul.bf16 %v1143, 1009007652
    %v1176 = vmul.bf16 %v1144, 1009007652
    %v1177 = vmul.bf16 %v1145, 1009007652
    %v1178 = vmul.bf16 %v1146, 1009007652
    %v1179 = vmul.bf16 %v1147, 1009007652
    %v1180 = vmul.bf16 %v1148, 1009007652
    %v1181 = vmul.bf16 %v1149, 1009007652
    %v1182 = vmul.bf16 %v1150, 1009007652
    %v1183 = vmul.bf16 %v1151, 1009007652
    %v1184 = vmul.bf16 %v1152, 1009007652
    %v1185 = vmul.bf16 %v1153, 1009007652
    %v1186 = vmul.bf16 %v1154, 1009007652
    %v1187 = vmul.bf16 %v1155, 1009007652
    %v1188 = vmax.bf16 %v1124, %v1156
    %v1189 = vmax.bf16 %v1125, %v1157
    %v1190 = vmax.bf16 %v1126, %v1158
    %v1191 = vmax.bf16 %v1127, %v1159
    %v1192 = vmax.bf16 %v1128, %v1160
    %v1193 = vmax.bf16 %v1129, %v1161
    %v1194 = vmax.bf16 %v1130, %v1162
    %v1195 = vmax.bf16 %v1131, %v1163
    %v1196 = vmax.bf16 %v1132, %v1164
    %v1197 = vmax.bf16 %v1133, %v1165
    %v1198 = vmax.bf16 %v1134, %v1166
    %v1199 = vmax.bf16 %v1135, %v1167
    %v1200 = vmax.bf16 %v1136, %v1168
    %v1201 = vmax.bf16 %v1137, %v1169
    %v1202 = vmax.bf16 %v1138, %v1170
    %v1203 = vmax.bf16 %v1139, %v1171
    %v1204 = vmax.bf16 %v1140, %v1172
    %v1205 = vmax.bf16 %v1141, %v1173
    %v1206 = vmax.bf16 %v1142, %v1174
    %v1207 = vmax.bf16 %v1143, %v1175
    %v1208 = vmax.bf16 %v1144, %v1176
    %v1209 = vmax.bf16 %v1145, %v1177
    %v1210 = vmax.bf16 %v1146, %v1178
    %v1211 = vmax.bf16 %v1147, %v1179
    %v1212 = vmax.bf16 %v1148, %v1180
    %v1213 = vmax.bf16 %v1149, %v1181
    %v1214 = vmax.bf16 %v1150, %v1182
    %v1215 = vmax.bf16 %v1151, %v1183
    %v1216 = vmax.bf16 %v1152, %v1184
    %v1217 = vmax.bf16 %v1153, %v1185
    %v1218 = vmax.bf16 %v1154, %v1186
    %v1219 = vmax.bf16 %v1155, %v1187
    %v1220 = vld [vmem:[#allocation8] sm:$0xff]
    %v1221 = vld [vmem:[#allocation8 + $0x8] sm:$0xff]
    %v1222 = vld [vmem:[#allocation8 + $0x10] sm:$0xff]
    %v1223 = vld [vmem:[#allocation8 + $0x18] sm:$0xff]
    %v1224 = vld [vmem:[#allocation8 + $0x20] sm:$0xff]
    %v1225 = vld [vmem:[#allocation8 + $0x28] sm:$0xff]
    %v1226 = vld [vmem:[#allocation8 + $0x30] sm:$0xff]
    %v1227 = vld [vmem:[#allocation8 + $0x38] sm:$0xff]
    %v1228 = vld [vmem:[#allocation8 + $0x40] sm:$0xff]
    %v1229 = vld [vmem:[#allocation8 + $0x48] sm:$0xff]
    %v1230 = vld [vmem:[#allocation8 + $0x50] sm:$0xff]
    %v1231 = vld [vmem:[#allocation8 + $0x58] sm:$0xff]
    %v1232 = vld [vmem:[#allocation8 + $0x60] sm:$0xff]
    %v1233 = vld [vmem:[#allocation8 + $0x68] sm:$0xff]
    %v1234 = vld [vmem:[#allocation8 + $0x70] sm:$0xff]
    %v1235 = vld [vmem:[#allocation8 + $0x78] sm:$0xff]
    %v1236 = vld [vmem:[#allocation8 + $0x80] sm:$0xff]
    %v1237 = vld [vmem:[#allocation8 + $0x88] sm:$0xff]
    %v1238 = vld [vmem:[#allocation8 + $0x90] sm:$0xff]
    %v1239 = vld [vmem:[#allocation8 + $0x98] sm:$0xff]
    %v1240 = vld [vmem:[#allocation8 + $0xa0] sm:$0xff]
    %v1241 = vld [vmem:[#allocation8 + $0xa8] sm:$0xff]
    %v1242 = vld [vmem:[#allocation8 + $0xb0] sm:$0xff]
    %v1243 = vld [vmem:[#allocation8 + $0xb8] sm:$0xff]
    %v1244 = vld [vmem:[#allocation8 + $0xc0] sm:$0xff]
    %v1245 = vld [vmem:[#allocation8 + $0xc8] sm:$0xff]
    %v1246 = vld [vmem:[#allocation8 + $0xd0] sm:$0xff]
    %v1247 = vld [vmem:[#allocation8 + $0xd8] sm:$0xff]
    %v1248 = vld [vmem:[#allocation8 + $0xe0] sm:$0xff]
    %v1249 = vld [vmem:[#allocation8 + $0xe8] sm:$0xff]
    %v1250 = vld [vmem:[#allocation8 + $0xf0] sm:$0xff]
    %v1251 = vld [vmem:[#allocation8 + $0xf8] sm:$0xff]
    %v1252 = vld [vmem:[#allocation8 + $0x100] sm:$0xff]
    %v1253 = vld [vmem:[#allocation8 + $0x108] sm:$0xff]
    %v1254 = vld [vmem:[#allocation8 + $0x110] sm:$0xff]
    %v1255 = vld [vmem:[#allocation8 + $0x118] sm:$0xff]
    %v1256 = vld [vmem:[#allocation8 + $0x120] sm:$0xff]
    %v1257 = vld [vmem:[#allocation8 + $0x128] sm:$0xff]
    %v1258 = vld [vmem:[#allocation8 + $0x130] sm:$0xff]
    %v1259 = vld [vmem:[#allocation8 + $0x138] sm:$0xff]
    %v1260 = vld [vmem:[#allocation8 + $0x140] sm:$0xff]
    %v1261 = vld [vmem:[#allocation8 + $0x148] sm:$0xff]
    %v1262 = vld [vmem:[#allocation8 + $0x150] sm:$0xff]
    %v1263 = vld [vmem:[#allocation8 + $0x158] sm:$0xff]
    %v1264 = vld [vmem:[#allocation8 + $0x160] sm:$0xff]
    %v1265 = vld [vmem:[#allocation8 + $0x168] sm:$0xff]
    %v1266 = vld [vmem:[#allocation8 + $0x170] sm:$0xff]
    %v1267 = vld [vmem:[#allocation8 + $0x178] sm:$0xff]
    %v1268 = vld [vmem:[#allocation8 + $0x180] sm:$0xff]
    %v1269 = vld [vmem:[#allocation8 + $0x188] sm:$0xff]
    %v1270 = vld [vmem:[#allocation8 + $0x190] sm:$0xff]
    %v1271 = vld [vmem:[#allocation8 + $0x198] sm:$0xff]
    %v1272 = vld [vmem:[#allocation8 + $0x1a0] sm:$0xff]
    %v1273 = vld [vmem:[#allocation8 + $0x1a8] sm:$0xff]
    %v1274 = vld [vmem:[#allocation8 + $0x1b0] sm:$0xff]
    %v1275 = vld [vmem:[#allocation8 + $0x1b8] sm:$0xff]
    %v1276 = vld [vmem:[#allocation8 + $0x1c0] sm:$0xff]
    %v1277 = vld [vmem:[#allocation8 + $0x1c8] sm:$0xff]
    %v1278 = vld [vmem:[#allocation8 + $0x1d0] sm:$0xff]
    %v1279 = vld [vmem:[#allocation8 + $0x1d8] sm:$0xff]
    %v1280 = vld [vmem:[#allocation8 + $0x1e0] sm:$0xff]
    %v1281 = vld [vmem:[#allocation8 + $0x1e8] sm:$0xff]
    %v1282 = vld [vmem:[#allocation8 + $0x1f0] sm:$0xff]
    %v1283 = vld [vmem:[#allocation8 + $0x1f8] sm:$0xff]
    %v1284 = vld [vmem:[#allocation8 + $0x200] sm:$0xff]
    %v1285 = vld [vmem:[#allocation8 + $0x208] sm:$0xff]
    %v1286 = vld [vmem:[#allocation8 + $0x210] sm:$0xff]
    %v1287 = vld [vmem:[#allocation8 + $0x218] sm:$0xff]
    %v1288 = vld [vmem:[#allocation8 + $0x220] sm:$0xff]
    %v1289 = vld [vmem:[#allocation8 + $0x228] sm:$0xff]
    %v1290 = vld [vmem:[#allocation8 + $0x230] sm:$0xff]
    %v1291 = vld [vmem:[#allocation8 + $0x238] sm:$0xff]
    %v1292 = vld [vmem:[#allocation8 + $0x240] sm:$0xff]
    %v1293 = vld [vmem:[#allocation8 + $0x248] sm:$0xff]
    %v1294 = vld [vmem:[#allocation8 + $0x250] sm:$0xff]
    %v1295 = vld [vmem:[#allocation8 + $0x258] sm:$0xff]
    %v1296 = vld [vmem:[#allocation8 + $0x260] sm:$0xff]
    %v1297 = vld [vmem:[#allocation8 + $0x268] sm:$0xff]
    %v1298 = vld [vmem:[#allocation8 + $0x270] sm:$0xff]
    %v1299 = vld [vmem:[#allocation8 + $0x278] sm:$0xff]
    %v1300 = vld [vmem:[#allocation8 + $0x280] sm:$0xff]
    %v1301 = vld [vmem:[#allocation8 + $0x288] sm:$0xff]
    %v1302 = vld [vmem:[#allocation8 + $0x290] sm:$0xff]
    %v1303 = vld [vmem:[#allocation8 + $0x298] sm:$0xff]
    %v1304 = vld [vmem:[#allocation8 + $0x2a0] sm:$0xff]
    %v1305 = vld [vmem:[#allocation8 + $0x2a8] sm:$0xff]
    %v1306 = vld [vmem:[#allocation8 + $0x2b0] sm:$0xff]
    %v1307 = vld [vmem:[#allocation8 + $0x2b8] sm:$0xff]
    %v1308 = vld [vmem:[#allocation8 + $0x2c0] sm:$0xff]
    %v1309 = vld [vmem:[#allocation8 + $0x2c8] sm:$0xff]
    %v1310 = vld [vmem:[#allocation8 + $0x2d0] sm:$0xff]
    %v1311 = vld [vmem:[#allocation8 + $0x2d8] sm:$0xff]
    %v1312 = vld [vmem:[#allocation8 + $0x2e0] sm:$0xff]
    %v1313 = vld [vmem:[#allocation8 + $0x2e8] sm:$0xff]
    %v1314 = vld [vmem:[#allocation8 + $0x2f0] sm:$0xff]
    %v1315 = vld [vmem:[#allocation8 + $0x2f8] sm:$0xff]
    %v1316 = vld [vmem:[#allocation8 + $0x300] sm:$0xff]
    %v1317 = vld [vmem:[#allocation8 + $0x308] sm:$0xff]
    %v1318 = vld [vmem:[#allocation8 + $0x310] sm:$0xff]
    %v1319 = vld [vmem:[#allocation8 + $0x318] sm:$0xff]
    %v1320 = vld [vmem:[#allocation8 + $0x320] sm:$0xff]
    %v1321 = vld [vmem:[#allocation8 + $0x328] sm:$0xff]
    %v1322 = vld [vmem:[#allocation8 + $0x330] sm:$0xff]
    %v1323 = vld [vmem:[#allocation8 + $0x338] sm:$0xff]
    %v1324 = vld [vmem:[#allocation8 + $0x340] sm:$0xff]
    %v1325 = vld [vmem:[#allocation8 + $0x348] sm:$0xff]
    %v1326 = vld [vmem:[#allocation8 + $0x350] sm:$0xff]
    %v1327 = vld [vmem:[#allocation8 + $0x358] sm:$0xff]
    %v1328 = vld [vmem:[#allocation8 + $0x360] sm:$0xff]
    %v1329 = vld [vmem:[#allocation8 + $0x368] sm:$0xff]
    %v1330 = vld [vmem:[#allocation8 + $0x370] sm:$0xff]
    %v1331 = vld [vmem:[#allocation8 + $0x378] sm:$0xff]
    %v1332 = vld [vmem:[#allocation8 + $0x380] sm:$0xff]
    %v1333 = vld [vmem:[#allocation8 + $0x388] sm:$0xff]
    %v1334 = vld [vmem:[#allocation8 + $0x390] sm:$0xff]
    %v1335 = vld [vmem:[#allocation8 + $0x398] sm:$0xff]
    %v1336 = vld [vmem:[#allocation8 + $0x3a0] sm:$0xff]
    %v1337 = vld [vmem:[#allocation8 + $0x3a8] sm:$0xff]
    %v1338 = vld [vmem:[#allocation8 + $0x3b0] sm:$0xff]
    %v1339 = vld [vmem:[#allocation8 + $0x3b8] sm:$0xff]
    %v1340 = vld [vmem:[#allocation8 + $0x3c0] sm:$0xff]
    %v1341 = vld [vmem:[#allocation8 + $0x3c8] sm:$0xff]
    %v1342 = vld [vmem:[#allocation8 + $0x3d0] sm:$0xff]
    %v1343 = vld [vmem:[#allocation8 + $0x3d8] sm:$0xff]
    %v1344 = vld [vmem:[#allocation8 + $0x3e0] sm:$0xff]
    %v1345 = vld [vmem:[#allocation8 + $0x3e8] sm:$0xff]
    %v1346 = vld [vmem:[#allocation8 + $0x3f0] sm:$0xff]
    %v1347 = vld [vmem:[#allocation8 + $0x3f8] sm:$0xff]
    %v1348 = vld [vmem:[#allocation8 + $0x400] sm:$0xff]
    %v1349 = vld [vmem:[#allocation8 + $0x408] sm:$0xff]
    %v1350 = vld [vmem:[#allocation8 + $0x410] sm:$0xff]
    %v1351 = vld [vmem:[#allocation8 + $0x418] sm:$0xff]
    %v1352 = vld [vmem:[#allocation8 + $0x420] sm:$0xff]
    %v1353 = vld [vmem:[#allocation8 + $0x428] sm:$0xff]
    %v1354 = vld [vmem:[#allocation8 + $0x430] sm:$0xff]
    %v1355 = vld [vmem:[#allocation8 + $0x438] sm:$0xff]
    %v1356 = vld [vmem:[#allocation8 + $0x440] sm:$0xff]
    %v1357 = vld [vmem:[#allocation8 + $0x448] sm:$0xff]
    %v1358 = vld [vmem:[#allocation8 + $0x450] sm:$0xff]
    %v1359 = vld [vmem:[#allocation8 + $0x458] sm:$0xff]
    %v1360 = vld [vmem:[#allocation8 + $0x460] sm:$0xff]
    %v1361 = vld [vmem:[#allocation8 + $0x468] sm:$0xff]
    %v1362 = vld [vmem:[#allocation8 + $0x470] sm:$0xff]
    %v1363 = vld [vmem:[#allocation8 + $0x478] sm:$0xff]
    %v1364 = vld [vmem:[#allocation8 + $0x480] sm:$0xff]
    %v1365 = vld [vmem:[#allocation8 + $0x488] sm:$0xff]
    %v1366 = vld [vmem:[#allocation8 + $0x490] sm:$0xff]
    %v1367 = vld [vmem:[#allocation8 + $0x498] sm:$0xff]
    %v1368 = vld [vmem:[#allocation8 + $0x4a0] sm:$0xff]
    %v1369 = vld [vmem:[#allocation8 + $0x4a8] sm:$0xff]
    %v1370 = vld [vmem:[#allocation8 + $0x4b0] sm:$0xff]
    %v1371 = vld [vmem:[#allocation8 + $0x4b8] sm:$0xff]
    %v1372 = vld [vmem:[#allocation8 + $0x4c0] sm:$0xff]
    %v1373 = vld [vmem:[#allocation8 + $0x4c8] sm:$0xff]
    %v1374 = vld [vmem:[#allocation8 + $0x4d0] sm:$0xff]
    %v1375 = vld [vmem:[#allocation8 + $0x4d8] sm:$0xff]
    %v1376 = vld [vmem:[#allocation8 + $0x4e0] sm:$0xff]
    %v1377 = vld [vmem:[#allocation8 + $0x4e8] sm:$0xff]
    %v1378 = vld [vmem:[#allocation8 + $0x4f0] sm:$0xff]
    %v1379 = vld [vmem:[#allocation8 + $0x4f8] sm:$0xff]
    %v1380 = vld [vmem:[#allocation8 + $0x500] sm:$0xff]
    %v1381 = vld [vmem:[#allocation8 + $0x508] sm:$0xff]
    %v1382 = vld [vmem:[#allocation8 + $0x510] sm:$0xff]
    %v1383 = vld [vmem:[#allocation8 + $0x518] sm:$0xff]
    %v1384 = vld [vmem:[#allocation8 + $0x520] sm:$0xff]
    %v1385 = vld [vmem:[#allocation8 + $0x528] sm:$0xff]
    %v1386 = vld [vmem:[#allocation8 + $0x530] sm:$0xff]
    %v1387 = vld [vmem:[#allocation8 + $0x538] sm:$0xff]
    %v1388 = vld [vmem:[#allocation8 + $0x540] sm:$0xff]
    %v1389 = vld [vmem:[#allocation8 + $0x548] sm:$0xff]
    %v1390 = vld [vmem:[#allocation8 + $0x550] sm:$0xff]
    %v1391 = vld [vmem:[#allocation8 + $0x558] sm:$0xff]
    %v1392 = vld [vmem:[#allocation8 + $0x560] sm:$0xff]
    %v1393 = vld [vmem:[#allocation8 + $0x568] sm:$0xff]
    %v1394 = vld [vmem:[#allocation8 + $0x570] sm:$0xff]
    %v1395 = vld [vmem:[#allocation8 + $0x578] sm:$0xff]
    %v1396 = vld [vmem:[#allocation8 + $0x580] sm:$0xff]
    %v1397 = vld [vmem:[#allocation8 + $0x588] sm:$0xff]
    %v1398 = vld [vmem:[#allocation8 + $0x590] sm:$0xff]
    %v1399 = vld [vmem:[#allocation8 + $0x598] sm:$0xff]
    %v1400 = vld [vmem:[#allocation8 + $0x5a0] sm:$0xff]
    %v1401 = vld [vmem:[#allocation8 + $0x5a8] sm:$0xff]
    %v1402 = vld [vmem:[#allocation8 + $0x5b0] sm:$0xff]
    %v1403 = vld [vmem:[#allocation8 + $0x5b8] sm:$0xff]
    %v1404 = vld [vmem:[#allocation8 + $0x5c0] sm:$0xff]
    %v1405 = vld [vmem:[#allocation8 + $0x5c8] sm:$0xff]
    %v1406 = vld [vmem:[#allocation8 + $0x5d0] sm:$0xff]
    %v1407 = vld [vmem:[#allocation8 + $0x5d8] sm:$0xff]
    %v1408 = vld [vmem:[#allocation8 + $0x5e0] sm:$0xff]
    %v1409 = vld [vmem:[#allocation8 + $0x5e8] sm:$0xff]
    %v1410 = vld [vmem:[#allocation8 + $0x5f0] sm:$0xff]
    %v1411 = vld [vmem:[#allocation8 + $0x5f8] sm:$0xff]
    %v1412 = vld [vmem:[#allocation8 + $0x600] sm:$0xff]
    %v1413 = vld [vmem:[#allocation8 + $0x608] sm:$0xff]
    %v1414 = vld [vmem:[#allocation8 + $0x610] sm:$0xff]
    %v1415 = vld [vmem:[#allocation8 + $0x618] sm:$0xff]
    %v1416 = vld [vmem:[#allocation8 + $0x620] sm:$0xff]
    %v1417 = vld [vmem:[#allocation8 + $0x628] sm:$0xff]
    %v1418 = vld [vmem:[#allocation8 + $0x630] sm:$0xff]
    %v1419 = vld [vmem:[#allocation8 + $0x638] sm:$0xff]
    %v1420 = vld [vmem:[#allocation8 + $0x640] sm:$0xff]
    %v1421 = vld [vmem:[#allocation8 + $0x648] sm:$0xff]
    %v1422 = vld [vmem:[#allocation8 + $0x650] sm:$0xff]
    %v1423 = vld [vmem:[#allocation8 + $0x658] sm:$0xff]
    %v1424 = vld [vmem:[#allocation8 + $0x660] sm:$0xff]
    %v1425 = vld [vmem:[#allocation8 + $0x668] sm:$0xff]
    %v1426 = vld [vmem:[#allocation8 + $0x670] sm:$0xff]
    %v1427 = vld [vmem:[#allocation8 + $0x678] sm:$0xff]
    %v1428 = vld [vmem:[#allocation8 + $0x680] sm:$0xff]
    %v1429 = vld [vmem:[#allocation8 + $0x688] sm:$0xff]
    %v1430 = vld [vmem:[#allocation8 + $0x690] sm:$0xff]
    %v1431 = vld [vmem:[#allocation8 + $0x698] sm:$0xff]
    %v1432 = vld [vmem:[#allocation8 + $0x6a0] sm:$0xff]
    %v1433 = vld [vmem:[#allocation8 + $0x6a8] sm:$0xff]
    %v1434 = vld [vmem:[#allocation8 + $0x6b0] sm:$0xff]
    %v1435 = vld [vmem:[#allocation8 + $0x6b8] sm:$0xff]
    %v1436 = vld [vmem:[#allocation8 + $0x6c0] sm:$0xff]
    %v1437 = vld [vmem:[#allocation8 + $0x6c8] sm:$0xff]
    %v1438 = vld [vmem:[#allocation8 + $0x6d0] sm:$0xff]
    %v1439 = vld [vmem:[#allocation8 + $0x6d8] sm:$0xff]
    %v1440 = vld [vmem:[#allocation8 + $0x6e0] sm:$0xff]
    %v1441 = vld [vmem:[#allocation8 + $0x6e8] sm:$0xff]
    %v1442 = vld [vmem:[#allocation8 + $0x6f0] sm:$0xff]
    %v1443 = vld [vmem:[#allocation8 + $0x6f8] sm:$0xff]
    %v1444 = vld [vmem:[#allocation8 + $0x700] sm:$0xff]
    %v1445 = vld [vmem:[#allocation8 + $0x708] sm:$0xff]
    %v1446 = vld [vmem:[#allocation8 + $0x710] sm:$0xff]
    %v1447 = vld [vmem:[#allocation8 + $0x718] sm:$0xff]
    %v1448 = vld [vmem:[#allocation8 + $0x720] sm:$0xff]
    %v1449 = vld [vmem:[#allocation8 + $0x728] sm:$0xff]
    %v1450 = vld [vmem:[#allocation8 + $0x730] sm:$0xff]
    %v1451 = vld [vmem:[#allocation8 + $0x738] sm:$0xff]
    %v1452 = vld [vmem:[#allocation8 + $0x740] sm:$0xff]
    %v1453 = vld [vmem:[#allocation8 + $0x748] sm:$0xff]
    %v1454 = vld [vmem:[#allocation8 + $0x750] sm:$0xff]
    %v1455 = vld [vmem:[#allocation8 + $0x758] sm:$0xff]
    %v1456 = vld [vmem:[#allocation8 + $0x760] sm:$0xff]
    %v1457 = vld [vmem:[#allocation8 + $0x768] sm:$0xff]
    %v1458 = vld [vmem:[#allocation8 + $0x770] sm:$0xff]
    %v1459 = vld [vmem:[#allocation8 + $0x778] sm:$0xff]
    %v1460 = vld [vmem:[#allocation8 + $0x780] sm:$0xff]
    %v1461 = vld [vmem:[#allocation8 + $0x788] sm:$0xff]
    %v1462 = vld [vmem:[#allocation8 + $0x790] sm:$0xff]
    %v1463 = vld [vmem:[#allocation8 + $0x798] sm:$0xff]
    %v1464 = vld [vmem:[#allocation8 + $0x7a0] sm:$0xff]
    %v1465 = vld [vmem:[#allocation8 + $0x7a8] sm:$0xff]
    %v1466 = vld [vmem:[#allocation8 + $0x7b0] sm:$0xff]
    %v1467 = vld [vmem:[#allocation8 + $0x7b8] sm:$0xff]
    %v1468 = vld [vmem:[#allocation8 + $0x7c0] sm:$0xff]
    %v1469 = vld [vmem:[#allocation8 + $0x7c8] sm:$0xff]
    %v1470 = vld [vmem:[#allocation8 + $0x7d0] sm:$0xff]
    %v1471 = vld [vmem:[#allocation8 + $0x7d8] sm:$0xff]
    %v1472 = vld [vmem:[#allocation8 + $0x7e0] sm:$0xff]
    %v1473 = vld [vmem:[#allocation8 + $0x7e8] sm:$0xff]
    %v1474 = vld [vmem:[#allocation8 + $0x7f0] sm:$0xff]
    %v1475 = vld [vmem:[#allocation8 + $0x7f8] sm:$0xff]
    %v1732 = vunpack.c.l.b16 %v1220
    %v1733 = vunpack.c.h.b16 %v1220
    %v1734 = vunpack.c.l.b16 %v1221
    %v1735 = vunpack.c.h.b16 %v1221
    %v1736 = vunpack.c.l.b16 %v1222
    %v1737 = vunpack.c.h.b16 %v1222
    %v1738 = vunpack.c.l.b16 %v1223
    %v1739 = vunpack.c.h.b16 %v1223
    %v1740 = vunpack.c.l.b16 %v1224
    %v1741 = vunpack.c.h.b16 %v1224
    %v1742 = vunpack.c.l.b16 %v1225
    %v1743 = vunpack.c.h.b16 %v1225
    %v1744 = vunpack.c.l.b16 %v1226
    %v1745 = vunpack.c.h.b16 %v1226
    %v1746 = vunpack.c.l.b16 %v1227
    %v1747 = vunpack.c.h.b16 %v1227
    %v1748 = vunpack.c.l.b16 %v1228
    %v1749 = vunpack.c.h.b16 %v1228
    %v1750 = vunpack.c.l.b16 %v1229
    %v1751 = vunpack.c.h.b16 %v1229
    %v1752 = vunpack.c.l.b16 %v1230
    %v1753 = vunpack.c.h.b16 %v1230
    %v1754 = vunpack.c.l.b16 %v1231
    %v1755 = vunpack.c.h.b16 %v1231
    %v1756 = vunpack.c.l.b16 %v1232
    %v1757 = vunpack.c.h.b16 %v1232
    %v1758 = vunpack.c.l.b16 %v1233
    %v1759 = vunpack.c.h.b16 %v1233
    %v1760 = vunpack.c.l.b16 %v1234
    %v1761 = vunpack.c.h.b16 %v1234
    %v1762 = vunpack.c.l.b16 %v1235
    %v1763 = vunpack.c.h.b16 %v1235
    %v1764 = vunpack.c.l.b16 %v1236
    %v1765 = vunpack.c.h.b16 %v1236
    %v1766 = vunpack.c.l.b16 %v1237
    %v1767 = vunpack.c.h.b16 %v1237
    %v1768 = vunpack.c.l.b16 %v1238
    %v1769 = vunpack.c.h.b16 %v1238
    %v1770 = vunpack.c.l.b16 %v1239
    %v1771 = vunpack.c.h.b16 %v1239
    %v1772 = vunpack.c.l.b16 %v1240
    %v1773 = vunpack.c.h.b16 %v1240
    %v1774 = vunpack.c.l.b16 %v1241
    %v1775 = vunpack.c.h.b16 %v1241
    %v1776 = vunpack.c.l.b16 %v1242
    %v1777 = vunpack.c.h.b16 %v1242
    %v1778 = vunpack.c.l.b16 %v1243
    %v1779 = vunpack.c.h.b16 %v1243
    %v1780 = vunpack.c.l.b16 %v1244
    %v1781 = vunpack.c.h.b16 %v1244
    %v1782 = vunpack.c.l.b16 %v1245
    %v1783 = vunpack.c.h.b16 %v1245
    %v1784 = vunpack.c.l.b16 %v1246
    %v1785 = vunpack.c.h.b16 %v1246
    %v1786 = vunpack.c.l.b16 %v1247
    %v1787 = vunpack.c.h.b16 %v1247
    %v1788 = vunpack.c.l.b16 %v1248
    %v1789 = vunpack.c.h.b16 %v1248
    %v1790 = vunpack.c.l.b16 %v1249
    %v1791 = vunpack.c.h.b16 %v1249
    %v1792 = vunpack.c.l.b16 %v1250
    %v1793 = vunpack.c.h.b16 %v1250
    %v1794 = vunpack.c.l.b16 %v1251
    %v1795 = vunpack.c.h.b16 %v1251
    %v1796 = vunpack.c.l.b16 %v1252
    %v1797 = vunpack.c.h.b16 %v1252
    %v1798 = vunpack.c.l.b16 %v1253
    %v1799 = vunpack.c.h.b16 %v1253
    %v1800 = vunpack.c.l.b16 %v1254
    %v1801 = vunpack.c.h.b16 %v1254
    %v1802 = vunpack.c.l.b16 %v1255
    %v1803 = vunpack.c.h.b16 %v1255
    %v1804 = vunpack.c.l.b16 %v1256
    %v1805 = vunpack.c.h.b16 %v1256
    %v1806 = vunpack.c.l.b16 %v1257
    %v1807 = vunpack.c.h.b16 %v1257
    %v1808 = vunpack.c.l.b16 %v1258
    %v1809 = vunpack.c.h.b16 %v1258
    %v1810 = vunpack.c.l.b16 %v1259
    %v1811 = vunpack.c.h.b16 %v1259
    %v1812 = vunpack.c.l.b16 %v1260
    %v1813 = vunpack.c.h.b16 %v1260
    %v1814 = vunpack.c.l.b16 %v1261
    %v1815 = vunpack.c.h.b16 %v1261
    %v1816 = vunpack.c.l.b16 %v1262
    %v1817 = vunpack.c.h.b16 %v1262
    %v1818 = vunpack.c.l.b16 %v1263
    %v1819 = vunpack.c.h.b16 %v1263
    %v1820 = vunpack.c.l.b16 %v1264
    %v1821 = vunpack.c.h.b16 %v1264
    %v1822 = vunpack.c.l.b16 %v1265
    %v1823 = vunpack.c.h.b16 %v1265
    %v1824 = vunpack.c.l.b16 %v1266
    %v1825 = vunpack.c.h.b16 %v1266
    %v1826 = vunpack.c.l.b16 %v1267
    %v1827 = vunpack.c.h.b16 %v1267
    %v1828 = vunpack.c.l.b16 %v1268
    %v1829 = vunpack.c.h.b16 %v1268
    %v1830 = vunpack.c.l.b16 %v1269
    %v1831 = vunpack.c.h.b16 %v1269
    %v1832 = vunpack.c.l.b16 %v1270
    %v1833 = vunpack.c.h.b16 %v1270
    %v1834 = vunpack.c.l.b16 %v1271
    %v1835 = vunpack.c.h.b16 %v1271
    %v1836 = vunpack.c.l.b16 %v1272
    %v1837 = vunpack.c.h.b16 %v1272
    %v1838 = vunpack.c.l.b16 %v1273
    %v1839 = vunpack.c.h.b16 %v1273
    %v1840 = vunpack.c.l.b16 %v1274
    %v1841 = vunpack.c.h.b16 %v1274
    %v1842 = vunpack.c.l.b16 %v1275
    %v1843 = vunpack.c.h.b16 %v1275
    %v1844 = vunpack.c.l.b16 %v1276
    %v1845 = vunpack.c.h.b16 %v1276
    %v1846 = vunpack.c.l.b16 %v1277
    %v1847 = vunpack.c.h.b16 %v1277
    %v1848 = vunpack.c.l.b16 %v1278
    %v1849 = vunpack.c.h.b16 %v1278
    %v1850 = vunpack.c.l.b16 %v1279
    %v1851 = vunpack.c.h.b16 %v1279
    %v1852 = vunpack.c.l.b16 %v1280
    %v1853 = vunpack.c.h.b16 %v1280
    %v1854 = vunpack.c.l.b16 %v1281
    %v1855 = vunpack.c.h.b16 %v1281
    %v1856 = vunpack.c.l.b16 %v1282
    %v1857 = vunpack.c.h.b16 %v1282
    %v1858 = vunpack.c.l.b16 %v1283
    %v1859 = vunpack.c.h.b16 %v1283
    %v1860 = vunpack.c.l.b16 %v1284
    %v1861 = vunpack.c.h.b16 %v1284
    %v1862 = vunpack.c.l.b16 %v1285
    %v1863 = vunpack.c.h.b16 %v1285
    %v1864 = vunpack.c.l.b16 %v1286
    %v1865 = vunpack.c.h.b16 %v1286
    %v1866 = vunpack.c.l.b16 %v1287
    %v1867 = vunpack.c.h.b16 %v1287
    %v1868 = vunpack.c.l.b16 %v1288
    %v1869 = vunpack.c.h.b16 %v1288
    %v1870 = vunpack.c.l.b16 %v1289
    %v1871 = vunpack.c.h.b16 %v1289
    %v1872 = vunpack.c.l.b16 %v1290
    %v1873 = vunpack.c.h.b16 %v1290
    %v1874 = vunpack.c.l.b16 %v1291
    %v1875 = vunpack.c.h.b16 %v1291
    %v1876 = vunpack.c.l.b16 %v1292
    %v1877 = vunpack.c.h.b16 %v1292
    %v1878 = vunpack.c.l.b16 %v1293
    %v1879 = vunpack.c.h.b16 %v1293
    %v1880 = vunpack.c.l.b16 %v1294
    %v1881 = vunpack.c.h.b16 %v1294
    %v1882 = vunpack.c.l.b16 %v1295
    %v1883 = vunpack.c.h.b16 %v1295
    %v1884 = vunpack.c.l.b16 %v1296
    %v1885 = vunpack.c.h.b16 %v1296
    %v1886 = vunpack.c.l.b16 %v1297
    %v1887 = vunpack.c.h.b16 %v1297
    %v1888 = vunpack.c.l.b16 %v1298
    %v1889 = vunpack.c.h.b16 %v1298
    %v1890 = vunpack.c.l.b16 %v1299
    %v1891 = vunpack.c.h.b16 %v1299
    %v1892 = vunpack.c.l.b16 %v1300
    %v1893 = vunpack.c.h.b16 %v1300
    %v1894 = vunpack.c.l.b16 %v1301
    %v1895 = vunpack.c.h.b16 %v1301
    %v1896 = vunpack.c.l.b16 %v1302
    %v1897 = vunpack.c.h.b16 %v1302
    %v1898 = vunpack.c.l.b16 %v1303
    %v1899 = vunpack.c.h.b16 %v1303
    %v1900 = vunpack.c.l.b16 %v1304
    %v1901 = vunpack.c.h.b16 %v1304
    %v1902 = vunpack.c.l.b16 %v1305
    %v1903 = vunpack.c.h.b16 %v1305
    %v1904 = vunpack.c.l.b16 %v1306
    %v1905 = vunpack.c.h.b16 %v1306
    %v1906 = vunpack.c.l.b16 %v1307
    %v1907 = vunpack.c.h.b16 %v1307
    %v1908 = vunpack.c.l.b16 %v1308
    %v1909 = vunpack.c.h.b16 %v1308
    %v1910 = vunpack.c.l.b16 %v1309
    %v1911 = vunpack.c.h.b16 %v1309
    %v1912 = vunpack.c.l.b16 %v1310
    %v1913 = vunpack.c.h.b16 %v1310
    %v1914 = vunpack.c.l.b16 %v1311
    %v1915 = vunpack.c.h.b16 %v1311
    %v1916 = vunpack.c.l.b16 %v1312
    %v1917 = vunpack.c.h.b16 %v1312
    %v1918 = vunpack.c.l.b16 %v1313
    %v1919 = vunpack.c.h.b16 %v1313
    %v1920 = vunpack.c.l.b16 %v1314
    %v1921 = vunpack.c.h.b16 %v1314
    %v1922 = vunpack.c.l.b16 %v1315
    %v1923 = vunpack.c.h.b16 %v1315
    %v1924 = vunpack.c.l.b16 %v1316
    %v1925 = vunpack.c.h.b16 %v1316
    %v1926 = vunpack.c.l.b16 %v1317
    %v1927 = vunpack.c.h.b16 %v1317
    %v1928 = vunpack.c.l.b16 %v1318
    %v1929 = vunpack.c.h.b16 %v1318
    %v1930 = vunpack.c.l.b16 %v1319
    %v1931 = vunpack.c.h.b16 %v1319
    %v1932 = vunpack.c.l.b16 %v1320
    %v1933 = vunpack.c.h.b16 %v1320
    %v1934 = vunpack.c.l.b16 %v1321
    %v1935 = vunpack.c.h.b16 %v1321
    %v1936 = vunpack.c.l.b16 %v1322
    %v1937 = vunpack.c.h.b16 %v1322
    %v1938 = vunpack.c.l.b16 %v1323
    %v1939 = vunpack.c.h.b16 %v1323
    %v1940 = vunpack.c.l.b16 %v1324
    %v1941 = vunpack.c.h.b16 %v1324
    %v1942 = vunpack.c.l.b16 %v1325
    %v1943 = vunpack.c.h.b16 %v1325
    %v1944 = vunpack.c.l.b16 %v1326
    %v1945 = vunpack.c.h.b16 %v1326
    %v1946 = vunpack.c.l.b16 %v1327
    %v1947 = vunpack.c.h.b16 %v1327
    %v1948 = vunpack.c.l.b16 %v1328
    %v1949 = vunpack.c.h.b16 %v1328
    %v1950 = vunpack.c.l.b16 %v1329
    %v1951 = vunpack.c.h.b16 %v1329
    %v1952 = vunpack.c.l.b16 %v1330
    %v1953 = vunpack.c.h.b16 %v1330
    %v1954 = vunpack.c.l.b16 %v1331
    %v1955 = vunpack.c.h.b16 %v1331
    %v1956 = vunpack.c.l.b16 %v1332
    %v1957 = vunpack.c.h.b16 %v1332
    %v1958 = vunpack.c.l.b16 %v1333
    %v1959 = vunpack.c.h.b16 %v1333
    %v1960 = vunpack.c.l.b16 %v1334
    %v1961 = vunpack.c.h.b16 %v1334
    %v1962 = vunpack.c.l.b16 %v1335
    %v1963 = vunpack.c.h.b16 %v1335
    %v1964 = vunpack.c.l.b16 %v1336
    %v1965 = vunpack.c.h.b16 %v1336
    %v1966 = vunpack.c.l.b16 %v1337
    %v1967 = vunpack.c.h.b16 %v1337
    %v1968 = vunpack.c.l.b16 %v1338
    %v1969 = vunpack.c.h.b16 %v1338
    %v1970 = vunpack.c.l.b16 %v1339
    %v1971 = vunpack.c.h.b16 %v1339
    %v1972 = vunpack.c.l.b16 %v1340
    %v1973 = vunpack.c.h.b16 %v1340
    %v1974 = vunpack.c.l.b16 %v1341
    %v1975 = vunpack.c.h.b16 %v1341
    %v1976 = vunpack.c.l.b16 %v1342
    %v1977 = vunpack.c.h.b16 %v1342
    %v1978 = vunpack.c.l.b16 %v1343
    %v1979 = vunpack.c.h.b16 %v1343
    %v1980 = vunpack.c.l.b16 %v1344
    %v1981 = vunpack.c.h.b16 %v1344
    %v1982 = vunpack.c.l.b16 %v1345
    %v1983 = vunpack.c.h.b16 %v1345
    %v1984 = vunpack.c.l.b16 %v1346
    %v1985 = vunpack.c.h.b16 %v1346
    %v1986 = vunpack.c.l.b16 %v1347
    %v1987 = vunpack.c.h.b16 %v1347
    %v1988 = vunpack.c.l.b16 %v1348
    %v1989 = vunpack.c.h.b16 %v1348
    %v1990 = vunpack.c.l.b16 %v1349
    %v1991 = vunpack.c.h.b16 %v1349
    %v1992 = vunpack.c.l.b16 %v1350
    %v1993 = vunpack.c.h.b16 %v1350
    %v1994 = vunpack.c.l.b16 %v1351
    %v1995 = vunpack.c.h.b16 %v1351
    %v1996 = vunpack.c.l.b16 %v1352
    %v1997 = vunpack.c.h.b16 %v1352
    %v1998 = vunpack.c.l.b16 %v1353
    %v1999 = vunpack.c.h.b16 %v1353
    %v2000 = vunpack.c.l.b16 %v1354
    %v2001 = vunpack.c.h.b16 %v1354
    %v2002 = vunpack.c.l.b16 %v1355
    %v2003 = vunpack.c.h.b16 %v1355
    %v2004 = vunpack.c.l.b16 %v1356
    %v2005 = vunpack.c.h.b16 %v1356
    %v2006 = vunpack.c.l.b16 %v1357
    %v2007 = vunpack.c.h.b16 %v1357
    %v2008 = vunpack.c.l.b16 %v1358
    %v2009 = vunpack.c.h.b16 %v1358
    %v2010 = vunpack.c.l.b16 %v1359
    %v2011 = vunpack.c.h.b16 %v1359
    %v2012 = vunpack.c.l.b16 %v1360
    %v2013 = vunpack.c.h.b16 %v1360
    %v2014 = vunpack.c.l.b16 %v1361
    %v2015 = vunpack.c.h.b16 %v1361
    %v2016 = vunpack.c.l.b16 %v1362
    %v2017 = vunpack.c.h.b16 %v1362
    %v2018 = vunpack.c.l.b16 %v1363
    %v2019 = vunpack.c.h.b16 %v1363
    %v2020 = vunpack.c.l.b16 %v1364
    %v2021 = vunpack.c.h.b16 %v1364
    %v2022 = vunpack.c.l.b16 %v1365
    %v2023 = vunpack.c.h.b16 %v1365
    %v2024 = vunpack.c.l.b16 %v1366
    %v2025 = vunpack.c.h.b16 %v1366
    %v2026 = vunpack.c.l.b16 %v1367
    %v2027 = vunpack.c.h.b16 %v1367
    %v2028 = vunpack.c.l.b16 %v1368
    %v2029 = vunpack.c.h.b16 %v1368
    %v2030 = vunpack.c.l.b16 %v1369
    %v2031 = vunpack.c.h.b16 %v1369
    %v2032 = vunpack.c.l.b16 %v1370
    %v2033 = vunpack.c.h.b16 %v1370
    %v2034 = vunpack.c.l.b16 %v1371
    %v2035 = vunpack.c.h.b16 %v1371
    %v2036 = vunpack.c.l.b16 %v1372
    %v2037 = vunpack.c.h.b16 %v1372
    %v2038 = vunpack.c.l.b16 %v1373
    %v2039 = vunpack.c.h.b16 %v1373
    %v2040 = vunpack.c.l.b16 %v1374
    %v2041 = vunpack.c.h.b16 %v1374
    %v2042 = vunpack.c.l.b16 %v1375
    %v2043 = vunpack.c.h.b16 %v1375
    %v2044 = vunpack.c.l.b16 %v1376
    %v2045 = vunpack.c.h.b16 %v1376
    %v2046 = vunpack.c.l.b16 %v1377
    %v2047 = vunpack.c.h.b16 %v1377
    %v2048 = vunpack.c.l.b16 %v1378
    %v2049 = vunpack.c.h.b16 %v1378
    %v2050 = vunpack.c.l.b16 %v1379
    %v2051 = vunpack.c.h.b16 %v1379
    %v2052 = vunpack.c.l.b16 %v1380
    %v2053 = vunpack.c.h.b16 %v1380
    %v2054 = vunpack.c.l.b16 %v1381
    %v2055 = vunpack.c.h.b16 %v1381
    %v2056 = vunpack.c.l.b16 %v1382
    %v2057 = vunpack.c.h.b16 %v1382
    %v2058 = vunpack.c.l.b16 %v1383
    %v2059 = vunpack.c.h.b16 %v1383
    %v2060 = vunpack.c.l.b16 %v1384
    %v2061 = vunpack.c.h.b16 %v1384
    %v2062 = vunpack.c.l.b16 %v1385
    %v2063 = vunpack.c.h.b16 %v1385
    %v2064 = vunpack.c.l.b16 %v1386
    %v2065 = vunpack.c.h.b16 %v1386
    %v2066 = vunpack.c.l.b16 %v1387
    %v2067 = vunpack.c.h.b16 %v1387
    %v2068 = vunpack.c.l.b16 %v1388
    %v2069 = vunpack.c.h.b16 %v1388
    %v2070 = vunpack.c.l.b16 %v1389
    %v2071 = vunpack.c.h.b16 %v1389
    %v2072 = vunpack.c.l.b16 %v1390
    %v2073 = vunpack.c.h.b16 %v1390
    %v2074 = vunpack.c.l.b16 %v1391
    %v2075 = vunpack.c.h.b16 %v1391
    %v2076 = vunpack.c.l.b16 %v1392
    %v2077 = vunpack.c.h.b16 %v1392
    %v2078 = vunpack.c.l.b16 %v1393
    %v2079 = vunpack.c.h.b16 %v1393
    %v2080 = vunpack.c.l.b16 %v1394
    %v2081 = vunpack.c.h.b16 %v1394
    %v2082 = vunpack.c.l.b16 %v1395
    %v2083 = vunpack.c.h.b16 %v1395
    %v2084 = vunpack.c.l.b16 %v1396
    %v2085 = vunpack.c.h.b16 %v1396
    %v2086 = vunpack.c.l.b16 %v1397
    %v2087 = vunpack.c.h.b16 %v1397
    %v2088 = vunpack.c.l.b16 %v1398
    %v2089 = vunpack.c.h.b16 %v1398
    %v2090 = vunpack.c.l.b16 %v1399
    %v2091 = vunpack.c.h.b16 %v1399
    %v2092 = vunpack.c.l.b16 %v1400
    %v2093 = vunpack.c.h.b16 %v1400
    %v2094 = vunpack.c.l.b16 %v1401
    %v2095 = vunpack.c.h.b16 %v1401
    %v2096 = vunpack.c.l.b16 %v1402
    %v2097 = vunpack.c.h.b16 %v1402
    %v2098 = vunpack.c.l.b16 %v1403
    %v2099 = vunpack.c.h.b16 %v1403
    %v2100 = vunpack.c.l.b16 %v1404
    %v2101 = vunpack.c.h.b16 %v1404
    %v2102 = vunpack.c.l.b16 %v1405
    %v2103 = vunpack.c.h.b16 %v1405
    %v2104 = vunpack.c.l.b16 %v1406
    %v2105 = vunpack.c.h.b16 %v1406
    %v2106 = vunpack.c.l.b16 %v1407
    %v2107 = vunpack.c.h.b16 %v1407
    %v2108 = vunpack.c.l.b16 %v1408
    %v2109 = vunpack.c.h.b16 %v1408
    %v2110 = vunpack.c.l.b16 %v1409
    %v2111 = vunpack.c.h.b16 %v1409
    %v2112 = vunpack.c.l.b16 %v1410
    %v2113 = vunpack.c.h.b16 %v1410
    %v2114 = vunpack.c.l.b16 %v1411
    %v2115 = vunpack.c.h.b16 %v1411
    %v2116 = vunpack.c.l.b16 %v1412
    %v2117 = vunpack.c.h.b16 %v1412
    %v2118 = vunpack.c.l.b16 %v1413
    %v2119 = vunpack.c.h.b16 %v1413
    %v2120 = vunpack.c.l.b16 %v1414
    %v2121 = vunpack.c.h.b16 %v1414
    %v2122 = vunpack.c.l.b16 %v1415
    %v2123 = vunpack.c.h.b16 %v1415
    %v2124 = vunpack.c.l.b16 %v1416
    %v2125 = vunpack.c.h.b16 %v1416
    %v2126 = vunpack.c.l.b16 %v1417
    %v2127 = vunpack.c.h.b16 %v1417
    %v2128 = vunpack.c.l.b16 %v1418
    %v2129 = vunpack.c.h.b16 %v1418
    %v2130 = vunpack.c.l.b16 %v1419
    %v2131 = vunpack.c.h.b16 %v1419
    %v2132 = vunpack.c.l.b16 %v1420
    %v2133 = vunpack.c.h.b16 %v1420
    %v2134 = vunpack.c.l.b16 %v1421
    %v2135 = vunpack.c.h.b16 %v1421
    %v2136 = vunpack.c.l.b16 %v1422
    %v2137 = vunpack.c.h.b16 %v1422
    %v2138 = vunpack.c.l.b16 %v1423
    %v2139 = vunpack.c.h.b16 %v1423
    %v2140 = vunpack.c.l.b16 %v1424
    %v2141 = vunpack.c.h.b16 %v1424
    %v2142 = vunpack.c.l.b16 %v1425
    %v2143 = vunpack.c.h.b16 %v1425
    %v2144 = vunpack.c.l.b16 %v1426
    %v2145 = vunpack.c.h.b16 %v1426
    %v2146 = vunpack.c.l.b16 %v1427
    %v2147 = vunpack.c.h.b16 %v1427
    %v2148 = vunpack.c.l.b16 %v1428
    %v2149 = vunpack.c.h.b16 %v1428
    %v2150 = vunpack.c.l.b16 %v1429
    %v2151 = vunpack.c.h.b16 %v1429
    %v2152 = vunpack.c.l.b16 %v1430
    %v2153 = vunpack.c.h.b16 %v1430
    %v2154 = vunpack.c.l.b16 %v1431
    %v2155 = vunpack.c.h.b16 %v1431
    %v2156 = vunpack.c.l.b16 %v1432
    %v2157 = vunpack.c.h.b16 %v1432
    %v2158 = vunpack.c.l.b16 %v1433
    %v2159 = vunpack.c.h.b16 %v1433
    %v2160 = vunpack.c.l.b16 %v1434
    %v2161 = vunpack.c.h.b16 %v1434
    %v2162 = vunpack.c.l.b16 %v1435
    %v2163 = vunpack.c.h.b16 %v1435
    %v2164 = vunpack.c.l.b16 %v1436
    %v2165 = vunpack.c.h.b16 %v1436
    %v2166 = vunpack.c.l.b16 %v1437
    %v2167 = vunpack.c.h.b16 %v1437
    %v2168 = vunpack.c.l.b16 %v1438
    %v2169 = vunpack.c.h.b16 %v1438
    %v2170 = vunpack.c.l.b16 %v1439
    %v2171 = vunpack.c.h.b16 %v1439
    %v2172 = vunpack.c.l.b16 %v1440
    %v2173 = vunpack.c.h.b16 %v1440
    %v2174 = vunpack.c.l.b16 %v1441
    %v2175 = vunpack.c.h.b16 %v1441
    %v2176 = vunpack.c.l.b16 %v1442
    %v2177 = vunpack.c.h.b16 %v1442
    %v2178 = vunpack.c.l.b16 %v1443
    %v2179 = vunpack.c.h.b16 %v1443
    %v2180 = vunpack.c.l.b16 %v1444
    %v2181 = vunpack.c.h.b16 %v1444
    %v2182 = vunpack.c.l.b16 %v1445
    %v2183 = vunpack.c.h.b16 %v1445
    %v2184 = vunpack.c.l.b16 %v1446
    %v2185 = vunpack.c.h.b16 %v1446
    %v2186 = vunpack.c.l.b16 %v1447
    %v2187 = vunpack.c.h.b16 %v1447
    %v2188 = vunpack.c.l.b16 %v1448
    %v2189 = vunpack.c.h.b16 %v1448
    %v2190 = vunpack.c.l.b16 %v1449
    %v2191 = vunpack.c.h.b16 %v1449
    %v2192 = vunpack.c.l.b16 %v1450
    %v2193 = vunpack.c.h.b16 %v1450
    %v2194 = vunpack.c.l.b16 %v1451
    %v2195 = vunpack.c.h.b16 %v1451
    %v2196 = vunpack.c.l.b16 %v1452
    %v2197 = vunpack.c.h.b16 %v1452
    %v2198 = vunpack.c.l.b16 %v1453
    %v2199 = vunpack.c.h.b16 %v1453
    %v2200 = vunpack.c.l.b16 %v1454
    %v2201 = vunpack.c.h.b16 %v1454
    %v2202 = vunpack.c.l.b16 %v1455
    %v2203 = vunpack.c.h.b16 %v1455
    %v2204 = vunpack.c.l.b16 %v1456
    %v2205 = vunpack.c.h.b16 %v1456
    %v2206 = vunpack.c.l.b16 %v1457
    %v2207 = vunpack.c.h.b16 %v1457
    %v2208 = vunpack.c.l.b16 %v1458
    %v2209 = vunpack.c.h.b16 %v1458
    %v2210 = vunpack.c.l.b16 %v1459
    %v2211 = vunpack.c.h.b16 %v1459
    %v2212 = vunpack.c.l.b16 %v1460
    %v2213 = vunpack.c.h.b16 %v1460
    %v2214 = vunpack.c.l.b16 %v1461
    %v2215 = vunpack.c.h.b16 %v1461
    %v2216 = vunpack.c.l.b16 %v1462
    %v2217 = vunpack.c.h.b16 %v1462
    %v2218 = vunpack.c.l.b16 %v1463
    %v2219 = vunpack.c.h.b16 %v1463
    %v2220 = vunpack.c.l.b16 %v1464
    %v2221 = vunpack.c.h.b16 %v1464
    %v2222 = vunpack.c.l.b16 %v1465
    %v2223 = vunpack.c.h.b16 %v1465
    %v2224 = vunpack.c.l.b16 %v1466
    %v2225 = vunpack.c.h.b16 %v1466
    %v2226 = vunpack.c.l.b16 %v1467
    %v2227 = vunpack.c.h.b16 %v1467
    %v2228 = vunpack.c.l.b16 %v1468
    %v2229 = vunpack.c.h.b16 %v1468
    %v2230 = vunpack.c.l.b16 %v1469
    %v2231 = vunpack.c.h.b16 %v1469
    %v2232 = vunpack.c.l.b16 %v1470
    %v2233 = vunpack.c.h.b16 %v1470
    %v2234 = vunpack.c.l.b16 %v1471
    %v2235 = vunpack.c.h.b16 %v1471
    %v2236 = vunpack.c.l.b16 %v1472
    %v2237 = vunpack.c.h.b16 %v1472
    %v2238 = vunpack.c.l.b16 %v1473
    %v2239 = vunpack.c.h.b16 %v1473
    %v2240 = vunpack.c.l.b16 %v1474
    %v2241 = vunpack.c.h.b16 %v1474
    %v2242 = vunpack.c.l.b16 %v1475
    %v2243 = vunpack.c.h.b16 %v1475
    %v2244 = vpack.c.b16 %v1740, %v1732
    %v2245 = vpack.c.b16 %v1741, %v1733
    %v2246 = vpack.c.b16 %v1742, %v1734
    %v2247 = vpack.c.b16 %v1743, %v1735
    %v2248 = vpack.c.b16 %v1744, %v1736
    %v2249 = vpack.c.b16 %v1745, %v1737
    %v2250 = vpack.c.b16 %v1746, %v1738
    %v2251 = vpack.c.b16 %v1747, %v1739
    %v2252 = vpack.c.b16 %v1756, %v1748
    %v2253 = vpack.c.b16 %v1757, %v1749
    %v2254 = vpack.c.b16 %v1758, %v1750
    %v2255 = vpack.c.b16 %v1759, %v1751
    %v2256 = vpack.c.b16 %v1760, %v1752
    %v2257 = vpack.c.b16 %v1761, %v1753
    %v2258 = vpack.c.b16 %v1762, %v1754
    %v2259 = vpack.c.b16 %v1763, %v1755
    %v2260 = vpack.c.b16 %v1772, %v1764
    %v2261 = vpack.c.b16 %v1773, %v1765
    %v2262 = vpack.c.b16 %v1774, %v1766
    %v2263 = vpack.c.b16 %v1775, %v1767
    %v2264 = vpack.c.b16 %v1776, %v1768
    %v2265 = vpack.c.b16 %v1777, %v1769
    %v2266 = vpack.c.b16 %v1778, %v1770
    %v2267 = vpack.c.b16 %v1779, %v1771
    %v2268 = vpack.c.b16 %v1788, %v1780
    %v2269 = vpack.c.b16 %v1789, %v1781
    %v2270 = vpack.c.b16 %v1790, %v1782
    %v2271 = vpack.c.b16 %v1791, %v1783
    %v2272 = vpack.c.b16 %v1792, %v1784
    %v2273 = vpack.c.b16 %v1793, %v1785
    %v2274 = vpack.c.b16 %v1794, %v1786
    %v2275 = vpack.c.b16 %v1795, %v1787
    %v2276 = vpack.c.b16 %v1804, %v1796
    %v2277 = vpack.c.b16 %v1805, %v1797
    %v2278 = vpack.c.b16 %v1806, %v1798
    %v2279 = vpack.c.b16 %v1807, %v1799
    %v2280 = vpack.c.b16 %v1808, %v1800
    %v2281 = vpack.c.b16 %v1809, %v1801
    %v2282 = vpack.c.b16 %v1810, %v1802
    %v2283 = vpack.c.b16 %v1811, %v1803
    %v2284 = vpack.c.b16 %v1820, %v1812
    %v2285 = vpack.c.b16 %v1821, %v1813
    %v2286 = vpack.c.b16 %v1822, %v1814
    %v2287 = vpack.c.b16 %v1823, %v1815
    %v2288 = vpack.c.b16 %v1824, %v1816
    %v2289 = vpack.c.b16 %v1825, %v1817
    %v2290 = vpack.c.b16 %v1826, %v1818
    %v2291 = vpack.c.b16 %v1827, %v1819
    %v2292 = vpack.c.b16 %v1836, %v1828
    %v2293 = vpack.c.b16 %v1837, %v1829
    %v2294 = vpack.c.b16 %v1838, %v1830
    %v2295 = vpack.c.b16 %v1839, %v1831
    %v2296 = vpack.c.b16 %v1840, %v1832
    %v2297 = vpack.c.b16 %v1841, %v1833
    %v2298 = vpack.c.b16 %v1842, %v1834
    %v2299 = vpack.c.b16 %v1843, %v1835
    %v2300 = vpack.c.b16 %v1852, %v1844
    %v2301 = vpack.c.b16 %v1853, %v1845
    %v2302 = vpack.c.b16 %v1854, %v1846
    %v2303 = vpack.c.b16 %v1855, %v1847
    %v2304 = vpack.c.b16 %v1856, %v1848
    %v2305 = vpack.c.b16 %v1857, %v1849
    %v2306 = vpack.c.b16 %v1858, %v1850
    %v2307 = vpack.c.b16 %v1859, %v1851
    %v2308 = vpack.c.b16 %v1868, %v1860
    %v2309 = vpack.c.b16 %v1869, %v1861
    %v2310 = vpack.c.b16 %v1870, %v1862
    %v2311 = vpack.c.b16 %v1871, %v1863
    %v2312 = vpack.c.b16 %v1872, %v1864
    %v2313 = vpack.c.b16 %v1873, %v1865
    %v2314 = vpack.c.b16 %v1874, %v1866
    %v2315 = vpack.c.b16 %v1875, %v1867
    %v2316 = vpack.c.b16 %v1884, %v1876
    %v2317 = vpack.c.b16 %v1885, %v1877
    %v2318 = vpack.c.b16 %v1886, %v1878
    %v2319 = vpack.c.b16 %v1887, %v1879
    %v2320 = vpack.c.b16 %v1888, %v1880
    %v2321 = vpack.c.b16 %v1889, %v1881
    %v2322 = vpack.c.b16 %v1890, %v1882
    %v2323 = vpack.c.b16 %v1891, %v1883
    %v2324 = vpack.c.b16 %v1900, %v1892
    %v2325 = vpack.c.b16 %v1901, %v1893
    %v2326 = vpack.c.b16 %v1902, %v1894
    %v2327 = vpack.c.b16 %v1903, %v1895
    %v2328 = vpack.c.b16 %v1904, %v1896
    %v2329 = vpack.c.b16 %v1905, %v1897
    %v2330 = vpack.c.b16 %v1906, %v1898
    %v2331 = vpack.c.b16 %v1907, %v1899
    %v2332 = vpack.c.b16 %v1916, %v1908
    %v2333 = vpack.c.b16 %v1917, %v1909
    %v2334 = vpack.c.b16 %v1918, %v1910
    %v2335 = vpack.c.b16 %v1919, %v1911
    %v2336 = vpack.c.b16 %v1920, %v1912
    %v2337 = vpack.c.b16 %v1921, %v1913
    %v2338 = vpack.c.b16 %v1922, %v1914
    %v2339 = vpack.c.b16 %v1923, %v1915
    %v2340 = vpack.c.b16 %v1932, %v1924
    %v2341 = vpack.c.b16 %v1933, %v1925
    %v2342 = vpack.c.b16 %v1934, %v1926
    %v2343 = vpack.c.b16 %v1935, %v1927
    %v2344 = vpack.c.b16 %v1936, %v1928
    %v2345 = vpack.c.b16 %v1937, %v1929
    %v2346 = vpack.c.b16 %v1938, %v1930
    %v2347 = vpack.c.b16 %v1939, %v1931
    %v2348 = vpack.c.b16 %v1948, %v1940
    %v2349 = vpack.c.b16 %v1949, %v1941
    %v2350 = vpack.c.b16 %v1950, %v1942
    %v2351 = vpack.c.b16 %v1951, %v1943
    %v2352 = vpack.c.b16 %v1952, %v1944
    %v2353 = vpack.c.b16 %v1953, %v1945
    %v2354 = vpack.c.b16 %v1954, %v1946
    %v2355 = vpack.c.b16 %v1955, %v1947
    %v2356 = vpack.c.b16 %v1964, %v1956
    %v2357 = vpack.c.b16 %v1965, %v1957
    %v2358 = vpack.c.b16 %v1966, %v1958
    %v2359 = vpack.c.b16 %v1967, %v1959
    %v2360 = vpack.c.b16 %v1968, %v1960
    %v2361 = vpack.c.b16 %v1969, %v1961
    %v2362 = vpack.c.b16 %v1970, %v1962
    %v2363 = vpack.c.b16 %v1971, %v1963
    %v2364 = vpack.c.b16 %v1980, %v1972
    %v2365 = vpack.c.b16 %v1981, %v1973
    %v2366 = vpack.c.b16 %v1982, %v1974
    %v2367 = vpack.c.b16 %v1983, %v1975
    %v2368 = vpack.c.b16 %v1984, %v1976
    %v2369 = vpack.c.b16 %v1985, %v1977
    %v2370 = vpack.c.b16 %v1986, %v1978
    %v2371 = vpack.c.b16 %v1987, %v1979
    %v2372 = vpack.c.b16 %v1996, %v1988
    %v2373 = vpack.c.b16 %v1997, %v1989
    %v2374 = vpack.c.b16 %v1998, %v1990
    %v2375 = vpack.c.b16 %v1999, %v1991
    %v2376 = vpack.c.b16 %v2000, %v1992
    %v2377 = vpack.c.b16 %v2001, %v1993
    %v2378 = vpack.c.b16 %v2002, %v1994
    %v2379 = vpack.c.b16 %v2003, %v1995
    %v2380 = vpack.c.b16 %v2012, %v2004
    %v2381 = vpack.c.b16 %v2013, %v2005
    %v2382 = vpack.c.b16 %v2014, %v2006
    %v2383 = vpack.c.b16 %v2015, %v2007
    %v2384 = vpack.c.b16 %v2016, %v2008
    %v2385 = vpack.c.b16 %v2017, %v2009
    %v2386 = vpack.c.b16 %v2018, %v2010
    %v2387 = vpack.c.b16 %v2019, %v2011
    %v2388 = vpack.c.b16 %v2028, %v2020
    %v2389 = vpack.c.b16 %v2029, %v2021
    %v2390 = vpack.c.b16 %v2030, %v2022
    %v2391 = vpack.c.b16 %v2031, %v2023
    %v2392 = vpack.c.b16 %v2032, %v2024
    %v2393 = vpack.c.b16 %v2033, %v2025
    %v2394 = vpack.c.b16 %v2034, %v2026
    %v2395 = vpack.c.b16 %v2035, %v2027
    %v2396 = vpack.c.b16 %v2044, %v2036
    %v2397 = vpack.c.b16 %v2045, %v2037
    %v2398 = vpack.c.b16 %v2046, %v2038
    %v2399 = vpack.c.b16 %v2047, %v2039
    %v2400 = vpack.c.b16 %v2048, %v2040
    %v2401 = vpack.c.b16 %v2049, %v2041
    %v2402 = vpack.c.b16 %v2050, %v2042
    %v2403 = vpack.c.b16 %v2051, %v2043
    %v2404 = vpack.c.b16 %v2060, %v2052
    %v2405 = vpack.c.b16 %v2061, %v2053
    %v2406 = vpack.c.b16 %v2062, %v2054
    %v2407 = vpack.c.b16 %v2063, %v2055
    %v2408 = vpack.c.b16 %v2064, %v2056
    %v2409 = vpack.c.b16 %v2065, %v2057
    %v2410 = vpack.c.b16 %v2066, %v2058
    %v2411 = vpack.c.b16 %v2067, %v2059
    %v2412 = vpack.c.b16 %v2076, %v2068
    %v2413 = vpack.c.b16 %v2077, %v2069
    %v2414 = vpack.c.b16 %v2078, %v2070
    %v2415 = vpack.c.b16 %v2079, %v2071
    %v2416 = vpack.c.b16 %v2080, %v2072
    %v2417 = vpack.c.b16 %v2081, %v2073
    %v2418 = vpack.c.b16 %v2082, %v2074
    %v2419 = vpack.c.b16 %v2083, %v2075
    %v2420 = vpack.c.b16 %v2092, %v2084
    %v2421 = vpack.c.b16 %v2093, %v2085
    %v2422 = vpack.c.b16 %v2094, %v2086
    %v2423 = vpack.c.b16 %v2095, %v2087
    %v2424 = vpack.c.b16 %v2096, %v2088
    %v2425 = vpack.c.b16 %v2097, %v2089
    %v2426 = vpack.c.b16 %v2098, %v2090
    %v2427 = vpack.c.b16 %v2099, %v2091
    %v2428 = vpack.c.b16 %v2108, %v2100
    %v2429 = vpack.c.b16 %v2109, %v2101
    %v2430 = vpack.c.b16 %v2110, %v2102
    %v2431 = vpack.c.b16 %v2111, %v2103
    %v2432 = vpack.c.b16 %v2112, %v2104
    %v2433 = vpack.c.b16 %v2113, %v2105
    %v2434 = vpack.c.b16 %v2114, %v2106
    %v2435 = vpack.c.b16 %v2115, %v2107
    %v2436 = vpack.c.b16 %v2124, %v2116
    %v2437 = vpack.c.b16 %v2125, %v2117
    %v2438 = vpack.c.b16 %v2126, %v2118
    %v2439 = vpack.c.b16 %v2127, %v2119
    %v2440 = vpack.c.b16 %v2128, %v2120
    %v2441 = vpack.c.b16 %v2129, %v2121
    %v2442 = vpack.c.b16 %v2130, %v2122
    %v2443 = vpack.c.b16 %v2131, %v2123
    %v2444 = vpack.c.b16 %v2140, %v2132
    %v2445 = vpack.c.b16 %v2141, %v2133
    %v2446 = vpack.c.b16 %v2142, %v2134
    %v2447 = vpack.c.b16 %v2143, %v2135
    %v2448 = vpack.c.b16 %v2144, %v2136
    %v2449 = vpack.c.b16 %v2145, %v2137
    %v2450 = vpack.c.b16 %v2146, %v2138
    %v2451 = vpack.c.b16 %v2147, %v2139
    %v2452 = vpack.c.b16 %v2156, %v2148
    %v2453 = vpack.c.b16 %v2157, %v2149
    %v2454 = vpack.c.b16 %v2158, %v2150
    %v2455 = vpack.c.b16 %v2159, %v2151
    %v2456 = vpack.c.b16 %v2160, %v2152
    %v2457 = vpack.c.b16 %v2161, %v2153
    %v2458 = vpack.c.b16 %v2162, %v2154
    %v2459 = vpack.c.b16 %v2163, %v2155
    %v2460 = vpack.c.b16 %v2172, %v2164
    %v2461 = vpack.c.b16 %v2173, %v2165
    %v2462 = vpack.c.b16 %v2174, %v2166
    %v2463 = vpack.c.b16 %v2175, %v2167
    %v2464 = vpack.c.b16 %v2176, %v2168
    %v2465 = vpack.c.b16 %v2177, %v2169
    %v2466 = vpack.c.b16 %v2178, %v2170
    %v2467 = vpack.c.b16 %v2179, %v2171
    %v2468 = vpack.c.b16 %v2188, %v2180
    %v2469 = vpack.c.b16 %v2189, %v2181
    %v2470 = vpack.c.b16 %v2190, %v2182
    %v2471 = vpack.c.b16 %v2191, %v2183
    %v2472 = vpack.c.b16 %v2192, %v2184
    %v2473 = vpack.c.b16 %v2193, %v2185
    %v2474 = vpack.c.b16 %v2194, %v2186
    %v2475 = vpack.c.b16 %v2195, %v2187
    %v2476 = vpack.c.b16 %v2204, %v2196
    %v2477 = vpack.c.b16 %v2205, %v2197
    %v2478 = vpack.c.b16 %v2206, %v2198
    %v2479 = vpack.c.b16 %v2207, %v2199
    %v2480 = vpack.c.b16 %v2208, %v2200
    %v2481 = vpack.c.b16 %v2209, %v2201
    %v2482 = vpack.c.b16 %v2210, %v2202
    %v2483 = vpack.c.b16 %v2211, %v2203
    %v2484 = vpack.c.b16 %v2220, %v2212
    %v2485 = vpack.c.b16 %v2221, %v2213
    %v2486 = vpack.c.b16 %v2222, %v2214
    %v2487 = vpack.c.b16 %v2223, %v2215
    %v2488 = vpack.c.b16 %v2224, %v2216
    %v2489 = vpack.c.b16 %v2225, %v2217
    %v2490 = vpack.c.b16 %v2226, %v2218
    %v2491 = vpack.c.b16 %v2227, %v2219
    %v2492 = vpack.c.b16 %v2236, %v2228
    %v2493 = vpack.c.b16 %v2237, %v2229
    %v2494 = vpack.c.b16 %v2238, %v2230
    %v2495 = vpack.c.b16 %v2239, %v2231
    %v2496 = vpack.c.b16 %v2240, %v2232
    %v2497 = vpack.c.b16 %v2241, %v2233
    %v2498 = vpack.c.b16 %v2242, %v2234
    %v2499 = vpack.c.b16 %v2243, %v2235
    %2756 = vmatprep.subr.bf16.mxu0 %v2245
    %2757 = vmatpush1.bf16.msra.mxu0 %v2244
    %2758 = vmatprep.subr.bf16.mxu0 %v2253
    %2759 = vmatpush1.bf16.msra.mxu0 %v2252
    %2760 = vmatprep.subr.bf16.mxu0 %v2261
    %2761 = vmatpush1.bf16.msra.mxu0 %v2260
    %2762 = vmatprep.subr.bf16.mxu0 %v2269
    %2763 = vmatpush1.bf16.msra.mxu0 %v2268
    %2764 = vmatprep.subr.bf16.mxu0 %v2277
    %2765 = vmatpush1.bf16.msra.mxu0 %v2276
    %2766 = vmatprep.subr.bf16.mxu0 %v2285
    %2767 = vmatpush1.bf16.msra.mxu0 %v2284
    %2768 = vmatprep.subr.bf16.mxu0 %v2293
    %2769 = vmatpush1.bf16.msra.mxu0 %v2292
    %2770 = vmatprep.subr.bf16.mxu0 %v2301
    %2771 = vmatpush1.bf16.msra.mxu0 %v2300
    %2772 = vmatprep.subr.bf16.mxu0 %v2309
    %2773 = vmatpush1.bf16.msra.mxu0 %v2308
    %2774 = vmatprep.subr.bf16.mxu0 %v2317
    %2775 = vmatpush1.bf16.msra.mxu0 %v2316
    %2776 = vmatprep.subr.bf16.mxu0 %v2325
    %2777 = vmatpush1.bf16.msra.mxu0 %v2324
    %2778 = vmatprep.subr.bf16.mxu0 %v2333
    %2779 = vmatpush1.bf16.msra.mxu0 %v2332
    %2780 = vmatprep.subr.bf16.mxu0 %v2341
    %2781 = vmatpush1.bf16.msra.mxu0 %v2340
    %2782 = vmatprep.subr.bf16.mxu0 %v2349
    %2783 = vmatpush1.bf16.msra.mxu0 %v2348
    %2784 = vmatprep.subr.bf16.mxu0 %v2357
    %2785 = vmatpush1.bf16.msra.mxu0 %v2356
    %2786 = vmatprep.subr.bf16.mxu0 %v2365
    %2787 = vmatpush1.bf16.msra.mxu0 %v2364
    %2788 = vmatprep.mubr.bf16.mxu0 %v1189
    %2789 = vmatmul.mubr.bf16.gmra.mrb[0].mxu0 %v1188
    %v2790 = vpop.f32.mrb[0].mxu0
    %v2791 = vadd.f32 0.0, %v2790
    %v2792 = vpop.f32.mrb[0].mxu0
    %v2793 = vadd.f32 0.0, %v2792
    %v2794 = vpop.f32.mrb[0].mxu0
    %v2795 = vadd.f32 0.0, %v2794
    %v2796 = vpop.f32.mrb[0].mxu0
    %v2797 = vadd.f32 0.0, %v2796
    %2798 = vmatprep.mubr.bf16.mxu0 %v1193
    %2799 = vmatmul.mubr.bf16.gmra.mrb[0].mxu0 %v1192
    %v2800 = vpop.f32.mrb[0].mxu0
    %v2801 = vadd.f32 0.0, %v2800
    %v2802 = vpop.f32.mrb[0].mxu0
    %v2803 = vadd.f32 0.0, %v2802
    %v2804 = vpop.f32.mrb[0].mxu0
    %v2805 = vadd.f32 0.0, %v2804
    %v2806 = vpop.f32.mrb[0].mxu0
    %v2807 = vadd.f32 0.0, %v2806
    %2808 = vmatprep.mubr.bf16.mxu0 %v1197
    %2809 = vmatmul.mubr.bf16.gmra.mrb[0].mxu0 %v1196
    %v2810 = vpop.f32.mrb[0].mxu0
    %v2811 = vadd.f32 0.0, %v2810
    %v2812 = vpop.f32.mrb[0].mxu0
    %v2813 = vadd.f32 0.0, %v2812
    %v2814 = vpop.f32.mrb[0].mxu0
    %v2815 = vadd.f32 0.0, %v2814
    %v2816 = vpop.f32.mrb[0].mxu0
    %v2817 = vadd.f32 0.0, %v2816
    %2818 = vmatprep.mubr.bf16.mxu0 %v1201
    %2819 = vmatmul.mubr.bf16.gmra.mrb[0].mxu0 %v1200
    %v2820 = vpop.f32.mrb[0].mxu0
    %v2821 = vadd.f32 0.0, %v2820
    %v2822 = vpop.f32.mrb[0].mxu0
    %v2823 = vadd.f32 0.0, %v2822
    %v2824 = vpop.f32.mrb[0].mxu0
    %v2825 = vadd.f32 0.0, %v2824
    %v2826 = vpop.f32.mrb[0].mxu0
    %v2827 = vadd.f32 0.0, %v2826
    %2828 = vmatprep.mubr.bf16.mxu0 %v1205
    %2829 = vmatmul.mubr.bf16.gmra.mrb[0].mxu0 %v1204
    %v2830 = vpop.f32.mrb[0].mxu0
    %v2831 = vadd.f32 0.0, %v2830
    %v2832 = vpop.f32.mrb[0].mxu0
    %v2833 = vadd.f32 0.0, %v2832
    %v2834 = vpop.f32.mrb[0].mxu0
    %v2835 = vadd.f32 0.0, %v2834
    %v2836 = vpop.f32.mrb[0].mxu0
    %v2837 = vadd.f32 0.0, %v2836
    %2838 = vmatprep.mubr.bf16.mxu0 %v1209
    %2839 = vmatmul.mubr.bf16.gmra.mrb[0].mxu0 %v1208
    %v2840 = vpop.f32.mrb[0].mxu0
    %v2841 = vadd.f32 0.0, %v2840
    %v2842 = vpop.f32.mrb[0].mxu0
    %v2843 = vadd.f32 0.0, %v2842
    %v2844 = vpop.f32.mrb[0].mxu0
    %v2845 = vadd.f32 0.0, %v2844
    %v2846 = vpop.f32.mrb[0].mxu0
    %v2847 = vadd.f32 0.0, %v2846
    %2848 = vmatprep.mubr.bf16.mxu0 %v1213
    %2849 = vmatmul.mubr.bf16.gmra.mrb[0].mxu0 %v1212
    %v2850 = vpop.f32.mrb[0].mxu0
    %v2851 = vadd.f32 0.0, %v2850
    %v2852 = vpop.f32.mrb[0].mxu0
    %v2853 = vadd.f32 0.0, %v2852
    %v2854 = vpop.f32.mrb[0].mxu0
    %v2855 = vadd.f32 0.0, %v2854
    %v2856 = vpop.f32.mrb[0].mxu0
    %v2857 = vadd.f32 0.0, %v2856
    %2858 = vmatprep.mubr.bf16.mxu0 %v1217
    %2859 = vmatmul.mubr.bf16.gmra.mrb[0].mxu0 %v1216
    %v2860 = vpop.f32.mrb[0].mxu0
    %v2861 = vadd.f32 0.0, %v2860
    %v2862 = vpop.f32.mrb[0].mxu0
    %v2863 = vadd.f32 0.0, %v2862
    %v2864 = vpop.f32.mrb[0].mxu0
    %v2865 = vadd.f32 0.0, %v2864
    %v2866 = vpop.f32.mrb[0].mxu0
    %v2867 = vadd.f32 0.0, %v2866
    %2868 = vdwg.mxu0
    %2869 = vmatprep.subr.bf16.mxu0 %v2373
    %2870 = vmatpush1.bf16.msra.mxu0 %v2372
    %2871 = vmatprep.subr.bf16.mxu0 %v2381
    %2872 = vmatpush1.bf16.msra.mxu0 %v2380
    %2873 = vmatprep.subr.bf16.mxu0 %v2389
    %2874 = vmatpush1.bf16.msra.mxu0 %v2388
    %2875 = vmatprep.subr.bf16.mxu0 %v2397
    %2876 = vmatpush1.bf16.msra.mxu0 %v2396
    %2877 = vmatprep.subr.bf16.mxu0 %v2405
    %2878 = vmatpush1.bf16.msra.mxu0 %v2404
    %2879 = vmatprep.subr.bf16.mxu0 %v2413
    %2880 = vmatpush1.bf16.msra.mxu0 %v2412
    %2881 = vmatprep.subr.bf16.mxu0 %v2421
    %2882 = vmatpush1.bf16.msra.mxu0 %v2420
    %2883 = vmatprep.subr.bf16.mxu0 %v2429
    %2884 = vmatpush1.bf16.msra.mxu0 %v2428
    %2885 = vmatprep.subr.bf16.mxu0 %v2437
    %2886 = vmatpush1.bf16.msra.mxu0 %v2436
    %2887 = vmatprep.subr.bf16.mxu0 %v2445
    %2888 = vmatpush1.bf16.msra.mxu0 %v2444
    %2889 = vmatprep.subr.bf16.mxu0 %v2453
    %2890 = vmatpush1.bf16.msra.mxu0 %v2452
    %2891 = vmatprep.subr.bf16.mxu0 %v2461
    %2892 = vmatpush1.bf16.msra.mxu0 %v2460
    %2893 = vmatprep.subr.bf16.mxu0 %v2469
    %2894 = vmatpush1.bf16.msra.mxu0 %v2468
    %2895 = vmatprep.subr.bf16.mxu0 %v2477
    %2896 = vmatpush1.bf16.msra.mxu0 %v2476
    %2897 = vmatprep.subr.bf16.mxu0 %v2485
    %2898 = vmatpush1.bf16.msra.mxu0 %v2484
    %2899 = vmatprep.subr.bf16.mxu0 %v2493
    %2900 = vmatpush1.bf16.msra.mxu0 %v2492
    %2901 = vmatprep.mubr.bf16.mxu0 %v1191
    %2902 = vmatmul.mubr.bf16.gmra.mrb[0].mxu0 %v1190
    %v2903 = vpop.f32.mrb[0].mxu0
    %v2904 = vadd.f32 %v2791, %v2903
    %v2905 = vpop.f32.mrb[0].mxu0
    %v2906 = vadd.f32 %v2793, %v2905
    %v2907 = vpop.f32.mrb[0].mxu0
    %v2908 = vadd.f32 %v2795, %v2907
    %v2909 = vpop.f32.mrb[0].mxu0
    %v2910 = vadd.f32 %v2797, %v2909
    %2911 = vmatprep.mubr.bf16.mxu0 %v1195
    %2912 = vmatmul.mubr.bf16.gmra.mrb[0].mxu0 %v1194
    %v2913 = vpop.f32.mrb[0].mxu0
    %v2914 = vadd.f32 %v2801, %v2913
    %v2915 = vpop.f32.mrb[0].mxu0
    %v2916 = vadd.f32 %v2803, %v2915
    %v2917 = vpop.f32.mrb[0].mxu0
    %v2918 = vadd.f32 %v2805, %v2917
    %v2919 = vpop.f32.mrb[0].mxu0
    %v2920 = vadd.f32 %v2807, %v2919
    %2921 = vmatprep.mubr.bf16.mxu0 %v1199
    %2922 = vmatmul.mubr.bf16.gmra.mrb[0].mxu0 %v1198
    %v2923 = vpop.f32.mrb[0].mxu0
    %v2924 = vadd.f32 %v2811, %v2923
    %v2925 = vpop.f32.mrb[0].mxu0
    %v2926 = vadd.f32 %v2813, %v2925
    %v2927 = vpop.f32.mrb[0].mxu0
    %v2928 = vadd.f32 %v2815, %v2927
    %v2929 = vpop.f32.mrb[0].mxu0
    %v2930 = vadd.f32 %v2817, %v2929
    %2931 = vmatprep.mubr.bf16.mxu0 %v1203
    %2932 = vmatmul.mubr.bf16.gmra.mrb[0].mxu0 %v1202
    %v2933 = vpop.f32.mrb[0].mxu0
    %v2934 = vadd.f32 %v2821, %v2933
    %v2935 = vpop.f32.mrb[0].mxu0
    %v2936 = vadd.f32 %v2823, %v2935
    %v2937 = vpop.f32.mrb[0].mxu0
    %v2938 = vadd.f32 %v2825, %v2937
    %v2939 = vpop.f32.mrb[0].mxu0
    %v2940 = vadd.f32 %v2827, %v2939
    %2941 = vmatprep.mubr.bf16.mxu0 %v1207
    %2942 = vmatmul.mubr.bf16.gmra.mrb[0].mxu0 %v1206
    %v2943 = vpop.f32.mrb[0].mxu0
    %v2944 = vadd.f32 %v2831, %v2943
    %v2945 = vpop.f32.mrb[0].mxu0
    %v2946 = vadd.f32 %v2833, %v2945
    %v2947 = vpop.f32.mrb[0].mxu0
    %v2948 = vadd.f32 %v2835, %v2947
    %v2949 = vpop.f32.mrb[0].mxu0
    %v2950 = vadd.f32 %v2837, %v2949
    %2951 = vmatprep.mubr.bf16.mxu0 %v1211
    %2952 = vmatmul.mubr.bf16.gmra.mrb[0].mxu0 %v1210
    %v2953 = vpop.f32.mrb[0].mxu0
    %v2954 = vadd.f32 %v2841, %v2953
    %v2955 = vpop.f32.mrb[0].mxu0
    %v2956 = vadd.f32 %v2843, %v2955
    %v2957 = vpop.f32.mrb[0].mxu0
    %v2958 = vadd.f32 %v2845, %v2957
    %v2959 = vpop.f32.mrb[0].mxu0
    %v2960 = vadd.f32 %v2847, %v2959
    %2961 = vmatprep.mubr.bf16.mxu0 %v1215
    %2962 = vmatmul.mubr.bf16.gmra.mrb[0].mxu0 %v1214
    %v2963 = vpop.f32.mrb[0].mxu0
    %v2964 = vadd.f32 %v2851, %v2963
    %v2965 = vpop.f32.mrb[0].mxu0
    %v2966 = vadd.f32 %v2853, %v2965
    %v2967 = vpop.f32.mrb[0].mxu0
    %v2968 = vadd.f32 %v2855, %v2967
    %v2969 = vpop.f32.mrb[0].mxu0
    %v2970 = vadd.f32 %v2857, %v2969
    %2971 = vmatprep.mubr.bf16.mxu0 %v1219
    %2972 = vmatmul.mubr.bf16.gmra.mrb[0].mxu0 %v1218
    %v2973 = vpop.f32.mrb[0].mxu0
    %v2974 = vadd.f32 %v2861, %v2973
    %v2975 = vpop.f32.mrb[0].mxu0
    %v2976 = vadd.f32 %v2863, %v2975
    %v2977 = vpop.f32.mrb[0].mxu0
    %v2978 = vadd.f32 %v2865, %v2977
    %v2979 = vpop.f32.mrb[0].mxu0
    %v2980 = vadd.f32 %v2867, %v2979
    %2981 = vdwg.mxu0
    %2982 = vmatprep.subr.bf16.mxu0 %v2247
    %2983 = vmatpush1.bf16.msra.mxu0 %v2246
    %2984 = vmatprep.subr.bf16.mxu0 %v2255
    %2985 = vmatpush1.bf16.msra.mxu0 %v2254
    %2986 = vmatprep.subr.bf16.mxu0 %v2263
    %2987 = vmatpush1.bf16.msra.mxu0 %v2262
    %2988 = vmatprep.subr.bf16.mxu0 %v2271
    %2989 = vmatpush1.bf16.msra.mxu0 %v2270
    %2990 = vmatprep.subr.bf16.mxu0 %v2279
    %2991 = vmatpush1.bf16.msra.mxu0 %v2278
    %2992 = vmatprep.subr.bf16.mxu0 %v2287
    %2993 = vmatpush1.bf16.msra.mxu0 %v2286
    %2994 = vmatprep.subr.bf16.mxu0 %v2295
    %2995 = vmatpush1.bf16.msra.mxu0 %v2294
    %2996 = vmatprep.subr.bf16.mxu0 %v2303
    %2997 = vmatpush1.bf16.msra.mxu0 %v2302
    %2998 = vmatprep.subr.bf16.mxu0 %v2311
    %2999 = vmatpush1.bf16.msra.mxu0 %v2310
    %3000 = vmatprep.subr.bf16.mxu0 %v2319
    %3001 = vmatpush1.bf16.msra.mxu0 %v2318
    %3002 = vmatprep.subr.bf16.mxu0 %v2327
    %3003 = vmatpush1.bf16.msra.mxu0 %v2326
    %3004 = vmatprep.subr.bf16.mxu0 %v2335
    %3005 = vmatpush1.bf16.msra.mxu0 %v2334
    %3006 = vmatprep.subr.bf16.mxu0 %v2343
    %3007 = vmatpush1.bf16.msra.mxu0 %v2342
    %3008 = vmatprep.subr.bf16.mxu0 %v2351
    %3009 = vmatpush1.bf16.msra.mxu0 %v2350
    %3010 = vmatprep.subr.bf16.mxu0 %v2359
    %3011 = vmatpush1.bf16.msra.mxu0 %v2358
    %3012 = vmatprep.subr.bf16.mxu0 %v2367
    %3013 = vmatpush1.bf16.msra.mxu0 %v2366
    %3014 = vmatprep.mubr.bf16.mxu0 %v1189
    %3015 = vmatmul.mubr.bf16.gmra.mrb[0].mxu0 %v1188
    %v3016 = vpop.f32.mrb[0].mxu0
    %v3017 = vadd.f32 0.0, %v3016
    %v3018 = vpop.f32.mrb[0].mxu0
    %v3019 = vadd.f32 0.0, %v3018
    %v3020 = vpop.f32.mrb[0].mxu0
    %v3021 = vadd.f32 0.0, %v3020
    %v3022 = vpop.f32.mrb[0].mxu0
    %v3023 = vadd.f32 0.0, %v3022
    %3024 = vmatprep.mubr.bf16.mxu0 %v1193
    %3025 = vmatmul.mubr.bf16.gmra.mrb[0].mxu0 %v1192
    %v3026 = vpop.f32.mrb[0].mxu0
    %v3027 = vadd.f32 0.0, %v3026
    %v3028 = vpop.f32.mrb[0].mxu0
    %v3029 = vadd.f32 0.0, %v3028
    %v3030 = vpop.f32.mrb[0].mxu0
    %v3031 = vadd.f32 0.0, %v3030
    %v3032 = vpop.f32.mrb[0].mxu0
    %v3033 = vadd.f32 0.0, %v3032
    %3034 = vmatprep.mubr.bf16.mxu0 %v1197
    %3035 = vmatmul.mubr.bf16.gmra.mrb[0].mxu0 %v1196
    %v3036 = vpop.f32.mrb[0].mxu0
    %v3037 = vadd.f32 0.0, %v3036
    %v3038 = vpop.f32.mrb[0].mxu0
    %v3039 = vadd.f32 0.0, %v3038
    %v3040 = vpop.f32.mrb[0].mxu0
    %v3041 = vadd.f32 0.0, %v3040
    %v3042 = vpop.f32.mrb[0].mxu0
    %v3043 = vadd.f32 0.0, %v3042
    %3044 = vmatprep.mubr.bf16.mxu0 %v1201
    %3045 = vmatmul.mubr.bf16.gmra.mrb[0].mxu0 %v1200
    %v3046 = vpop.f32.mrb[0].mxu0
    %v3047 = vadd.f32 0.0, %v3046
    %v3048 = vpop.f32.mrb[0].mxu0
    %v3049 = vadd.f32 0.0, %v3048
    %v3050 = vpop.f32.mrb[0].mxu0
    %v3051 = vadd.f32 0.0, %v3050
    %v3052 = vpop.f32.mrb[0].mxu0
    %v3053 = vadd.f32 0.0, %v3052
    %3054 = vmatprep.mubr.bf16.mxu0 %v1205
    %3055 = vmatmul.mubr.bf16.gmra.mrb[0].mxu0 %v1204
    %v3056 = vpop.f32.mrb[0].mxu0
    %v3057 = vadd.f32 0.0, %v3056
    %v3058 = vpop.f32.mrb[0].mxu0
    %v3059 = vadd.f32 0.0, %v3058
    %v3060 = vpop.f32.mrb[0].mxu0
    %v3061 = vadd.f32 0.0, %v3060
    %v3062 = vpop.f32.mrb[0].mxu0
    %v3063 = vadd.f32 0.0, %v3062
    %3064 = vmatprep.mubr.bf16.mxu0 %v1209
    %3065 = vmatmul.mubr.bf16.gmra.mrb[0].mxu0 %v1208
    %v3066 = vpop.f32.mrb[0].mxu0
    %v3067 = vadd.f32 0.0, %v3066
    %v3068 = vpop.f32.mrb[0].mxu0
    %v3069 = vadd.f32 0.0, %v3068
    %v3070 = vpop.f32.mrb[0].mxu0
    %v3071 = vadd.f32 0.0, %v3070
    %v3072 = vpop.f32.mrb[0].mxu0
    %v3073 = vadd.f32 0.0, %v3072
    %3074 = vmatprep.mubr.bf16.mxu0 %v1213
    %3075 = vmatmul.mubr.bf16.gmra.mrb[0].mxu0 %v1212
    %v3076 = vpop.f32.mrb[0].mxu0
    %v3077 = vadd.f32 0.0, %v3076
    %v3078 = vpop.f32.mrb[0].mxu0
    %v3079 = vadd.f32 0.0, %v3078
    %v3080 = vpop.f32.mrb[0].mxu0
    %v3081 = vadd.f32 0.0, %v3080
    %v3082 = vpop.f32.mrb[0].mxu0
    %v3083 = vadd.f32 0.0, %v3082
    %3084 = vmatprep.mubr.bf16.mxu0 %v1217
    %3085 = vmatmul.mubr.bf16.gmra.mrb[0].mxu0 %v1216
    %v3086 = vpop.f32.mrb[0].mxu0
    %v3087 = vadd.f32 0.0, %v3086
    %v3088 = vpop.f32.mrb[0].mxu0
    %v3089 = vadd.f32 0.0, %v3088
    %v3090 = vpop.f32.mrb[0].mxu0
    %v3091 = vadd.f32 0.0, %v3090
    %v3092 = vpop.f32.mrb[0].mxu0
    %v3093 = vadd.f32 0.0, %v3092
    %3094 = vdwg.mxu0
    %3095 = vmatprep.subr.bf16.mxu0 %v2375
    %3096 = vmatpush1.bf16.msra.mxu0 %v2374
    %3097 = vmatprep.subr.bf16.mxu0 %v2383
    %3098 = vmatpush1.bf16.msra.mxu0 %v2382
    %3099 = vmatprep.subr.bf16.mxu0 %v2391
    %3100 = vmatpush1.bf16.msra.mxu0 %v2390
    %3101 = vmatprep.subr.bf16.mxu0 %v2399
    %3102 = vmatpush1.bf16.msra.mxu0 %v2398
    %3103 = vmatprep.subr.bf16.mxu0 %v2407
    %3104 = vmatpush1.bf16.msra.mxu0 %v2406
    %3105 = vmatprep.subr.bf16.mxu0 %v2415
    %3106 = vmatpush1.bf16.msra.mxu0 %v2414
    %3107 = vmatprep.subr.bf16.mxu0 %v2423
    %3108 = vmatpush1.bf16.msra.mxu0 %v2422
    %3109 = vmatprep.subr.bf16.mxu0 %v2431
    %3110 = vmatpush1.bf16.msra.mxu0 %v2430
    %3111 = vmatprep.subr.bf16.mxu0 %v2439
    %3112 = vmatpush1.bf16.msra.mxu0 %v2438
    %3113 = vmatprep.subr.bf16.mxu0 %v2447
    %3114 = vmatpush1.bf16.msra.mxu0 %v2446
    %3115 = vmatprep.subr.bf16.mxu0 %v2455
    %3116 = vmatpush1.bf16.msra.mxu0 %v2454
    %3117 = vmatprep.subr.bf16.mxu0 %v2463
    %3118 = vmatpush1.bf16.msra.mxu0 %v2462
    %3119 = vmatprep.subr.bf16.mxu0 %v2471
    %3120 = vmatpush1.bf16.msra.mxu0 %v2470
    %3121 = vmatprep.subr.bf16.mxu0 %v2479
    %3122 = vmatpush1.bf16.msra.mxu0 %v2478
    %3123 = vmatprep.subr.bf16.mxu0 %v2487
    %3124 = vmatpush1.bf16.msra.mxu0 %v2486
    %3125 = vmatprep.subr.bf16.mxu0 %v2495
    %3126 = vmatpush1.bf16.msra.mxu0 %v2494
    %3127 = vmatprep.mubr.bf16.mxu0 %v1191
    %3128 = vmatmul.mubr.bf16.gmra.mrb[0].mxu0 %v1190
    %v3129 = vpop.f32.mrb[0].mxu0
    %v3130 = vadd.f32 %v3017, %v3129
    %v3131 = vpop.f32.mrb[0].mxu0
    %v3132 = vadd.f32 %v3019, %v3131
    %v3133 = vpop.f32.mrb[0].mxu0
    %v3134 = vadd.f32 %v3021, %v3133
    %v3135 = vpop.f32.mrb[0].mxu0
    %v3136 = vadd.f32 %v3023, %v3135
    %3137 = vmatprep.mubr.bf16.mxu0 %v1195
    %3138 = vmatmul.mubr.bf16.gmra.mrb[0].mxu0 %v1194
    %v3139 = vpop.f32.mrb[0].mxu0
    %v3140 = vadd.f32 %v3027, %v3139
    %v3141 = vpop.f32.mrb[0].mxu0
    %v3142 = vadd.f32 %v3029, %v3141
    %v3143 = vpop.f32.mrb[0].mxu0
    %v3144 = vadd.f32 %v3031, %v3143
    %v3145 = vpop.f32.mrb[0].mxu0
    %v3146 = vadd.f32 %v3033, %v3145
    %3147 = vmatprep.mubr.bf16.mxu0 %v1199
    %3148 = vmatmul.mubr.bf16.gmra.mrb[0].mxu0 %v1198
    %v3149 = vpop.f32.mrb[0].mxu0
    %v3150 = vadd.f32 %v3037, %v3149
    %v3151 = vpop.f32.mrb[0].mxu0
    %v3152 = vadd.f32 %v3039, %v3151
    %v3153 = vpop.f32.mrb[0].mxu0
    %v3154 = vadd.f32 %v3041, %v3153
    %v3155 = vpop.f32.mrb[0].mxu0
    %v3156 = vadd.f32 %v3043, %v3155
    %3157 = vmatprep.mubr.bf16.mxu0 %v1203
    %3158 = vmatmul.mubr.bf16.gmra.mrb[0].mxu0 %v1202
    %v3159 = vpop.f32.mrb[0].mxu0
    %v3160 = vadd.f32 %v3047, %v3159
    %v3161 = vpop.f32.mrb[0].mxu0
    %v3162 = vadd.f32 %v3049, %v3161
    %v3163 = vpop.f32.mrb[0].mxu0
    %v3164 = vadd.f32 %v3051, %v3163
    %v3165 = vpop.f32.mrb[0].mxu0
    %v3166 = vadd.f32 %v3053, %v3165
    %3167 = vmatprep.mubr.bf16.mxu0 %v1207
    %3168 = vmatmul.mubr.bf16.gmra.mrb[0].mxu0 %v1206
    %v3169 = vpop.f32.mrb[0].mxu0
    %v3170 = vadd.f32 %v3057, %v3169
    %v3171 = vpop.f32.mrb[0].mxu0
    %v3172 = vadd.f32 %v3059, %v3171
    %v3173 = vpop.f32.mrb[0].mxu0
    %v3174 = vadd.f32 %v3061, %v3173
    %v3175 = vpop.f32.mrb[0].mxu0
    %v3176 = vadd.f32 %v3063, %v3175
    %3177 = vmatprep.mubr.bf16.mxu0 %v1211
    %3178 = vmatmul.mubr.bf16.gmra.mrb[0].mxu0 %v1210
    %v3179 = vpop.f32.mrb[0].mxu0
    %v3180 = vadd.f32 %v3067, %v3179
    %v3181 = vpop.f32.mrb[0].mxu0
    %v3182 = vadd.f32 %v3069, %v3181
    %v3183 = vpop.f32.mrb[0].mxu0
    %v3184 = vadd.f32 %v3071, %v3183
    %v3185 = vpop.f32.mrb[0].mxu0
    %v3186 = vadd.f32 %v3073, %v3185
    %3187 = vmatprep.mubr.bf16.mxu0 %v1215
    %3188 = vmatmul.mubr.bf16.gmra.mrb[0].mxu0 %v1214
    %v3189 = vpop.f32.mrb[0].mxu0
    %v3190 = vadd.f32 %v3077, %v3189
    %v3191 = vpop.f32.mrb[0].mxu0
    %v3192 = vadd.f32 %v3079, %v3191
    %v3193 = vpop.f32.mrb[0].mxu0
    %v3194 = vadd.f32 %v3081, %v3193
    %v3195 = vpop.f32.mrb[0].mxu0
    %v3196 = vadd.f32 %v3083, %v3195
    %3197 = vmatprep.mubr.bf16.mxu0 %v1219
    %3198 = vmatmul.mubr.bf16.gmra.mrb[0].mxu0 %v1218
    %v3199 = vpop.f32.mrb[0].mxu0
    %v3200 = vadd.f32 %v3087, %v3199
    %v3201 = vpop.f32.mrb[0].mxu0
    %v3202 = vadd.f32 %v3089, %v3201
    %v3203 = vpop.f32.mrb[0].mxu0
    %v3204 = vadd.f32 %v3091, %v3203
    %v3205 = vpop.f32.mrb[0].mxu0
    %v3206 = vadd.f32 %v3093, %v3205
    %3207 = vdwg.mxu0
    %3208 = vmatprep.subr.bf16.mxu0 %v2249
    %3209 = vmatpush1.bf16.msra.mxu0 %v2248
    %3210 = vmatprep.subr.bf16.mxu0 %v2257
    %3211 = vmatpush1.bf16.msra.mxu0 %v2256
    %3212 = vmatprep.subr.bf16.mxu0 %v2265
    %3213 = vmatpush1.bf16.msra.mxu0 %v2264
    %3214 = vmatprep.subr.bf16.mxu0 %v2273
    %3215 = vmatpush1.bf16.msra.mxu0 %v2272
    %3216 = vmatprep.subr.bf16.mxu0 %v2281
    %3217 = vmatpush1.bf16.msra.mxu0 %v2280
    %3218 = vmatprep.subr.bf16.mxu0 %v2289
    %3219 = vmatpush1.bf16.msra.mxu0 %v2288
    %3220 = vmatprep.subr.bf16.mxu0 %v2297
    %3221 = vmatpush1.bf16.msra.mxu0 %v2296
    %3222 = vmatprep.subr.bf16.mxu0 %v2305
    %3223 = vmatpush1.bf16.msra.mxu0 %v2304
    %3224 = vmatprep.subr.bf16.mxu0 %v2313
    %3225 = vmatpush1.bf16.msra.mxu0 %v2312
    %3226 = vmatprep.subr.bf16.mxu0 %v2321
    %3227 = vmatpush1.bf16.msra.mxu0 %v2320
    %3228 = vmatprep.subr.bf16.mxu0 %v2329
    %3229 = vmatpush1.bf16.msra.mxu0 %v2328
    %3230 = vmatprep.subr.bf16.mxu0 %v2337
    %3231 = vmatpush1.bf16.msra.mxu0 %v2336
    %3232 = vmatprep.subr.bf16.mxu0 %v2345
    %3233 = vmatpush1.bf16.msra.mxu0 %v2344
    %3234 = vmatprep.subr.bf16.mxu0 %v2353
    %3235 = vmatpush1.bf16.msra.mxu0 %v2352
    %3236 = vmatprep.subr.bf16.mxu0 %v2361
    %3237 = vmatpush1.bf16.msra.mxu0 %v2360
    %3238 = vmatprep.subr.bf16.mxu0 %v2369
    %3239 = vmatpush1.bf16.msra.mxu0 %v2368
    %3240 = vmatprep.mubr.bf16.mxu0 %v1189
    %3241 = vmatmul.mubr.bf16.gmra.mrb[0].mxu0 %v1188
    %v3242 = vpop.f32.mrb[0].mxu0
    %v3243 = vadd.f32 0.0, %v3242
    %v3244 = vpop.f32.mrb[0].mxu0
    %v3245 = vadd.f32 0.0, %v3244
    %v3246 = vpop.f32.mrb[0].mxu0
    %v3247 = vadd.f32 0.0, %v3246
    %v3248 = vpop.f32.mrb[0].mxu0
    %v3249 = vadd.f32 0.0, %v3248
    %3250 = vmatprep.mubr.bf16.mxu0 %v1193
    %3251 = vmatmul.mubr.bf16.gmra.mrb[0].mxu0 %v1192
    %v3252 = vpop.f32.mrb[0].mxu0
    %v3253 = vadd.f32 0.0, %v3252
    %v3254 = vpop.f32.mrb[0].mxu0
    %v3255 = vadd.f32 0.0, %v3254
    %v3256 = vpop.f32.mrb[0].mxu0
    %v3257 = vadd.f32 0.0, %v3256
    %v3258 = vpop.f32.mrb[0].mxu0
    %v3259 = vadd.f32 0.0, %v3258
    %3260 = vmatprep.mubr.bf16.mxu0 %v1197
    %3261 = vmatmul.mubr.bf16.gmra.mrb[0].mxu0 %v1196
    %v3262 = vpop.f32.mrb[0].mxu0
    %v3263 = vadd.f32 0.0, %v3262
    %v3264 = vpop.f32.mrb[0].mxu0
    %v3265 = vadd.f32 0.0, %v3264
    %v3266 = vpop.f32.mrb[0].mxu0
    %v3267 = vadd.f32 0.0, %v3266
    %v3268 = vpop.f32.mrb[0].mxu0
    %v3269 = vadd.f32 0.0, %v3268
    %3270 = vmatprep.mubr.bf16.mxu0 %v1201
    %3271 = vmatmul.mubr.bf16.gmra.mrb[0].mxu0 %v1200
    %v3272 = vpop.f32.mrb[0].mxu0
    %v3273 = vadd.f32 0.0, %v3272
    %v3274 = vpop.f32.mrb[0].mxu0
    %v3275 = vadd.f32 0.0, %v3274
    %v3276 = vpop.f32.mrb[0].mxu0
    %v3277 = vadd.f32 0.0, %v3276
    %v3278 = vpop.f32.mrb[0].mxu0
    %v3279 = vadd.f32 0.0, %v3278
    %3280 = vmatprep.mubr.bf16.mxu0 %v1205
    %3281 = vmatmul.mubr.bf16.gmra.mrb[0].mxu0 %v1204
    %v3282 = vpop.f32.mrb[0].mxu0
    %v3283 = vadd.f32 0.0, %v3282
    %v3284 = vpop.f32.mrb[0].mxu0
    %v3285 = vadd.f32 0.0, %v3284
    %v3286 = vpop.f32.mrb[0].mxu0
    %v3287 = vadd.f32 0.0, %v3286
    %v3288 = vpop.f32.mrb[0].mxu0
    %v3289 = vadd.f32 0.0, %v3288
    %3290 = vmatprep.mubr.bf16.mxu0 %v1209
    %3291 = vmatmul.mubr.bf16.gmra.mrb[0].mxu0 %v1208
    %v3292 = vpop.f32.mrb[0].mxu0
    %v3293 = vadd.f32 0.0, %v3292
    %v3294 = vpop.f32.mrb[0].mxu0
    %v3295 = vadd.f32 0.0, %v3294
    %v3296 = vpop.f32.mrb[0].mxu0
    %v3297 = vadd.f32 0.0, %v3296
    %v3298 = vpop.f32.mrb[0].mxu0
    %v3299 = vadd.f32 0.0, %v3298
    %3300 = vmatprep.mubr.bf16.mxu0 %v1213
    %3301 = vmatmul.mubr.bf16.gmra.mrb[0].mxu0 %v1212
    %v3302 = vpop.f32.mrb[0].mxu0
    %v3303 = vadd.f32 0.0, %v3302
    %v3304 = vpop.f32.mrb[0].mxu0
    %v3305 = vadd.f32 0.0, %v3304
    %v3306 = vpop.f32.mrb[0].mxu0
    %v3307 = vadd.f32 0.0, %v3306
    %v3308 = vpop.f32.mrb[0].mxu0
    %v3309 = vadd.f32 0.0, %v3308
    %3310 = vmatprep.mubr.bf16.mxu0 %v1217
    %3311 = vmatmul.mubr.bf16.gmra.mrb[0].mxu0 %v1216
    %v3312 = vpop.f32.mrb[0].mxu0
    %v3313 = vadd.f32 0.0, %v3312
    %v3314 = vpop.f32.mrb[0].mxu0
    %v3315 = vadd.f32 0.0, %v3314
    %v3316 = vpop.f32.mrb[0].mxu0
    %v3317 = vadd.f32 0.0, %v3316
    %v3318 = vpop.f32.mrb[0].mxu0
    %v3319 = vadd.f32 0.0, %v3318
    %3320 = vdwg.mxu0
    %3321 = vmatprep.subr.bf16.mxu0 %v2377
    %3322 = vmatpush1.bf16.msra.mxu0 %v2376
    %3323 = vmatprep.subr.bf16.mxu0 %v2385
    %3324 = vmatpush1.bf16.msra.mxu0 %v2384
    %3325 = vmatprep.subr.bf16.mxu0 %v2393
    %3326 = vmatpush1.bf16.msra.mxu0 %v2392
    %3327 = vmatprep.subr.bf16.mxu0 %v2401
    %3328 = vmatpush1.bf16.msra.mxu0 %v2400
    %3329 = vmatprep.subr.bf16.mxu0 %v2409
    %3330 = vmatpush1.bf16.msra.mxu0 %v2408
    %3331 = vmatprep.subr.bf16.mxu0 %v2417
    %3332 = vmatpush1.bf16.msra.mxu0 %v2416
    %3333 = vmatprep.subr.bf16.mxu0 %v2425
    %3334 = vmatpush1.bf16.msra.mxu0 %v2424
    %3335 = vmatprep.subr.bf16.mxu0 %v2433
    %3336 = vmatpush1.bf16.msra.mxu0 %v2432
    %3337 = vmatprep.subr.bf16.mxu0 %v2441
    %3338 = vmatpush1.bf16.msra.mxu0 %v2440
    %3339 = vmatprep.subr.bf16.mxu0 %v2449
    %3340 = vmatpush1.bf16.msra.mxu0 %v2448
    %3341 = vmatprep.subr.bf16.mxu0 %v2457
    %3342 = vmatpush1.bf16.msra.mxu0 %v2456
    %3343 = vmatprep.subr.bf16.mxu0 %v2465
    %3344 = vmatpush1.bf16.msra.mxu0 %v2464
    %3345 = vmatprep.subr.bf16.mxu0 %v2473
    %3346 = vmatpush1.bf16.msra.mxu0 %v2472
    %3347 = vmatprep.subr.bf16.mxu0 %v2481
    %3348 = vmatpush1.bf16.msra.mxu0 %v2480
    %3349 = vmatprep.subr.bf16.mxu0 %v2489
    %3350 = vmatpush1.bf16.msra.mxu0 %v2488
    %3351 = vmatprep.subr.bf16.mxu0 %v2497
    %3352 = vmatpush1.bf16.msra.mxu0 %v2496
    %3353 = vmatprep.mubr.bf16.mxu0 %v1191
    %3354 = vmatmul.mubr.bf16.gmra.mrb[0].mxu0 %v1190
    %v3355 = vpop.f32.mrb[0].mxu0
    %v3356 = vadd.f32 %v3243, %v3355
    %v3357 = vpop.f32.mrb[0].mxu0
    %v3358 = vadd.f32 %v3245, %v3357
    %v3359 = vpop.f32.mrb[0].mxu0
    %v3360 = vadd.f32 %v3247, %v3359
    %v3361 = vpop.f32.mrb[0].mxu0
    %v3362 = vadd.f32 %v3249, %v3361
    %3363 = vmatprep.mubr.bf16.mxu0 %v1195
    %3364 = vmatmul.mubr.bf16.gmra.mrb[0].mxu0 %v1194
    %v3365 = vpop.f32.mrb[0].mxu0
    %v3366 = vadd.f32 %v3253, %v3365
    %v3367 = vpop.f32.mrb[0].mxu0
    %v3368 = vadd.f32 %v3255, %v3367
    %v3369 = vpop.f32.mrb[0].mxu0
    %v3370 = vadd.f32 %v3257, %v3369
    %v3371 = vpop.f32.mrb[0].mxu0
    %v3372 = vadd.f32 %v3259, %v3371
    %3373 = vmatprep.mubr.bf16.mxu0 %v1199
    %3374 = vmatmul.mubr.bf16.gmra.mrb[0].mxu0 %v1198
    %v3375 = vpop.f32.mrb[0].mxu0
    %v3376 = vadd.f32 %v3263, %v3375
    %v3377 = vpop.f32.mrb[0].mxu0
    %v3378 = vadd.f32 %v3265, %v3377
    %v3379 = vpop.f32.mrb[0].mxu0
    %v3380 = vadd.f32 %v3267, %v3379
    %v3381 = vpop.f32.mrb[0].mxu0
    %v3382 = vadd.f32 %v3269, %v3381
    %3383 = vmatprep.mubr.bf16.mxu0 %v1203
    %3384 = vmatmul.mubr.bf16.gmra.mrb[0].mxu0 %v1202
    %v3385 = vpop.f32.mrb[0].mxu0
    %v3386 = vadd.f32 %v3273, %v3385
    %v3387 = vpop.f32.mrb[0].mxu0
    %v3388 = vadd.f32 %v3275, %v3387
    %v3389 = vpop.f32.mrb[0].mxu0
    %v3390 = vadd.f32 %v3277, %v3389
    %v3391 = vpop.f32.mrb[0].mxu0
    %v3392 = vadd.f32 %v3279, %v3391
    %3393 = vmatprep.mubr.bf16.mxu0 %v1207
    %3394 = vmatmul.mubr.bf16.gmra.mrb[0].mxu0 %v1206
    %v3395 = vpop.f32.mrb[0].mxu0
    %v3396 = vadd.f32 %v3283, %v3395
    %v3397 = vpop.f32.mrb[0].mxu0
    %v3398 = vadd.f32 %v3285, %v3397
    %v3399 = vpop.f32.mrb[0].mxu0
    %v3400 = vadd.f32 %v3287, %v3399
    %v3401 = vpop.f32.mrb[0].mxu0
    %v3402 = vadd.f32 %v3289, %v3401
    %3403 = vmatprep.mubr.bf16.mxu0 %v1211
    %3404 = vmatmul.mubr.bf16.gmra.mrb[0].mxu0 %v1210
    %v3405 = vpop.f32.mrb[0].mxu0
    %v3406 = vadd.f32 %v3293, %v3405
    %v3407 = vpop.f32.mrb[0].mxu0
    %v3408 = vadd.f32 %v3295, %v3407
    %v3409 = vpop.f32.mrb[0].mxu0
    %v3410 = vadd.f32 %v3297, %v3409
    %v3411 = vpop.f32.mrb[0].mxu0
    %v3412 = vadd.f32 %v3299, %v3411
    %3413 = vmatprep.mubr.bf16.mxu0 %v1215
    %3414 = vmatmul.mubr.bf16.gmra.mrb[0].mxu0 %v1214
    %v3415 = vpop.f32.mrb[0].mxu0
    %v3416 = vadd.f32 %v3303, %v3415
    %v3417 = vpop.f32.mrb[0].mxu0
    %v3418 = vadd.f32 %v3305, %v3417
    %v3419 = vpop.f32.mrb[0].mxu0
    %v3420 = vadd.f32 %v3307, %v3419
    %v3421 = vpop.f32.mrb[0].mxu0
    %v3422 = vadd.f32 %v3309, %v3421
    %3423 = vmatprep.mubr.bf16.mxu0 %v1219
    %3424 = vmatmul.mubr.bf16.gmra.mrb[0].mxu0 %v1218
    %v3425 = vpop.f32.mrb[0].mxu0
    %v3426 = vadd.f32 %v3313, %v3425
    %v3427 = vpop.f32.mrb[0].mxu0
    %v3428 = vadd.f32 %v3315, %v3427
    %v3429 = vpop.f32.mrb[0].mxu0
    %v3430 = vadd.f32 %v3317, %v3429
    %v3431 = vpop.f32.mrb[0].mxu0
    %v3432 = vadd.f32 %v3319, %v3431
    %3433 = vdwg.mxu0
    %3434 = vmatprep.subr.bf16.mxu0 %v2251
    %3435 = vmatpush1.bf16.msra.mxu0 %v2250
    %3436 = vmatprep.subr.bf16.mxu0 %v2259
    %3437 = vmatpush1.bf16.msra.mxu0 %v2258
    %3438 = vmatprep.subr.bf16.mxu0 %v2267
    %3439 = vmatpush1.bf16.msra.mxu0 %v2266
    %3440 = vmatprep.subr.bf16.mxu0 %v2275
    %3441 = vmatpush1.bf16.msra.mxu0 %v2274
    %3442 = vmatprep.subr.bf16.mxu0 %v2283
    %3443 = vmatpush1.bf16.msra.mxu0 %v2282
    %3444 = vmatprep.subr.bf16.mxu0 %v2291
    %3445 = vmatpush1.bf16.msra.mxu0 %v2290
    %3446 = vmatprep.subr.bf16.mxu0 %v2299
    %3447 = vmatpush1.bf16.msra.mxu0 %v2298
    %3448 = vmatprep.subr.bf16.mxu0 %v2307
    %3449 = vmatpush1.bf16.msra.mxu0 %v2306
    %3450 = vmatprep.subr.bf16.mxu0 %v2315
    %3451 = vmatpush1.bf16.msra.mxu0 %v2314
    %3452 = vmatprep.subr.bf16.mxu0 %v2323
    %3453 = vmatpush1.bf16.msra.mxu0 %v2322
    %3454 = vmatprep.subr.bf16.mxu0 %v2331
    %3455 = vmatpush1.bf16.msra.mxu0 %v2330
    %3456 = vmatprep.subr.bf16.mxu0 %v2339
    %3457 = vmatpush1.bf16.msra.mxu0 %v2338
    %3458 = vmatprep.subr.bf16.mxu0 %v2347
    %3459 = vmatpush1.bf16.msra.mxu0 %v2346
    %3460 = vmatprep.subr.bf16.mxu0 %v2355
    %3461 = vmatpush1.bf16.msra.mxu0 %v2354
    %3462 = vmatprep.subr.bf16.mxu0 %v2363
    %3463 = vmatpush1.bf16.msra.mxu0 %v2362
    %3464 = vmatprep.subr.bf16.mxu0 %v2371
    %3465 = vmatpush1.bf16.msra.mxu0 %v2370
    %3466 = vmatprep.mubr.bf16.mxu0 %v1189
    %3467 = vmatmul.mubr.bf16.gmra.mrb[0].mxu0 %v1188
    %v3468 = vpop.f32.mrb[0].mxu0
    %v3469 = vadd.f32 0.0, %v3468
    %v3470 = vpop.f32.mrb[0].mxu0
    %v3471 = vadd.f32 0.0, %v3470
    %v3472 = vpop.f32.mrb[0].mxu0
    %v3473 = vadd.f32 0.0, %v3472
    %v3474 = vpop.f32.mrb[0].mxu0
    %v3475 = vadd.f32 0.0, %v3474
    %3476 = vmatprep.mubr.bf16.mxu0 %v1193
    %3477 = vmatmul.mubr.bf16.gmra.mrb[0].mxu0 %v1192
    %v3478 = vpop.f32.mrb[0].mxu0
    %v3479 = vadd.f32 0.0, %v3478
    %v3480 = vpop.f32.mrb[0].mxu0
    %v3481 = vadd.f32 0.0, %v3480
    %v3482 = vpop.f32.mrb[0].mxu0
    %v3483 = vadd.f32 0.0, %v3482
    %v3484 = vpop.f32.mrb[0].mxu0
    %v3485 = vadd.f32 0.0, %v3484
    %3486 = vmatprep.mubr.bf16.mxu0 %v1197
    %3487 = vmatmul.mubr.bf16.gmra.mrb[0].mxu0 %v1196
    %v3488 = vpop.f32.mrb[0].mxu0
    %v3489 = vadd.f32 0.0, %v3488
    %v3490 = vpop.f32.mrb[0].mxu0
    %v3491 = vadd.f32 0.0, %v3490
    %v3492 = vpop.f32.mrb[0].mxu0
    %v3493 = vadd.f32 0.0, %v3492
    %v3494 = vpop.f32.mrb[0].mxu0
    %v3495 = vadd.f32 0.0, %v3494
    %3496 = vmatprep.mubr.bf16.mxu0 %v1201
    %3497 = vmatmul.mubr.bf16.gmra.mrb[0].mxu0 %v1200
    %v3498 = vpop.f32.mrb[0].mxu0
    %v3499 = vadd.f32 0.0, %v3498
    %v3500 = vpop.f32.mrb[0].mxu0
    %v3501 = vadd.f32 0.0, %v3500
    %v3502 = vpop.f32.mrb[0].mxu0
    %v3503 = vadd.f32 0.0, %v3502
    %v3504 = vpop.f32.mrb[0].mxu0
    %v3505 = vadd.f32 0.0, %v3504
    %3506 = vmatprep.mubr.bf16.mxu0 %v1205
    %3507 = vmatmul.mubr.bf16.gmra.mrb[0].mxu0 %v1204
    %v3508 = vpop.f32.mrb[0].mxu0
    %v3509 = vadd.f32 0.0, %v3508
    %v3510 = vpop.f32.mrb[0].mxu0
    %v3511 = vadd.f32 0.0, %v3510
    %v3512 = vpop.f32.mrb[0].mxu0
    %v3513 = vadd.f32 0.0, %v3512
    %v3514 = vpop.f32.mrb[0].mxu0
    %v3515 = vadd.f32 0.0, %v3514
    %3516 = vmatprep.mubr.bf16.mxu0 %v1209
    %3517 = vmatmul.mubr.bf16.gmra.mrb[0].mxu0 %v1208
    %v3518 = vpop.f32.mrb[0].mxu0
    %v3519 = vadd.f32 0.0, %v3518
    %v3520 = vpop.f32.mrb[0].mxu0
    %v3521 = vadd.f32 0.0, %v3520
    %v3522 = vpop.f32.mrb[0].mxu0
    %v3523 = vadd.f32 0.0, %v3522
    %v3524 = vpop.f32.mrb[0].mxu0
    %v3525 = vadd.f32 0.0, %v3524
    %3526 = vmatprep.mubr.bf16.mxu0 %v1213
    %3527 = vmatmul.mubr.bf16.gmra.mrb[0].mxu0 %v1212
    %v3528 = vpop.f32.mrb[0].mxu0
    %v3529 = vadd.f32 0.0, %v3528
    %v3530 = vpop.f32.mrb[0].mxu0
    %v3531 = vadd.f32 0.0, %v3530
    %v3532 = vpop.f32.mrb[0].mxu0
    %v3533 = vadd.f32 0.0, %v3532
    %v3534 = vpop.f32.mrb[0].mxu0
    %v3535 = vadd.f32 0.0, %v3534
    %3536 = vmatprep.mubr.bf16.mxu0 %v1217
    %3537 = vmatmul.mubr.bf16.gmra.mrb[0].mxu0 %v1216
    %v3538 = vpop.f32.mrb[0].mxu0
    %v3539 = vadd.f32 0.0, %v3538
    %v3540 = vpop.f32.mrb[0].mxu0
    %v3541 = vadd.f32 0.0, %v3540
    %v3542 = vpop.f32.mrb[0].mxu0
    %v3543 = vadd.f32 0.0, %v3542
    %v3544 = vpop.f32.mrb[0].mxu0
    %v3545 = vadd.f32 0.0, %v3544
    %3546 = vdwg.mxu0
    %3547 = vmatprep.subr.bf16.mxu0 %v2379
    %3548 = vmatpush1.bf16.msra.mxu0 %v2378
    %3549 = vmatprep.subr.bf16.mxu0 %v2387
    %3550 = vmatpush1.bf16.msra.mxu0 %v2386
    %3551 = vmatprep.subr.bf16.mxu0 %v2395
    %3552 = vmatpush1.bf16.msra.mxu0 %v2394
    %3553 = vmatprep.subr.bf16.mxu0 %v2403
    %3554 = vmatpush1.bf16.msra.mxu0 %v2402
    %3555 = vmatprep.subr.bf16.mxu0 %v2411
    %3556 = vmatpush1.bf16.msra.mxu0 %v2410
    %3557 = vmatprep.subr.bf16.mxu0 %v2419
    %3558 = vmatpush1.bf16.msra.mxu0 %v2418
    %3559 = vmatprep.subr.bf16.mxu0 %v2427
    %3560 = vmatpush1.bf16.msra.mxu0 %v2426
    %3561 = vmatprep.subr.bf16.mxu0 %v2435
    %3562 = vmatpush1.bf16.msra.mxu0 %v2434
    %3563 = vmatprep.subr.bf16.mxu0 %v2443
    %3564 = vmatpush1.bf16.msra.mxu0 %v2442
    %3565 = vmatprep.subr.bf16.mxu0 %v2451
    %3566 = vmatpush1.bf16.msra.mxu0 %v2450
    %3567 = vmatprep.subr.bf16.mxu0 %v2459
    %3568 = vmatpush1.bf16.msra.mxu0 %v2458
    %3569 = vmatprep.subr.bf16.mxu0 %v2467
    %3570 = vmatpush1.bf16.msra.mxu0 %v2466
    %3571 = vmatprep.subr.bf16.mxu0 %v2475
    %3572 = vmatpush1.bf16.msra.mxu0 %v2474
    %3573 = vmatprep.subr.bf16.mxu0 %v2483
    %3574 = vmatpush1.bf16.msra.mxu0 %v2482
    %3575 = vmatprep.subr.bf16.mxu0 %v2491
    %3576 = vmatpush1.bf16.msra.mxu0 %v2490
    %3577 = vmatprep.subr.bf16.mxu0 %v2499
    %3578 = vmatpush1.bf16.msra.mxu0 %v2498
    %3579 = vmatprep.mubr.bf16.mxu0 %v1191
    %3580 = vmatmul.mubr.bf16.gmra.mrb[0].mxu0 %v1190
    %v3581 = vpop.f32.mrb[0].mxu0
    %v3582 = vadd.f32 %v3469, %v3581
    %v3583 = vpop.f32.mrb[0].mxu0
    %v3584 = vadd.f32 %v3471, %v3583
    %v3585 = vpop.f32.mrb[0].mxu0
    %v3586 = vadd.f32 %v3473, %v3585
    %v3587 = vpop.f32.mrb[0].mxu0
    %v3588 = vadd.f32 %v3475, %v3587
    %3589 = vmatprep.mubr.bf16.mxu0 %v1195
    %3590 = vmatmul.mubr.bf16.gmra.mrb[0].mxu0 %v1194
    %v3591 = vpop.f32.mrb[0].mxu0
    %v3592 = vadd.f32 %v3479, %v3591
    %v3593 = vpop.f32.mrb[0].mxu0
    %v3594 = vadd.f32 %v3481, %v3593
    %v3595 = vpop.f32.mrb[0].mxu0
    %v3596 = vadd.f32 %v3483, %v3595
    %v3597 = vpop.f32.mrb[0].mxu0
    %v3598 = vadd.f32 %v3485, %v3597
    %3599 = vmatprep.mubr.bf16.mxu0 %v1199
    %3600 = vmatmul.mubr.bf16.gmra.mrb[0].mxu0 %v1198
    %v3601 = vpop.f32.mrb[0].mxu0
    %v3602 = vadd.f32 %v3489, %v3601
    %v3603 = vpop.f32.mrb[0].mxu0
    %v3604 = vadd.f32 %v3491, %v3603
    %v3605 = vpop.f32.mrb[0].mxu0
    %v3606 = vadd.f32 %v3493, %v3605
    %v3607 = vpop.f32.mrb[0].mxu0
    %v3608 = vadd.f32 %v3495, %v3607
    %3609 = vmatprep.mubr.bf16.mxu0 %v1203
    %3610 = vmatmul.mubr.bf16.gmra.mrb[0].mxu0 %v1202
    %v3611 = vpop.f32.mrb[0].mxu0
    %v3612 = vadd.f32 %v3499, %v3611
    %v3613 = vpop.f32.mrb[0].mxu0
    %v3614 = vadd.f32 %v3501, %v3613
    %v3615 = vpop.f32.mrb[0].mxu0
    %v3616 = vadd.f32 %v3503, %v3615
    %v3617 = vpop.f32.mrb[0].mxu0
    %v3618 = vadd.f32 %v3505, %v3617
    %3619 = vmatprep.mubr.bf16.mxu0 %v1207
    %3620 = vmatmul.mubr.bf16.gmra.mrb[0].mxu0 %v1206
    %v3621 = vpop.f32.mrb[0].mxu0
    %v3622 = vadd.f32 %v3509, %v3621
    %v3623 = vpop.f32.mrb[0].mxu0
    %v3624 = vadd.f32 %v3511, %v3623
    %v3625 = vpop.f32.mrb[0].mxu0
    %v3626 = vadd.f32 %v3513, %v3625
    %v3627 = vpop.f32.mrb[0].mxu0
    %v3628 = vadd.f32 %v3515, %v3627
    %3629 = vmatprep.mubr.bf16.mxu0 %v1211
    %3630 = vmatmul.mubr.bf16.gmra.mrb[0].mxu0 %v1210
    %v3631 = vpop.f32.mrb[0].mxu0
    %v3632 = vadd.f32 %v3519, %v3631
    %v3633 = vpop.f32.mrb[0].mxu0
    %v3634 = vadd.f32 %v3521, %v3633
    %v3635 = vpop.f32.mrb[0].mxu0
    %v3636 = vadd.f32 %v3523, %v3635
    %v3637 = vpop.f32.mrb[0].mxu0
    %v3638 = vadd.f32 %v3525, %v3637
    %3639 = vmatprep.mubr.bf16.mxu0 %v1215
    %3640 = vmatmul.mubr.bf16.gmra.mrb[0].mxu0 %v1214
    %v3641 = vpop.f32.mrb[0].mxu0
    %v3642 = vadd.f32 %v3529, %v3641
    %v3643 = vpop.f32.mrb[0].mxu0
    %v3644 = vadd.f32 %v3531, %v3643
    %v3645 = vpop.f32.mrb[0].mxu0
    %v3646 = vadd.f32 %v3533, %v3645
    %v3647 = vpop.f32.mrb[0].mxu0
    %v3648 = vadd.f32 %v3535, %v3647
    %3649 = vmatprep.mubr.bf16.mxu0 %v1219
    %3650 = vmatmul.mubr.bf16.gmra.mrb[0].mxu0 %v1218
    %v3651 = vpop.f32.mrb[0].mxu0
    %v3652 = vadd.f32 %v3539, %v3651
    %v3653 = vpop.f32.mrb[0].mxu0
    %v3654 = vadd.f32 %v3541, %v3653
    %v3655 = vpop.f32.mrb[0].mxu0
    %v3656 = vadd.f32 %v3543, %v3655
    %v3657 = vpop.f32.mrb[0].mxu0
    %v3658 = vadd.f32 %v3545, %v3657
    %3659 = vdwg.mxu0
    %v3660 = vpack.c.bf16 %v2908, %v2904
    %v3661 = vpack.c.bf16 %v2910, %v2906
    %v3662 = vpack.c.bf16 %v3134, %v3130
    %v3663 = vpack.c.bf16 %v3136, %v3132
    %v3664 = vpack.c.bf16 %v3360, %v3356
    %v3665 = vpack.c.bf16 %v3362, %v3358
    %v3666 = vpack.c.bf16 %v3586, %v3582
    %v3667 = vpack.c.bf16 %v3588, %v3584
    %v3668 = vpack.c.bf16 %v2918, %v2914
    %v3669 = vpack.c.bf16 %v2920, %v2916
    %v3670 = vpack.c.bf16 %v3144, %v3140
    %v3671 = vpack.c.bf16 %v3146, %v3142
    %v3672 = vpack.c.bf16 %v3370, %v3366
    %v3673 = vpack.c.bf16 %v3372, %v3368
    %v3674 = vpack.c.bf16 %v3596, %v3592
    %v3675 = vpack.c.bf16 %v3598, %v3594
    %v3676 = vpack.c.bf16 %v2928, %v2924
    %v3677 = vpack.c.bf16 %v2930, %v2926
    %v3678 = vpack.c.bf16 %v3154, %v3150
    %v3679 = vpack.c.bf16 %v3156, %v3152
    %v3680 = vpack.c.bf16 %v3380, %v3376
    %v3681 = vpack.c.bf16 %v3382, %v3378
    %v3682 = vpack.c.bf16 %v3606, %v3602
    %v3683 = vpack.c.bf16 %v3608, %v3604
    %v3684 = vpack.c.bf16 %v2938, %v2934
    %v3685 = vpack.c.bf16 %v2940, %v2936
    %v3686 = vpack.c.bf16 %v3164, %v3160
    %v3687 = vpack.c.bf16 %v3166, %v3162
    %v3688 = vpack.c.bf16 %v3390, %v3386
    %v3689 = vpack.c.bf16 %v3392, %v3388
    %v3690 = vpack.c.bf16 %v3616, %v3612
    %v3691 = vpack.c.bf16 %v3618, %v3614
    %v3692 = vpack.c.bf16 %v2948, %v2944
    %v3693 = vpack.c.bf16 %v2950, %v2946
    %v3694 = vpack.c.bf16 %v3174, %v3170
    %v3695 = vpack.c.bf16 %v3176, %v3172
    %v3696 = vpack.c.bf16 %v3400, %v3396
    %v3697 = vpack.c.bf16 %v3402, %v3398
    %v3698 = vpack.c.bf16 %v3626, %v3622
    %v3699 = vpack.c.bf16 %v3628, %v3624
    %v3700 = vpack.c.bf16 %v2958, %v2954
    %v3701 = vpack.c.bf16 %v2960, %v2956
    %v3702 = vpack.c.bf16 %v3184, %v3180
    %v3703 = vpack.c.bf16 %v3186, %v3182
    %v3704 = vpack.c.bf16 %v3410, %v3406
    %v3705 = vpack.c.bf16 %v3412, %v3408
    %v3706 = vpack.c.bf16 %v3636, %v3632
    %v3707 = vpack.c.bf16 %v3638, %v3634
    %v3708 = vpack.c.bf16 %v2968, %v2964
    %v3709 = vpack.c.bf16 %v2970, %v2966
    %v3710 = vpack.c.bf16 %v3194, %v3190
    %v3711 = vpack.c.bf16 %v3196, %v3192
    %v3712 = vpack.c.bf16 %v3420, %v3416
    %v3713 = vpack.c.bf16 %v3422, %v3418
    %v3714 = vpack.c.bf16 %v3646, %v3642
    %v3715 = vpack.c.bf16 %v3648, %v3644
    %v3716 = vpack.c.bf16 %v2978, %v2974
    %v3717 = vpack.c.bf16 %v2980, %v2976
    %v3718 = vpack.c.bf16 %v3204, %v3200
    %v3719 = vpack.c.bf16 %v3206, %v3202
    %v3720 = vpack.c.bf16 %v3430, %v3426
    %v3721 = vpack.c.bf16 %v3432, %v3428
    %v3722 = vpack.c.bf16 %v3656, %v3652
    %v3723 = vpack.c.bf16 %v3658, %v3654
    %v3724 = vld [vmem:[%s6] sm:$0xff]
    %v3726 = vlaneseq
    %v3727 = vshrl.u32 %v3726, 7
    %v3728 = vsub.s32 0, %v3727
    %v3729 = vrot.slane %v3724, %v3728
    %v3730 = vlaneseq
    %v3731 = vshrl.u32 %v3730, 7
    %v3732 = vsub.s32 1, %v3731
    %v3733 = vrot.slane %v3724, %v3732
    %v3734 = vlaneseq
    %v3735 = vshrl.u32 %v3734, 7
    %v3736 = vsub.s32 2, %v3735
    %v3737 = vrot.slane %v3724, %v3736
    %v3738 = vlaneseq
    %v3739 = vshrl.u32 %v3738, 7
    %v3740 = vsub.s32 3, %v3739
    %v3741 = vrot.slane %v3724, %v3740
    %v3742 = vlaneseq
    %v3743 = vshrl.u32 %v3742, 7
    %v3744 = vsub.s32 4, %v3743
    %v3745 = vrot.slane %v3724, %v3744
    %v3746 = vlaneseq
    %v3747 = vshrl.u32 %v3746, 7
    %v3748 = vsub.s32 5, %v3747
    %v3749 = vrot.slane %v3724, %v3748
    %v3750 = vlaneseq
    %v3751 = vshrl.u32 %v3750, 7
    %v3752 = vsub.s32 6, %v3751
    %v3753 = vrot.slane %v3724, %v3752
    %v3754 = vlaneseq
    %v3755 = vshrl.u32 %v3754, 7
    %v3756 = vsub.s32 7, %v3755
    %v3757 = vrot.slane %v3724, %v3756
    %v3766 = vpack.c.bf16 %v3729, %v3729
    %v3767 = vpack.c.bf16 %v3733, %v3733
    %v3768 = vpack.c.bf16 %v3737, %v3737
    %v3769 = vpack.c.bf16 %v3741, %v3741
    %v3770 = vpack.c.bf16 %v3745, %v3745
    %v3771 = vpack.c.bf16 %v3749, %v3749
    %v3772 = vpack.c.bf16 %v3753, %v3753
    %v3773 = vpack.c.bf16 %v3757, %v3757
    %v3775 = vpack.i.b16 %v3766, %v3766
    %v3777 = vlaneseq
    %v3778 = vshrl.u32 %v3777, 7
    %v3779 = vsub.s32 0, %v3778
    %v3780 = vrot.slane %v3775, %v3779
    %v3782 = vpack.i.b16 %v3767, %v3767
    %v3784 = vlaneseq
    %v3785 = vshrl.u32 %v3784, 7
    %v3786 = vsub.s32 0, %v3785
    %v3787 = vrot.slane %v3782, %v3786
    %v3789 = vpack.i.b16 %v3768, %v3768
    %v3791 = vlaneseq
    %v3792 = vshrl.u32 %v3791, 7
    %v3793 = vsub.s32 0, %v3792
    %v3794 = vrot.slane %v3789, %v3793
    %v3796 = vpack.i.b16 %v3769, %v3769
    %v3798 = vlaneseq
    %v3799 = vshrl.u32 %v3798, 7
    %v3800 = vsub.s32 0, %v3799
    %v3801 = vrot.slane %v3796, %v3800
    %v3803 = vpack.i.b16 %v3770, %v3770
    %v3805 = vlaneseq
    %v3806 = vshrl.u32 %v3805, 7
    %v3807 = vsub.s32 0, %v3806
    %v3808 = vrot.slane %v3803, %v3807
    %v3810 = vpack.i.b16 %v3771, %v3771
    %v3812 = vlaneseq
    %v3813 = vshrl.u32 %v3812, 7
    %v3814 = vsub.s32 0, %v3813
    %v3815 = vrot.slane %v3810, %v3814
    %v3817 = vpack.i.b16 %v3772, %v3772
    %v3819 = vlaneseq
    %v3820 = vshrl.u32 %v3819, 7
    %v3821 = vsub.s32 0, %v3820
    %v3822 = vrot.slane %v3817, %v3821
    %v3824 = vpack.i.b16 %v3773, %v3773
    %v3826 = vlaneseq
    %v3827 = vshrl.u32 %v3826, 7
    %v3828 = vsub.s32 0, %v3827
    %v3829 = vrot.slane %v3824, %v3828
    %v3830 = vadd.bf16 %v3660, %v3780
    %v3831 = vadd.bf16 %v3661, %v3787
    %v3832 = vadd.bf16 %v3662, %v3794
    %v3833 = vadd.bf16 %v3663, %v3801
    %v3834 = vadd.bf16 %v3664, %v3808
    %v3835 = vadd.bf16 %v3665, %v3815
    %v3836 = vadd.bf16 %v3666, %v3822
    %v3837 = vadd.bf16 %v3667, %v3829
    %v3838 = vadd.bf16 %v3668, %v3780
    %v3839 = vadd.bf16 %v3669, %v3787
    %v3840 = vadd.bf16 %v3670, %v3794
    %v3841 = vadd.bf16 %v3671, %v3801
    %v3842 = vadd.bf16 %v3672, %v3808
    %v3843 = vadd.bf16 %v3673, %v3815
    %v3844 = vadd.bf16 %v3674, %v3822
    %v3845 = vadd.bf16 %v3675, %v3829
    %v3846 = vadd.bf16 %v3676, %v3780
    %v3847 = vadd.bf16 %v3677, %v3787
    %v3848 = vadd.bf16 %v3678, %v3794
    %v3849 = vadd.bf16 %v3679, %v3801
    %v3850 = vadd.bf16 %v3680, %v3808
    %v3851 = vadd.bf16 %v3681, %v3815
    %v3852 = vadd.bf16 %v3682, %v3822
    %v3853 = vadd.bf16 %v3683, %v3829
    %v3854 = vadd.bf16 %v3684, %v3780
    %v3855 = vadd.bf16 %v3685, %v3787
    %v3856 = vadd.bf16 %v3686, %v3794
    %v3857 = vadd.bf16 %v3687, %v3801
    %v3858 = vadd.bf16 %v3688, %v3808
    %v3859 = vadd.bf16 %v3689, %v3815
    %v3860 = vadd.bf16 %v3690, %v3822
    %v3861 = vadd.bf16 %v3691, %v3829
    %v3862 = vadd.bf16 %v3692, %v3780
    %v3863 = vadd.bf16 %v3693, %v3787
    %v3864 = vadd.bf16 %v3694, %v3794
    %v3865 = vadd.bf16 %v3695, %v3801
    %v3866 = vadd.bf16 %v3696, %v3808
    %v3867 = vadd.bf16 %v3697, %v3815
    %v3868 = vadd.bf16 %v3698, %v3822
    %v3869 = vadd.bf16 %v3699, %v3829
    %v3870 = vadd.bf16 %v3700, %v3780
    %v3871 = vadd.bf16 %v3701, %v3787
    %v3872 = vadd.bf16 %v3702, %v3794
    %v3873 = vadd.bf16 %v3703, %v3801
    %v3874 = vadd.bf16 %v3704, %v3808
    %v3875 = vadd.bf16 %v3705, %v3815
    %v3876 = vadd.bf16 %v3706, %v3822
    %v3877 = vadd.bf16 %v3707, %v3829
    %v3878 = vadd.bf16 %v3708, %v3780
    %v3879 = vadd.bf16 %v3709, %v3787
    %v3880 = vadd.bf16 %v3710, %v3794
    %v3881 = vadd.bf16 %v3711, %v3801
    %v3882 = vadd.bf16 %v3712, %v3808
    %v3883 = vadd.bf16 %v3713, %v3815
    %v3884 = vadd.bf16 %v3714, %v3822
    %v3885 = vadd.bf16 %v3715, %v3829
    %v3886 = vadd.bf16 %v3716, %v3780
    %v3887 = vadd.bf16 %v3717, %v3787
    %v3888 = vadd.bf16 %v3718, %v3794
    %v3889 = vadd.bf16 %v3719, %v3801
    %v3890 = vadd.bf16 %v3720, %v3808
    %v3891 = vadd.bf16 %v3721, %v3815
    %v3892 = vadd.bf16 %v3722, %v3822
    %v3893 = vadd.bf16 %v3723, %v3829
    %v3894 = vmul.bf16 %v3830, 1009007652
    %v3895 = vmul.bf16 %v3831, 1009007652
    %v3896 = vmul.bf16 %v3832, 1009007652
    %v3897 = vmul.bf16 %v3833, 1009007652
    %v3898 = vmul.bf16 %v3834, 1009007652
    %v3899 = vmul.bf16 %v3835, 1009007652
    %v3900 = vmul.bf16 %v3836, 1009007652
    %v3901 = vmul.bf16 %v3837, 1009007652
    %v3902 = vmul.bf16 %v3838, 1009007652
    %v3903 = vmul.bf16 %v3839, 1009007652
    %v3904 = vmul.bf16 %v3840, 1009007652
    %v3905 = vmul.bf16 %v3841, 1009007652
    %v3906 = vmul.bf16 %v3842, 1009007652
    %v3907 = vmul.bf16 %v3843, 1009007652
    %v3908 = vmul.bf16 %v3844, 1009007652
    %v3909 = vmul.bf16 %v3845, 1009007652
    %v3910 = vmul.bf16 %v3846, 1009007652
    %v3911 = vmul.bf16 %v3847, 1009007652
    %v3912 = vmul.bf16 %v3848, 1009007652
    %v3913 = vmul.bf16 %v3849, 1009007652
    %v3914 = vmul.bf16 %v3850, 1009007652
    %v3915 = vmul.bf16 %v3851, 1009007652
    %v3916 = vmul.bf16 %v3852, 1009007652
    %v3917 = vmul.bf16 %v3853, 1009007652
    %v3918 = vmul.bf16 %v3854, 1009007652
    %v3919 = vmul.bf16 %v3855, 1009007652
    %v3920 = vmul.bf16 %v3856, 1009007652
    %v3921 = vmul.bf16 %v3857, 1009007652
    %v3922 = vmul.bf16 %v3858, 1009007652
    %v3923 = vmul.bf16 %v3859, 1009007652
    %v3924 = vmul.bf16 %v3860, 1009007652
    %v3925 = vmul.bf16 %v3861, 1009007652
    %v3926 = vmul.bf16 %v3862, 1009007652
    %v3927 = vmul.bf16 %v3863, 1009007652
    %v3928 = vmul.bf16 %v3864, 1009007652
    %v3929 = vmul.bf16 %v3865, 1009007652
    %v3930 = vmul.bf16 %v3866, 1009007652
    %v3931 = vmul.bf16 %v3867, 1009007652
    %v3932 = vmul.bf16 %v3868, 1009007652
    %v3933 = vmul.bf16 %v3869, 1009007652
    %v3934 = vmul.bf16 %v3870, 1009007652
    %v3935 = vmul.bf16 %v3871, 1009007652
    %v3936 = vmul.bf16 %v3872, 1009007652
    %v3937 = vmul.bf16 %v3873, 1009007652
    %v3938 = vmul.bf16 %v3874, 1009007652
    %v3939 = vmul.bf16 %v3875, 1009007652
    %v3940 = vmul.bf16 %v3876, 1009007652
    %v3941 = vmul.bf16 %v3877, 1009007652
    %v3942 = vmul.bf16 %v3878, 1009007652
    %v3943 = vmul.bf16 %v3879, 1009007652
    %v3944 = vmul.bf16 %v3880, 1009007652
    %v3945 = vmul.bf16 %v3881, 1009007652
    %v3946 = vmul.bf16 %v3882, 1009007652
    %v3947 = vmul.bf16 %v3883, 1009007652
    %v3948 = vmul.bf16 %v3884, 1009007652
    %v3949 = vmul.bf16 %v3885, 1009007652
    %v3950 = vmul.bf16 %v3886, 1009007652
    %v3951 = vmul.bf16 %v3887, 1009007652
    %v3952 = vmul.bf16 %v3888, 1009007652
    %v3953 = vmul.bf16 %v3889, 1009007652
    %v3954 = vmul.bf16 %v3890, 1009007652
    %v3955 = vmul.bf16 %v3891, 1009007652
    %v3956 = vmul.bf16 %v3892, 1009007652
    %v3957 = vmul.bf16 %v3893, 1009007652
    %v3958 = vmax.bf16 %v3830, %v3894
    %v3959 = vmax.bf16 %v3831, %v3895
    %v3960 = vmax.bf16 %v3832, %v3896
    %v3961 = vmax.bf16 %v3833, %v3897
    %v3962 = vmax.bf16 %v3834, %v3898
    %v3963 = vmax.bf16 %v3835, %v3899
    %v3964 = vmax.bf16 %v3836, %v3900
    %v3965 = vmax.bf16 %v3837, %v3901
    %v3966 = vmax.bf16 %v3838, %v3902
    %v3967 = vmax.bf16 %v3839, %v3903
    %v3968 = vmax.bf16 %v3840, %v3904
    %v3969 = vmax.bf16 %v3841, %v3905
    %v3970 = vmax.bf16 %v3842, %v3906
    %v3971 = vmax.bf16 %v3843, %v3907
    %v3972 = vmax.bf16 %v3844, %v3908
    %v3973 = vmax.bf16 %v3845, %v3909
    %v3974 = vmax.bf16 %v3846, %v3910
    %v3975 = vmax.bf16 %v3847, %v3911
    %v3976 = vmax.bf16 %v3848, %v3912
    %v3977 = vmax.bf16 %v3849, %v3913
    %v3978 = vmax.bf16 %v3850, %v3914
    %v3979 = vmax.bf16 %v3851, %v3915
    %v3980 = vmax.bf16 %v3852, %v3916
    %v3981 = vmax.bf16 %v3853, %v3917
    %v3982 = vmax.bf16 %v3854, %v3918
    %v3983 = vmax.bf16 %v3855, %v3919
    %v3984 = vmax.bf16 %v3856, %v3920
    %v3985 = vmax.bf16 %v3857, %v3921
    %v3986 = vmax.bf16 %v3858, %v3922
    %v3987 = vmax.bf16 %v3859, %v3923
    %v3988 = vmax.bf16 %v3860, %v3924
    %v3989 = vmax.bf16 %v3861, %v3925
    %v3990 = vmax.bf16 %v3862, %v3926
    %v3991 = vmax.bf16 %v3863, %v3927
    %v3992 = vmax.bf16 %v3864, %v3928
    %v3993 = vmax.bf16 %v3865, %v3929
    %v3994 = vmax.bf16 %v3866, %v3930
    %v3995 = vmax.bf16 %v3867, %v3931
    %v3996 = vmax.bf16 %v3868, %v3932
    %v3997 = vmax.bf16 %v3869, %v3933
    %v3998 = vmax.bf16 %v3870, %v3934
    %v3999 = vmax.bf16 %v3871, %v3935
    %v4000 = vmax.bf16 %v3872, %v3936
    %v4001 = vmax.bf16 %v3873, %v3937
    %v4002 = vmax.bf16 %v3874, %v3938
    %v4003 = vmax.bf16 %v3875, %v3939
    %v4004 = vmax.bf16 %v3876, %v3940
    %v4005 = vmax.bf16 %v3877, %v3941
    %v4006 = vmax.bf16 %v3878, %v3942
    %v4007 = vmax.bf16 %v3879, %v3943
    %v4008 = vmax.bf16 %v3880, %v3944
    %v4009 = vmax.bf16 %v3881, %v3945
    %v4010 = vmax.bf16 %v3882, %v3946
    %v4011 = vmax.bf16 %v3883, %v3947
    %v4012 = vmax.bf16 %v3884, %v3948
    %v4013 = vmax.bf16 %v3885, %v3949
    %v4014 = vmax.bf16 %v3886, %v3950
    %v4015 = vmax.bf16 %v3887, %v3951
    %v4016 = vmax.bf16 %v3888, %v3952
    %v4017 = vmax.bf16 %v3889, %v3953
    %v4018 = vmax.bf16 %v3890, %v3954
    %v4019 = vmax.bf16 %v3891, %v3955
    %v4020 = vmax.bf16 %v3892, %v3956
    %v4021 = vmax.bf16 %v3893, %v3957
    %v4022 = vld [vmem:[#allocation10] sm:$0xf]
    %v4023 = vld [vmem:[#allocation10 + $0x4] sm:$0xf]
    %v4024 = vld [vmem:[#allocation10 + $0x8] sm:$0xf]
    %v4025 = vld [vmem:[#allocation10 + $0xc] sm:$0xf]
    %v4026 = vld [vmem:[#allocation10 + $0x10] sm:$0xf]
    %v4027 = vld [vmem:[#allocation10 + $0x14] sm:$0xf]
    %v4028 = vld [vmem:[#allocation10 + $0x18] sm:$0xf]
    %v4029 = vld [vmem:[#allocation10 + $0x1c] sm:$0xf]
    %v4030 = vld [vmem:[#allocation10 + $0x20] sm:$0xf]
    %v4031 = vld [vmem:[#allocation10 + $0x24] sm:$0xf]
    %v4032 = vld [vmem:[#allocation10 + $0x28] sm:$0xf]
    %v4033 = vld [vmem:[#allocation10 + $0x2c] sm:$0xf]
    %v4034 = vld [vmem:[#allocation10 + $0x30] sm:$0xf]
    %v4035 = vld [vmem:[#allocation10 + $0x34] sm:$0xf]
    %v4036 = vld [vmem:[#allocation10 + $0x38] sm:$0xf]
    %v4037 = vld [vmem:[#allocation10 + $0x3c] sm:$0xf]
    %v4038 = vld [vmem:[#allocation10 + $0x40] sm:$0xf]
    %v4039 = vld [vmem:[#allocation10 + $0x44] sm:$0xf]
    %v4040 = vld [vmem:[#allocation10 + $0x48] sm:$0xf]
    %v4041 = vld [vmem:[#allocation10 + $0x4c] sm:$0xf]
    %v4042 = vld [vmem:[#allocation10 + $0x50] sm:$0xf]
    %v4043 = vld [vmem:[#allocation10 + $0x54] sm:$0xf]
    %v4044 = vld [vmem:[#allocation10 + $0x58] sm:$0xf]
    %v4045 = vld [vmem:[#allocation10 + $0x5c] sm:$0xf]
    %v4046 = vld [vmem:[#allocation10 + $0x60] sm:$0xf]
    %v4047 = vld [vmem:[#allocation10 + $0x64] sm:$0xf]
    %v4048 = vld [vmem:[#allocation10 + $0x68] sm:$0xf]
    %v4049 = vld [vmem:[#allocation10 + $0x6c] sm:$0xf]
    %v4050 = vld [vmem:[#allocation10 + $0x70] sm:$0xf]
    %v4051 = vld [vmem:[#allocation10 + $0x74] sm:$0xf]
    %v4052 = vld [vmem:[#allocation10 + $0x78] sm:$0xf]
    %v4053 = vld [vmem:[#allocation10 + $0x7c] sm:$0xf]
    %v4054 = vld [vmem:[#allocation10 + $0x80] sm:$0xf]
    %v4055 = vld [vmem:[#allocation10 + $0x84] sm:$0xf]
    %v4056 = vld [vmem:[#allocation10 + $0x88] sm:$0xf]
    %v4057 = vld [vmem:[#allocation10 + $0x8c] sm:$0xf]
    %v4058 = vld [vmem:[#allocation10 + $0x90] sm:$0xf]
    %v4059 = vld [vmem:[#allocation10 + $0x94] sm:$0xf]
    %v4060 = vld [vmem:[#allocation10 + $0x98] sm:$0xf]
    %v4061 = vld [vmem:[#allocation10 + $0x9c] sm:$0xf]
    %v4062 = vld [vmem:[#allocation10 + $0xa0] sm:$0xf]
    %v4063 = vld [vmem:[#allocation10 + $0xa4] sm:$0xf]
    %v4064 = vld [vmem:[#allocation10 + $0xa8] sm:$0xf]
    %v4065 = vld [vmem:[#allocation10 + $0xac] sm:$0xf]
    %v4066 = vld [vmem:[#allocation10 + $0xb0] sm:$0xf]
    %v4067 = vld [vmem:[#allocation10 + $0xb4] sm:$0xf]
    %v4068 = vld [vmem:[#allocation10 + $0xb8] sm:$0xf]
    %v4069 = vld [vmem:[#allocation10 + $0xbc] sm:$0xf]
    %v4070 = vld [vmem:[#allocation10 + $0xc0] sm:$0xf]
    %v4071 = vld [vmem:[#allocation10 + $0xc4] sm:$0xf]
    %v4072 = vld [vmem:[#allocation10 + $0xc8] sm:$0xf]
    %v4073 = vld [vmem:[#allocation10 + $0xcc] sm:$0xf]
    %v4074 = vld [vmem:[#allocation10 + $0xd0] sm:$0xf]
    %v4075 = vld [vmem:[#allocation10 + $0xd4] sm:$0xf]
    %v4076 = vld [vmem:[#allocation10 + $0xd8] sm:$0xf]
    %v4077 = vld [vmem:[#allocation10 + $0xdc] sm:$0xf]
    %v4078 = vld [vmem:[#allocation10 + $0xe0] sm:$0xf]
    %v4079 = vld [vmem:[#allocation10 + $0xe4] sm:$0xf]
    %v4080 = vld [vmem:[#allocation10 + $0xe8] sm:$0xf]
    %v4081 = vld [vmem:[#allocation10 + $0xec] sm:$0xf]
    %v4082 = vld [vmem:[#allocation10 + $0xf0] sm:$0xf]
    %v4083 = vld [vmem:[#allocation10 + $0xf4] sm:$0xf]
    %v4084 = vld [vmem:[#allocation10 + $0xf8] sm:$0xf]
    %v4085 = vld [vmem:[#allocation10 + $0xfc] sm:$0xf]
    %v4086 = vld [vmem:[#allocation10 + $0x100] sm:$0xf]
    %v4087 = vld [vmem:[#allocation10 + $0x104] sm:$0xf]
    %v4088 = vld [vmem:[#allocation10 + $0x108] sm:$0xf]
    %v4089 = vld [vmem:[#allocation10 + $0x10c] sm:$0xf]
    %v4090 = vld [vmem:[#allocation10 + $0x110] sm:$0xf]
    %v4091 = vld [vmem:[#allocation10 + $0x114] sm:$0xf]
    %v4092 = vld [vmem:[#allocation10 + $0x118] sm:$0xf]
    %v4093 = vld [vmem:[#allocation10 + $0x11c] sm:$0xf]
    %v4094 = vld [vmem:[#allocation10 + $0x120] sm:$0xf]
    %v4095 = vld [vmem:[#allocation10 + $0x124] sm:$0xf]
    %v4096 = vld [vmem:[#allocation10 + $0x128] sm:$0xf]
    %v4097 = vld [vmem:[#allocation10 + $0x12c] sm:$0xf]
    %v4098 = vld [vmem:[#allocation10 + $0x130] sm:$0xf]
    %v4099 = vld [vmem:[#allocation10 + $0x134] sm:$0xf]
    %v4100 = vld [vmem:[#allocation10 + $0x138] sm:$0xf]
    %v4101 = vld [vmem:[#allocation10 + $0x13c] sm:$0xf]
    %v4102 = vld [vmem:[#allocation10 + $0x140] sm:$0xf]
    %v4103 = vld [vmem:[#allocation10 + $0x144] sm:$0xf]
    %v4104 = vld [vmem:[#allocation10 + $0x148] sm:$0xf]
    %v4105 = vld [vmem:[#allocation10 + $0x14c] sm:$0xf]
    %v4106 = vld [vmem:[#allocation10 + $0x150] sm:$0xf]
    %v4107 = vld [vmem:[#allocation10 + $0x154] sm:$0xf]
    %v4108 = vld [vmem:[#allocation10 + $0x158] sm:$0xf]
    %v4109 = vld [vmem:[#allocation10 + $0x15c] sm:$0xf]
    %v4110 = vld [vmem:[#allocation10 + $0x160] sm:$0xf]
    %v4111 = vld [vmem:[#allocation10 + $0x164] sm:$0xf]
    %v4112 = vld [vmem:[#allocation10 + $0x168] sm:$0xf]
    %v4113 = vld [vmem:[#allocation10 + $0x16c] sm:$0xf]
    %v4114 = vld [vmem:[#allocation10 + $0x170] sm:$0xf]
    %v4115 = vld [vmem:[#allocation10 + $0x174] sm:$0xf]
    %v4116 = vld [vmem:[#allocation10 + $0x178] sm:$0xf]
    %v4117 = vld [vmem:[#allocation10 + $0x17c] sm:$0xf]
    %v4118 = vld [vmem:[#allocation10 + $0x180] sm:$0xf]
    %v4119 = vld [vmem:[#allocation10 + $0x184] sm:$0xf]
    %v4120 = vld [vmem:[#allocation10 + $0x188] sm:$0xf]
    %v4121 = vld [vmem:[#allocation10 + $0x18c] sm:$0xf]
    %v4122 = vld [vmem:[#allocation10 + $0x190] sm:$0xf]
    %v4123 = vld [vmem:[#allocation10 + $0x194] sm:$0xf]
    %v4124 = vld [vmem:[#allocation10 + $0x198] sm:$0xf]
    %v4125 = vld [vmem:[#allocation10 + $0x19c] sm:$0xf]
    %v4126 = vld [vmem:[#allocation10 + $0x1a0] sm:$0xf]
    %v4127 = vld [vmem:[#allocation10 + $0x1a4] sm:$0xf]
    %v4128 = vld [vmem:[#allocation10 + $0x1a8] sm:$0xf]
    %v4129 = vld [vmem:[#allocation10 + $0x1ac] sm:$0xf]
    %v4130 = vld [vmem:[#allocation10 + $0x1b0] sm:$0xf]
    %v4131 = vld [vmem:[#allocation10 + $0x1b4] sm:$0xf]
    %v4132 = vld [vmem:[#allocation10 + $0x1b8] sm:$0xf]
    %v4133 = vld [vmem:[#allocation10 + $0x1bc] sm:$0xf]
    %v4134 = vld [vmem:[#allocation10 + $0x1c0] sm:$0xf]
    %v4135 = vld [vmem:[#allocation10 + $0x1c4] sm:$0xf]
    %v4136 = vld [vmem:[#allocation10 + $0x1c8] sm:$0xf]
    %v4137 = vld [vmem:[#allocation10 + $0x1cc] sm:$0xf]
    %v4138 = vld [vmem:[#allocation10 + $0x1d0] sm:$0xf]
    %v4139 = vld [vmem:[#allocation10 + $0x1d4] sm:$0xf]
    %v4140 = vld [vmem:[#allocation10 + $0x1d8] sm:$0xf]
    %v4141 = vld [vmem:[#allocation10 + $0x1dc] sm:$0xf]
    %v4142 = vld [vmem:[#allocation10 + $0x1e0] sm:$0xf]
    %v4143 = vld [vmem:[#allocation10 + $0x1e4] sm:$0xf]
    %v4144 = vld [vmem:[#allocation10 + $0x1e8] sm:$0xf]
    %v4145 = vld [vmem:[#allocation10 + $0x1ec] sm:$0xf]
    %v4146 = vld [vmem:[#allocation10 + $0x1f0] sm:$0xf]
    %v4147 = vld [vmem:[#allocation10 + $0x1f4] sm:$0xf]
    %v4148 = vld [vmem:[#allocation10 + $0x1f8] sm:$0xf]
    %v4149 = vld [vmem:[#allocation10 + $0x1fc] sm:$0xf]
    %v4150 = vld [vmem:[%s8] sm:$0x1]
    %v4152 = vlaneseq
    %v4153 = vshrl.u32 %v4152, 7
    %v4154 = vsub.s32 0, %v4153
    %v4155 = vrot.slane %v4150, %v4154
    %v4285 = vunpack.c.l.b16 %v4022
    %v4286 = vunpack.c.l.b16 %v4023
    %v4287 = vunpack.c.l.b16 %v4024
    %v4288 = vunpack.c.l.b16 %v4025
    %v4289 = vunpack.c.l.b16 %v4026
    %v4290 = vunpack.c.l.b16 %v4027
    %v4291 = vunpack.c.l.b16 %v4028
    %v4292 = vunpack.c.l.b16 %v4029
    %v4293 = vunpack.c.l.b16 %v4030
    %v4294 = vunpack.c.l.b16 %v4031
    %v4295 = vunpack.c.l.b16 %v4032
    %v4296 = vunpack.c.l.b16 %v4033
    %v4297 = vunpack.c.l.b16 %v4034
    %v4298 = vunpack.c.l.b16 %v4035
    %v4299 = vunpack.c.l.b16 %v4036
    %v4300 = vunpack.c.l.b16 %v4037
    %v4301 = vunpack.c.l.b16 %v4038
    %v4302 = vunpack.c.l.b16 %v4039
    %v4303 = vunpack.c.l.b16 %v4040
    %v4304 = vunpack.c.l.b16 %v4041
    %v4305 = vunpack.c.l.b16 %v4042
    %v4306 = vunpack.c.l.b16 %v4043
    %v4307 = vunpack.c.l.b16 %v4044
    %v4308 = vunpack.c.l.b16 %v4045
    %v4309 = vunpack.c.l.b16 %v4046
    %v4310 = vunpack.c.l.b16 %v4047
    %v4311 = vunpack.c.l.b16 %v4048
    %v4312 = vunpack.c.l.b16 %v4049
    %v4313 = vunpack.c.l.b16 %v4050
    %v4314 = vunpack.c.l.b16 %v4051
    %v4315 = vunpack.c.l.b16 %v4052
    %v4316 = vunpack.c.l.b16 %v4053
    %v4317 = vunpack.c.l.b16 %v4054
    %v4318 = vunpack.c.l.b16 %v4055
    %v4319 = vunpack.c.l.b16 %v4056
    %v4320 = vunpack.c.l.b16 %v4057
    %v4321 = vunpack.c.l.b16 %v4058
    %v4322 = vunpack.c.l.b16 %v4059
    %v4323 = vunpack.c.l.b16 %v4060
    %v4324 = vunpack.c.l.b16 %v4061
    %v4325 = vunpack.c.l.b16 %v4062
    %v4326 = vunpack.c.l.b16 %v4063
    %v4327 = vunpack.c.l.b16 %v4064
    %v4328 = vunpack.c.l.b16 %v4065
    %v4329 = vunpack.c.l.b16 %v4066
    %v4330 = vunpack.c.l.b16 %v4067
    %v4331 = vunpack.c.l.b16 %v4068
    %v4332 = vunpack.c.l.b16 %v4069
    %v4333 = vunpack.c.l.b16 %v4070
    %v4334 = vunpack.c.l.b16 %v4071
    %v4335 = vunpack.c.l.b16 %v4072
    %v4336 = vunpack.c.l.b16 %v4073
    %v4337 = vunpack.c.l.b16 %v4074
    %v4338 = vunpack.c.l.b16 %v4075
    %v4339 = vunpack.c.l.b16 %v4076
    %v4340 = vunpack.c.l.b16 %v4077
    %v4341 = vunpack.c.l.b16 %v4078
    %v4342 = vunpack.c.l.b16 %v4079
    %v4343 = vunpack.c.l.b16 %v4080
    %v4344 = vunpack.c.l.b16 %v4081
    %v4345 = vunpack.c.l.b16 %v4082
    %v4346 = vunpack.c.l.b16 %v4083
    %v4347 = vunpack.c.l.b16 %v4084
    %v4348 = vunpack.c.l.b16 %v4085
    %v4349 = vunpack.c.l.b16 %v4086
    %v4350 = vunpack.c.l.b16 %v4087
    %v4351 = vunpack.c.l.b16 %v4088
    %v4352 = vunpack.c.l.b16 %v4089
    %v4353 = vunpack.c.l.b16 %v4090
    %v4354 = vunpack.c.l.b16 %v4091
    %v4355 = vunpack.c.l.b16 %v4092
    %v4356 = vunpack.c.l.b16 %v4093
    %v4357 = vunpack.c.l.b16 %v4094
    %v4358 = vunpack.c.l.b16 %v4095
    %v4359 = vunpack.c.l.b16 %v4096
    %v4360 = vunpack.c.l.b16 %v4097
    %v4361 = vunpack.c.l.b16 %v4098
    %v4362 = vunpack.c.l.b16 %v4099
    %v4363 = vunpack.c.l.b16 %v4100
    %v4364 = vunpack.c.l.b16 %v4101
    %v4365 = vunpack.c.l.b16 %v4102
    %v4366 = vunpack.c.l.b16 %v4103
    %v4367 = vunpack.c.l.b16 %v4104
    %v4368 = vunpack.c.l.b16 %v4105
    %v4369 = vunpack.c.l.b16 %v4106
    %v4370 = vunpack.c.l.b16 %v4107
    %v4371 = vunpack.c.l.b16 %v4108
    %v4372 = vunpack.c.l.b16 %v4109
    %v4373 = vunpack.c.l.b16 %v4110
    %v4374 = vunpack.c.l.b16 %v4111
    %v4375 = vunpack.c.l.b16 %v4112
    %v4376 = vunpack.c.l.b16 %v4113
    %v4377 = vunpack.c.l.b16 %v4114
    %v4378 = vunpack.c.l.b16 %v4115
    %v4379 = vunpack.c.l.b16 %v4116
    %v4380 = vunpack.c.l.b16 %v4117
    %v4381 = vunpack.c.l.b16 %v4118
    %v4382 = vunpack.c.l.b16 %v4119
    %v4383 = vunpack.c.l.b16 %v4120
    %v4384 = vunpack.c.l.b16 %v4121
    %v4385 = vunpack.c.l.b16 %v4122
    %v4386 = vunpack.c.l.b16 %v4123
    %v4387 = vunpack.c.l.b16 %v4124
    %v4388 = vunpack.c.l.b16 %v4125
    %v4389 = vunpack.c.l.b16 %v4126
    %v4390 = vunpack.c.l.b16 %v4127
    %v4391 = vunpack.c.l.b16 %v4128
    %v4392 = vunpack.c.l.b16 %v4129
    %v4393 = vunpack.c.l.b16 %v4130
    %v4394 = vunpack.c.l.b16 %v4131
    %v4395 = vunpack.c.l.b16 %v4132
    %v4396 = vunpack.c.l.b16 %v4133
    %v4397 = vunpack.c.l.b16 %v4134
    %v4398 = vunpack.c.l.b16 %v4135
    %v4399 = vunpack.c.l.b16 %v4136
    %v4400 = vunpack.c.l.b16 %v4137
    %v4401 = vunpack.c.l.b16 %v4138
    %v4402 = vunpack.c.l.b16 %v4139
    %v4403 = vunpack.c.l.b16 %v4140
    %v4404 = vunpack.c.l.b16 %v4141
    %v4405 = vunpack.c.l.b16 %v4142
    %v4406 = vunpack.c.l.b16 %v4143
    %v4407 = vunpack.c.l.b16 %v4144
    %v4408 = vunpack.c.l.b16 %v4145
    %v4409 = vunpack.c.l.b16 %v4146
    %v4410 = vunpack.c.l.b16 %v4147
    %v4411 = vunpack.c.l.b16 %v4148
    %v4412 = vunpack.c.l.b16 %v4149
    %v4413 = vpack.c.b16 %v4286, %v4285
    %v4414 = vpack.c.b16 %v4288, %v4287
    %v4415 = vpack.c.b16 %v4290, %v4289
    %v4416 = vpack.c.b16 %v4292, %v4291
    %v4417 = vpack.c.b16 %v4294, %v4293
    %v4418 = vpack.c.b16 %v4296, %v4295
    %v4419 = vpack.c.b16 %v4298, %v4297
    %v4420 = vpack.c.b16 %v4300, %v4299
    %v4421 = vpack.c.b16 %v4302, %v4301
    %v4422 = vpack.c.b16 %v4304, %v4303
    %v4423 = vpack.c.b16 %v4306, %v4305
    %v4424 = vpack.c.b16 %v4308, %v4307
    %v4425 = vpack.c.b16 %v4310, %v4309
    %v4426 = vpack.c.b16 %v4312, %v4311
    %v4427 = vpack.c.b16 %v4314, %v4313
    %v4428 = vpack.c.b16 %v4316, %v4315
    %v4429 = vpack.c.b16 %v4318, %v4317
    %v4430 = vpack.c.b16 %v4320, %v4319
    %v4431 = vpack.c.b16 %v4322, %v4321
    %v4432 = vpack.c.b16 %v4324, %v4323
    %v4433 = vpack.c.b16 %v4326, %v4325
    %v4434 = vpack.c.b16 %v4328, %v4327
    %v4435 = vpack.c.b16 %v4330, %v4329
    %v4436 = vpack.c.b16 %v4332, %v4331
    %v4437 = vpack.c.b16 %v4334, %v4333
    %v4438 = vpack.c.b16 %v4336, %v4335
    %v4439 = vpack.c.b16 %v4338, %v4337
    %v4440 = vpack.c.b16 %v4340, %v4339
    %v4441 = vpack.c.b16 %v4342, %v4341
    %v4442 = vpack.c.b16 %v4344, %v4343
    %v4443 = vpack.c.b16 %v4346, %v4345
    %v4444 = vpack.c.b16 %v4348, %v4347
    %v4445 = vpack.c.b16 %v4350, %v4349
    %v4446 = vpack.c.b16 %v4352, %v4351
    %v4447 = vpack.c.b16 %v4354, %v4353
    %v4448 = vpack.c.b16 %v4356, %v4355
    %v4449 = vpack.c.b16 %v4358, %v4357
    %v4450 = vpack.c.b16 %v4360, %v4359
    %v4451 = vpack.c.b16 %v4362, %v4361
    %v4452 = vpack.c.b16 %v4364, %v4363
    %v4453 = vpack.c.b16 %v4366, %v4365
    %v4454 = vpack.c.b16 %v4368, %v4367
    %v4455 = vpack.c.b16 %v4370, %v4369
    %v4456 = vpack.c.b16 %v4372, %v4371
    %v4457 = vpack.c.b16 %v4374, %v4373
    %v4458 = vpack.c.b16 %v4376, %v4375
    %v4459 = vpack.c.b16 %v4378, %v4377
    %v4460 = vpack.c.b16 %v4380, %v4379
    %v4461 = vpack.c.b16 %v4382, %v4381
    %v4462 = vpack.c.b16 %v4384, %v4383
    %v4463 = vpack.c.b16 %v4386, %v4385
    %v4464 = vpack.c.b16 %v4388, %v4387
    %v4465 = vpack.c.b16 %v4390, %v4389
    %v4466 = vpack.c.b16 %v4392, %v4391
    %v4467 = vpack.c.b16 %v4394, %v4393
    %v4468 = vpack.c.b16 %v4396, %v4395
    %v4469 = vpack.c.b16 %v4398, %v4397
    %v4470 = vpack.c.b16 %v4400, %v4399
    %v4471 = vpack.c.b16 %v4402, %v4401
    %v4472 = vpack.c.b16 %v4404, %v4403
    %v4473 = vpack.c.b16 %v4406, %v4405
    %v4474 = vpack.c.b16 %v4408, %v4407
    %v4475 = vpack.c.b16 %v4410, %v4409
    %v4476 = vpack.c.b16 %v4412, %v4411
    %4541 = vmatprep.subr.bf16.mxu0 0
    %4542 = vmatpush1.bf16.msra.mxu0 %v4413
    %4543 = vmatprep.subr.bf16.mxu0 0
    %4544 = vmatpush1.bf16.msra.mxu0 %v4414
    %4545 = vmatprep.subr.bf16.mxu0 0
    %4546 = vmatpush1.bf16.msra.mxu0 %v4415
    %4547 = vmatprep.subr.bf16.mxu0 0
    %4548 = vmatpush1.bf16.msra.mxu0 %v4416
    %4549 = vmatprep.subr.bf16.mxu0 0
    %4550 = vmatpush1.bf16.msra.mxu0 %v4417
    %4551 = vmatprep.subr.bf16.mxu0 0
    %4552 = vmatpush1.bf16.msra.mxu0 %v4418
    %4553 = vmatprep.subr.bf16.mxu0 0
    %4554 = vmatpush1.bf16.msra.mxu0 %v4419
    %4555 = vmatprep.subr.bf16.mxu0 0
    %4556 = vmatpush1.bf16.msra.mxu0 %v4420
    %4557 = vmatprep.subr.bf16.mxu0 0
    %4558 = vmatpush1.bf16.msra.mxu0 %v4421
    %4559 = vmatprep.subr.bf16.mxu0 0
    %4560 = vmatpush1.bf16.msra.mxu0 %v4422
    %4561 = vmatprep.subr.bf16.mxu0 0
    %4562 = vmatpush1.bf16.msra.mxu0 %v4423
    %4563 = vmatprep.subr.bf16.mxu0 0
    %4564 = vmatpush1.bf16.msra.mxu0 %v4424
    %4565 = vmatprep.subr.bf16.mxu0 0
    %4566 = vmatpush1.bf16.msra.mxu0 %v4425
    %4567 = vmatprep.subr.bf16.mxu0 0
    %4568 = vmatpush1.bf16.msra.mxu0 %v4426
    %4569 = vmatprep.subr.bf16.mxu0 0
    %4570 = vmatpush1.bf16.msra.mxu0 %v4427
    %4571 = vmatprep.subr.bf16.mxu0 0
    %4572 = vmatpush1.bf16.msra.mxu0 %v4428
    %4573 = vmatprep.mubr.bf16.mxu0 %v3959
    %4574 = vmatmul.mubr.bf16.gmra.mrb[0].mxu0 %v3958
    %v4575 = vpop.f32.mrb[0].mxu0
    %v4576 = vadd.f32 %v4155, %v4575
    %v4577 = vpop.f32.mrb[0].mxu0
    %v4578 = vpop.f32.mrb[0].mxu0
    %v4579 = vadd.f32 %v4155, %v4578
    %v4580 = vpop.f32.mrb[0].mxu0
    %4581 = vmatprep.mubr.bf16.mxu0 %v3967
    %4582 = vmatmul.mubr.bf16.gmra.mrb[0].mxu0 %v3966
    %v4583 = vpop.f32.mrb[0].mxu0
    %v4584 = vadd.f32 %v4155, %v4583
    %v4585 = vpop.f32.mrb[0].mxu0
    %v4586 = vpop.f32.mrb[0].mxu0
    %v4587 = vadd.f32 %v4155, %v4586
    %v4588 = vpop.f32.mrb[0].mxu0
    %4589 = vmatprep.mubr.bf16.mxu0 %v3975
    %4590 = vmatmul.mubr.bf16.gmra.mrb[0].mxu0 %v3974
    %v4591 = vpop.f32.mrb[0].mxu0
    %v4592 = vadd.f32 %v4155, %v4591
    %v4593 = vpop.f32.mrb[0].mxu0
    %v4594 = vpop.f32.mrb[0].mxu0
    %v4595 = vadd.f32 %v4155, %v4594
    %v4596 = vpop.f32.mrb[0].mxu0
    %4597 = vmatprep.mubr.bf16.mxu0 %v3983
    %4598 = vmatmul.mubr.bf16.gmra.mrb[0].mxu0 %v3982
    %v4599 = vpop.f32.mrb[0].mxu0
    %v4600 = vadd.f32 %v4155, %v4599
    %v4601 = vpop.f32.mrb[0].mxu0
    %v4602 = vpop.f32.mrb[0].mxu0
    %v4603 = vadd.f32 %v4155, %v4602
    %v4604 = vpop.f32.mrb[0].mxu0
    %4605 = vmatprep.mubr.bf16.mxu0 %v3991
    %4606 = vmatmul.mubr.bf16.gmra.mrb[0].mxu0 %v3990
    %v4607 = vpop.f32.mrb[0].mxu0
    %v4608 = vadd.f32 %v4155, %v4607
    %v4609 = vpop.f32.mrb[0].mxu0
    %v4610 = vpop.f32.mrb[0].mxu0
    %v4611 = vadd.f32 %v4155, %v4610
    %v4612 = vpop.f32.mrb[0].mxu0
    %4613 = vmatprep.mubr.bf16.mxu0 %v3999
    %4614 = vmatmul.mubr.bf16.gmra.mrb[0].mxu0 %v3998
    %v4615 = vpop.f32.mrb[0].mxu0
    %v4616 = vadd.f32 %v4155, %v4615
    %v4617 = vpop.f32.mrb[0].mxu0
    %v4618 = vpop.f32.mrb[0].mxu0
    %v4619 = vadd.f32 %v4155, %v4618
    %v4620 = vpop.f32.mrb[0].mxu0
    %4621 = vmatprep.mubr.bf16.mxu0 %v4007
    %4622 = vmatmul.mubr.bf16.gmra.mrb[0].mxu0 %v4006
    %v4623 = vpop.f32.mrb[0].mxu0
    %v4624 = vadd.f32 %v4155, %v4623
    %v4625 = vpop.f32.mrb[0].mxu0
    %v4626 = vpop.f32.mrb[0].mxu0
    %v4627 = vadd.f32 %v4155, %v4626
    %v4628 = vpop.f32.mrb[0].mxu0
    %4629 = vmatprep.mubr.bf16.mxu0 %v4015
    %4630 = vmatmul.mubr.bf16.gmra.mrb[0].mxu0 %v4014
    %v4631 = vpop.f32.mrb[0].mxu0
    %v4632 = vadd.f32 %v4155, %v4631
    %v4633 = vpop.f32.mrb[0].mxu0
    %v4634 = vpop.f32.mrb[0].mxu0
    %v4635 = vadd.f32 %v4155, %v4634
    %v4636 = vpop.f32.mrb[0].mxu0
    %4637 = vdwg.mxu0
    %4638 = vmatprep.subr.bf16.mxu0 0
    %4639 = vmatpush1.bf16.msra.mxu0 %v4429
    %4640 = vmatprep.subr.bf16.mxu0 0
    %4641 = vmatpush1.bf16.msra.mxu0 %v4430
    %4642 = vmatprep.subr.bf16.mxu0 0
    %4643 = vmatpush1.bf16.msra.mxu0 %v4431
    %4644 = vmatprep.subr.bf16.mxu0 0
    %4645 = vmatpush1.bf16.msra.mxu0 %v4432
    %4646 = vmatprep.subr.bf16.mxu0 0
    %4647 = vmatpush1.bf16.msra.mxu0 %v4433
    %4648 = vmatprep.subr.bf16.mxu0 0
    %4649 = vmatpush1.bf16.msra.mxu0 %v4434
    %4650 = vmatprep.subr.bf16.mxu0 0
    %4651 = vmatpush1.bf16.msra.mxu0 %v4435
    %4652 = vmatprep.subr.bf16.mxu0 0
    %4653 = vmatpush1.bf16.msra.mxu0 %v4436
    %4654 = vmatprep.subr.bf16.mxu0 0
    %4655 = vmatpush1.bf16.msra.mxu0 %v4437
    %4656 = vmatprep.subr.bf16.mxu0 0
    %4657 = vmatpush1.bf16.msra.mxu0 %v4438
    %4658 = vmatprep.subr.bf16.mxu0 0
    %4659 = vmatpush1.bf16.msra.mxu0 %v4439
    %4660 = vmatprep.subr.bf16.mxu0 0
    %4661 = vmatpush1.bf16.msra.mxu0 %v4440
    %4662 = vmatprep.subr.bf16.mxu0 0
    %4663 = vmatpush1.bf16.msra.mxu0 %v4441
    %4664 = vmatprep.subr.bf16.mxu0 0
    %4665 = vmatpush1.bf16.msra.mxu0 %v4442
    %4666 = vmatprep.subr.bf16.mxu0 0
    %4667 = vmatpush1.bf16.msra.mxu0 %v4443
    %4668 = vmatprep.subr.bf16.mxu0 0
    %4669 = vmatpush1.bf16.msra.mxu0 %v4444
    %4670 = vmatprep.mubr.bf16.mxu0 %v3961
    %4671 = vmatmul.mubr.bf16.gmra.mrb[0].mxu0 %v3960
    %v4672 = vpop.f32.mrb[0].mxu0
    %v4673 = vadd.f32 %v4576, %v4672
    %v4674 = vpop.f32.mrb[0].mxu0
    %v4675 = vpop.f32.mrb[0].mxu0
    %v4676 = vadd.f32 %v4579, %v4675
    %v4677 = vpop.f32.mrb[0].mxu0
    %4678 = vmatprep.mubr.bf16.mxu0 %v3969
    %4679 = vmatmul.mubr.bf16.gmra.mrb[0].mxu0 %v3968
    %v4680 = vpop.f32.mrb[0].mxu0
    %v4681 = vadd.f32 %v4584, %v4680
    %v4682 = vpop.f32.mrb[0].mxu0
    %v4683 = vpop.f32.mrb[0].mxu0
    %v4684 = vadd.f32 %v4587, %v4683
    %v4685 = vpop.f32.mrb[0].mxu0
    %4686 = vmatprep.mubr.bf16.mxu0 %v3977
    %4687 = vmatmul.mubr.bf16.gmra.mrb[0].mxu0 %v3976
    %v4688 = vpop.f32.mrb[0].mxu0
    %v4689 = vadd.f32 %v4592, %v4688
    %v4690 = vpop.f32.mrb[0].mxu0
    %v4691 = vpop.f32.mrb[0].mxu0
    %v4692 = vadd.f32 %v4595, %v4691
    %v4693 = vpop.f32.mrb[0].mxu0
    %4694 = vmatprep.mubr.bf16.mxu0 %v3985
    %4695 = vmatmul.mubr.bf16.gmra.mrb[0].mxu0 %v3984
    %v4696 = vpop.f32.mrb[0].mxu0
    %v4697 = vadd.f32 %v4600, %v4696
    %v4698 = vpop.f32.mrb[0].mxu0
    %v4699 = vpop.f32.mrb[0].mxu0
    %v4700 = vadd.f32 %v4603, %v4699
    %v4701 = vpop.f32.mrb[0].mxu0
    %4702 = vmatprep.mubr.bf16.mxu0 %v3993
    %4703 = vmatmul.mubr.bf16.gmra.mrb[0].mxu0 %v3992
    %v4704 = vpop.f32.mrb[0].mxu0
    %v4705 = vadd.f32 %v4608, %v4704
    %v4706 = vpop.f32.mrb[0].mxu0
    %v4707 = vpop.f32.mrb[0].mxu0
    %v4708 = vadd.f32 %v4611, %v4707
    %v4709 = vpop.f32.mrb[0].mxu0
    %4710 = vmatprep.mubr.bf16.mxu0 %v4001
    %4711 = vmatmul.mubr.bf16.gmra.mrb[0].mxu0 %v4000
    %v4712 = vpop.f32.mrb[0].mxu0
    %v4713 = vadd.f32 %v4616, %v4712
    %v4714 = vpop.f32.mrb[0].mxu0
    %v4715 = vpop.f32.mrb[0].mxu0
    %v4716 = vadd.f32 %v4619, %v4715
    %v4717 = vpop.f32.mrb[0].mxu0
    %4718 = vmatprep.mubr.bf16.mxu0 %v4009
    %4719 = vmatmul.mubr.bf16.gmra.mrb[0].mxu0 %v4008
    %v4720 = vpop.f32.mrb[0].mxu0
    %v4721 = vadd.f32 %v4624, %v4720
    %v4722 = vpop.f32.mrb[0].mxu0
    %v4723 = vpop.f32.mrb[0].mxu0
    %v4724 = vadd.f32 %v4627, %v4723
    %v4725 = vpop.f32.mrb[0].mxu0
    %4726 = vmatprep.mubr.bf16.mxu0 %v4017
    %4727 = vmatmul.mubr.bf16.gmra.mrb[0].mxu0 %v4016
    %v4728 = vpop.f32.mrb[0].mxu0
    %v4729 = vadd.f32 %v4632, %v4728
    %v4730 = vpop.f32.mrb[0].mxu0
    %v4731 = vpop.f32.mrb[0].mxu0
    %v4732 = vadd.f32 %v4635, %v4731
    %v4733 = vpop.f32.mrb[0].mxu0
    %4734 = vdwg.mxu0
    %4735 = vmatprep.subr.bf16.mxu0 0
    %4736 = vmatpush1.bf16.msra.mxu0 %v4445
    %4737 = vmatprep.subr.bf16.mxu0 0
    %4738 = vmatpush1.bf16.msra.mxu0 %v4446
    %4739 = vmatprep.subr.bf16.mxu0 0
    %4740 = vmatpush1.bf16.msra.mxu0 %v4447
    %4741 = vmatprep.subr.bf16.mxu0 0
    %4742 = vmatpush1.bf16.msra.mxu0 %v4448
    %4743 = vmatprep.subr.bf16.mxu0 0
    %4744 = vmatpush1.bf16.msra.mxu0 %v4449
    %4745 = vmatprep.subr.bf16.mxu0 0
    %4746 = vmatpush1.bf16.msra.mxu0 %v4450
    %4747 = vmatprep.subr.bf16.mxu0 0
    %4748 = vmatpush1.bf16.msra.mxu0 %v4451
    %4749 = vmatprep.subr.bf16.mxu0 0
    %4750 = vmatpush1.bf16.msra.mxu0 %v4452
    %4751 = vmatprep.subr.bf16.mxu0 0
    %4752 = vmatpush1.bf16.msra.mxu0 %v4453
    %4753 = vmatprep.subr.bf16.mxu0 0
    %4754 = vmatpush1.bf16.msra.mxu0 %v4454
    %4755 = vmatprep.subr.bf16.mxu0 0
    %4756 = vmatpush1.bf16.msra.mxu0 %v4455
    %4757 = vmatprep.subr.bf16.mxu0 0
    %4758 = vmatpush1.bf16.msra.mxu0 %v4456
    %4759 = vmatprep.subr.bf16.mxu0 0
    %4760 = vmatpush1.bf16.msra.mxu0 %v4457
    %4761 = vmatprep.subr.bf16.mxu0 0
    %4762 = vmatpush1.bf16.msra.mxu0 %v4458
    %4763 = vmatprep.subr.bf16.mxu0 0
    %4764 = vmatpush1.bf16.msra.mxu0 %v4459
    %4765 = vmatprep.subr.bf16.mxu0 0
    %4766 = vmatpush1.bf16.msra.mxu0 %v4460
    %4767 = vmatprep.mubr.bf16.mxu0 %v3963
    %4768 = vmatmul.mubr.bf16.gmra.mrb[0].mxu0 %v3962
    %v4769 = vpop.f32.mrb[0].mxu0
    %v4770 = vadd.f32 %v4673, %v4769
    %v4771 = vpop.f32.mrb[0].mxu0
    %v4772 = vpop.f32.mrb[0].mxu0
    %v4773 = vadd.f32 %v4676, %v4772
    %v4774 = vpop.f32.mrb[0].mxu0
    %4775 = vmatprep.mubr.bf16.mxu0 %v3971
    %4776 = vmatmul.mubr.bf16.gmra.mrb[0].mxu0 %v3970
    %v4777 = vpop.f32.mrb[0].mxu0
    %v4778 = vadd.f32 %v4681, %v4777
    %v4779 = vpop.f32.mrb[0].mxu0
    %v4780 = vpop.f32.mrb[0].mxu0
    %v4781 = vadd.f32 %v4684, %v4780
    %v4782 = vpop.f32.mrb[0].mxu0
    %4783 = vmatprep.mubr.bf16.mxu0 %v3979
    %4784 = vmatmul.mubr.bf16.gmra.mrb[0].mxu0 %v3978
    %v4785 = vpop.f32.mrb[0].mxu0
    %v4786 = vadd.f32 %v4689, %v4785
    %v4787 = vpop.f32.mrb[0].mxu0
    %v4788 = vpop.f32.mrb[0].mxu0
    %v4789 = vadd.f32 %v4692, %v4788
    %v4790 = vpop.f32.mrb[0].mxu0
    %4791 = vmatprep.mubr.bf16.mxu0 %v3987
    %4792 = vmatmul.mubr.bf16.gmra.mrb[0].mxu0 %v3986
    %v4793 = vpop.f32.mrb[0].mxu0
    %v4794 = vadd.f32 %v4697, %v4793
    %v4795 = vpop.f32.mrb[0].mxu0
    %v4796 = vpop.f32.mrb[0].mxu0
    %v4797 = vadd.f32 %v4700, %v4796
    %v4798 = vpop.f32.mrb[0].mxu0
    %4799 = vmatprep.mubr.bf16.mxu0 %v3995
    %4800 = vmatmul.mubr.bf16.gmra.mrb[0].mxu0 %v3994
    %v4801 = vpop.f32.mrb[0].mxu0
    %v4802 = vadd.f32 %v4705, %v4801
    %v4803 = vpop.f32.mrb[0].mxu0
    %v4804 = vpop.f32.mrb[0].mxu0
    %v4805 = vadd.f32 %v4708, %v4804
    %v4806 = vpop.f32.mrb[0].mxu0
    %4807 = vmatprep.mubr.bf16.mxu0 %v4003
    %4808 = vmatmul.mubr.bf16.gmra.mrb[0].mxu0 %v4002
    %v4809 = vpop.f32.mrb[0].mxu0
    %v4810 = vadd.f32 %v4713, %v4809
    %v4811 = vpop.f32.mrb[0].mxu0
    %v4812 = vpop.f32.mrb[0].mxu0
    %v4813 = vadd.f32 %v4716, %v4812
    %v4814 = vpop.f32.mrb[0].mxu0
    %4815 = vmatprep.mubr.bf16.mxu0 %v4011
    %4816 = vmatmul.mubr.bf16.gmra.mrb[0].mxu0 %v4010
    %v4817 = vpop.f32.mrb[0].mxu0
    %v4818 = vadd.f32 %v4721, %v4817
    %v4819 = vpop.f32.mrb[0].mxu0
    %v4820 = vpop.f32.mrb[0].mxu0
    %v4821 = vadd.f32 %v4724, %v4820
    %v4822 = vpop.f32.mrb[0].mxu0
    %4823 = vmatprep.mubr.bf16.mxu0 %v4019
    %4824 = vmatmul.mubr.bf16.gmra.mrb[0].mxu0 %v4018
    %v4825 = vpop.f32.mrb[0].mxu0
    %v4826 = vadd.f32 %v4729, %v4825
    %v4827 = vpop.f32.mrb[0].mxu0
    %v4828 = vpop.f32.mrb[0].mxu0
    %v4829 = vadd.f32 %v4732, %v4828
    %v4830 = vpop.f32.mrb[0].mxu0
    %4831 = vdwg.mxu0
    %4832 = vmatprep.subr.bf16.mxu0 0
    %4833 = vmatpush1.bf16.msra.mxu0 %v4461
    %4834 = vmatprep.subr.bf16.mxu0 0
    %4835 = vmatpush1.bf16.msra.mxu0 %v4462
    %4836 = vmatprep.subr.bf16.mxu0 0
    %4837 = vmatpush1.bf16.msra.mxu0 %v4463
    %4838 = vmatprep.subr.bf16.mxu0 0
    %4839 = vmatpush1.bf16.msra.mxu0 %v4464
    %4840 = vmatprep.subr.bf16.mxu0 0
    %4841 = vmatpush1.bf16.msra.mxu0 %v4465
    %4842 = vmatprep.subr.bf16.mxu0 0
    %4843 = vmatpush1.bf16.msra.mxu0 %v4466
    %4844 = vmatprep.subr.bf16.mxu0 0
    %4845 = vmatpush1.bf16.msra.mxu0 %v4467
    %4846 = vmatprep.subr.bf16.mxu0 0
    %4847 = vmatpush1.bf16.msra.mxu0 %v4468
    %4848 = vmatprep.subr.bf16.mxu0 0
    %4849 = vmatpush1.bf16.msra.mxu0 %v4469
    %4850 = vmatprep.subr.bf16.mxu0 0
    %4851 = vmatpush1.bf16.msra.mxu0 %v4470
    %4852 = vmatprep.subr.bf16.mxu0 0
    %4853 = vmatpush1.bf16.msra.mxu0 %v4471
    %4854 = vmatprep.subr.bf16.mxu0 0
    %4855 = vmatpush1.bf16.msra.mxu0 %v4472
    %4856 = vmatprep.subr.bf16.mxu0 0
    %4857 = vmatpush1.bf16.msra.mxu0 %v4473
    %4858 = vmatprep.subr.bf16.mxu0 0
    %4859 = vmatpush1.bf16.msra.mxu0 %v4474
    %4860 = vmatprep.subr.bf16.mxu0 0
    %4861 = vmatpush1.bf16.msra.mxu0 %v4475
    %4862 = vmatprep.subr.bf16.mxu0 0
    %4863 = vmatpush1.bf16.msra.mxu0 %v4476
    %4864 = vmatprep.mubr.bf16.mxu0 %v3965
    %4865 = vmatmul.mubr.bf16.gmra.mrb[0].mxu0 %v3964
    %v4866 = vpop.f32.mrb[0].mxu0
    %v4867 = vadd.f32 %v4770, %v4866
    %v4868 = vpop.f32.mrb[0].mxu0
    %v4869 = vpop.f32.mrb[0].mxu0
    %v4870 = vadd.f32 %v4773, %v4869
    %v4871 = vpop.f32.mrb[0].mxu0
    %4872 = vmatprep.mubr.bf16.mxu0 %v3973
    %4873 = vmatmul.mubr.bf16.gmra.mrb[0].mxu0 %v3972
    %v4874 = vpop.f32.mrb[0].mxu0
    %v4875 = vadd.f32 %v4778, %v4874
    %v4876 = vpop.f32.mrb[0].mxu0
    %v4877 = vpop.f32.mrb[0].mxu0
    %v4878 = vadd.f32 %v4781, %v4877
    %v4879 = vpop.f32.mrb[0].mxu0
    %4880 = vmatprep.mubr.bf16.mxu0 %v3981
    %4881 = vmatmul.mubr.bf16.gmra.mrb[0].mxu0 %v3980
    %v4882 = vpop.f32.mrb[0].mxu0
    %v4883 = vadd.f32 %v4786, %v4882
    %v4884 = vpop.f32.mrb[0].mxu0
    %v4885 = vpop.f32.mrb[0].mxu0
    %v4886 = vadd.f32 %v4789, %v4885
    %v4887 = vpop.f32.mrb[0].mxu0
    %4888 = vmatprep.mubr.bf16.mxu0 %v3989
    %4889 = vmatmul.mubr.bf16.gmra.mrb[0].mxu0 %v3988
    %v4890 = vpop.f32.mrb[0].mxu0
    %v4891 = vadd.f32 %v4794, %v4890
    %v4892 = vpop.f32.mrb[0].mxu0
    %v4893 = vpop.f32.mrb[0].mxu0
    %v4894 = vadd.f32 %v4797, %v4893
    %v4895 = vpop.f32.mrb[0].mxu0
    %4896 = vmatprep.mubr.bf16.mxu0 %v3997
    %4897 = vmatmul.mubr.bf16.gmra.mrb[0].mxu0 %v3996
    %v4898 = vpop.f32.mrb[0].mxu0
    %v4899 = vadd.f32 %v4802, %v4898
    %v4900 = vpop.f32.mrb[0].mxu0
    %v4901 = vpop.f32.mrb[0].mxu0
    %v4902 = vadd.f32 %v4805, %v4901
    %v4903 = vpop.f32.mrb[0].mxu0
    %4904 = vmatprep.mubr.bf16.mxu0 %v4005
    %4905 = vmatmul.mubr.bf16.gmra.mrb[0].mxu0 %v4004
    %v4906 = vpop.f32.mrb[0].mxu0
    %v4907 = vadd.f32 %v4810, %v4906
    %v4908 = vpop.f32.mrb[0].mxu0
    %v4909 = vpop.f32.mrb[0].mxu0
    %v4910 = vadd.f32 %v4813, %v4909
    %v4911 = vpop.f32.mrb[0].mxu0
    %4912 = vmatprep.mubr.bf16.mxu0 %v4013
    %4913 = vmatmul.mubr.bf16.gmra.mrb[0].mxu0 %v4012
    %v4914 = vpop.f32.mrb[0].mxu0
    %v4915 = vadd.f32 %v4818, %v4914
    %v4916 = vpop.f32.mrb[0].mxu0
    %v4917 = vpop.f32.mrb[0].mxu0
    %v4918 = vadd.f32 %v4821, %v4917
    %v4919 = vpop.f32.mrb[0].mxu0
    %4920 = vmatprep.mubr.bf16.mxu0 %v4021
    %4921 = vmatmul.mubr.bf16.gmra.mrb[0].mxu0 %v4020
    %v4922 = vpop.f32.mrb[0].mxu0
    %v4923 = vadd.f32 %v4826, %v4922
    %v4924 = vpop.f32.mrb[0].mxu0
    %v4925 = vpop.f32.mrb[0].mxu0
    %v4926 = vadd.f32 %v4829, %v4925
    %v4927 = vpop.f32.mrb[0].mxu0
    %4928 = vdwg.mxu0
    %4929 = vst [vmem:[#allocation11] sm:$0xff] %v4867
    %4930 = vst [vmem:[#allocation11 + $0x8] sm:$0xff] %v4870
    %4931 = vst [vmem:[#allocation11 + $0x10] sm:$0xff] %v4875
    %4932 = vst [vmem:[#allocation11 + $0x18] sm:$0xff] %v4878
    %4933 = vst [vmem:[#allocation11 + $0x20] sm:$0xff] %v4883
    %4934 = vst [vmem:[#allocation11 + $0x28] sm:$0xff] %v4886
    %4935 = vst [vmem:[#allocation11 + $0x30] sm:$0xff] %v4891
    %4936 = vst [vmem:[#allocation11 + $0x38] sm:$0xff] %v4894
    %4937 = vst [vmem:[#allocation11 + $0x40] sm:$0xff] %v4899
    %4938 = vst [vmem:[#allocation11 + $0x48] sm:$0xff] %v4902
    %4939 = vst [vmem:[#allocation11 + $0x50] sm:$0xff] %v4907
    %4940 = vst [vmem:[#allocation11 + $0x58] sm:$0xff] %v4910
    %4941 = vst [vmem:[#allocation11 + $0x60] sm:$0xff] %v4915
    %4942 = vst [vmem:[#allocation11 + $0x68] sm:$0xff] %v4918
    %4943 = vst [vmem:[#allocation11 + $0x70] sm:$0xff] %v4923
    %4944 = vst [vmem:[#allocation11 + $0x78] sm:$0xff] %v4926
    // Predicated region
    $region58: #{tpu_custom_call.1} parent=1 // pred_check
      _
    $region59: #{tpu_custom_call.1} parent=1 // pred_check_branch
      %4946 = sbr.rel (0) target = $region61
    $region60: #{tpu_custom_call.1} parent=1 // pred_region
      %s4948 = ssub.s32 2048, 2048
      %4949 = vsyncadd [#allocation4], %s4948
      %s4950 = sshll.u32 [#allocation11], 4
      %s4951 = int_to_ptr.vmem [resolvable:$true] %s4950
      %4956 = dma.vmem_to_hbm [thread:$0]  %s4951, 2048, %s9, [#allocation4], 128, 128, 8
    $region61: #{tpu_custom_call.1} parent=1 // pred_fallthru
      _
    // Predicated region
    $region62: #{tpu_custom_call.1} parent=1 // pred_check
      _
    $region63: #{tpu_custom_call.1} parent=1 // pred_check_branch
      %4958 = sbr.rel (0) target = $region65
    $region64: #{tpu_custom_call.1} parent=1 // pred_region
      %4959 = dma.done [#allocation4], 2048
    $region65: #{tpu_custom_call.1} parent=1 // pred_fallthru
      _
    %4960 = vsyncpa [#allocation3], 1
    %4961 = vsyncpa [#allocation6], 1
    %4962 = vsyncpa [#allocation9], 1
    %4963 = vsyncpa [#allocation4], 1

</llo_original>
